<compile_context>
chip_gen: v5e
topology: v5e:2x2
jax: 0.10.0
libtpu: 0.0.40
codegen_flags: <defaults>
</compile_context>

<pallas_src>
import functools
import math

import jax
import jax.numpy as jnp
from jax.experimental import pallas as pl
from jax.experimental.pallas import tpu as pltpu


def _layernorm(x, gamma, beta, eps=1e-5):
    mean = jnp.mean(x, axis=-1, keepdims=True)
    var = jnp.mean((x - mean) ** 2, axis=-1, keepdims=True)
    return (x - mean) * jax.lax.rsqrt(var + eps) * gamma + beta


def transformer_block_kernel(
    x_ref,                       # (1, S, D) f32  full sequence (resident)
    wq_ref, bq_ref,              # (D, D) bf16, (1, D) f32   (y = x @ W + b)
    wk_ref, bk_ref,
    wv_ref, bv_ref,
    wo_ref, bo_ref,
    g1_ref, be1_ref,             # layernorm1 gamma/beta (1, D) f32
    wf1_ref, bf1_ref,            # (D, dff_tile) bf16, (1, dff_tile) f32
    wf2_ref, bf2_ref,            # (dff_tile, D) bf16, (1, D) f32
    g2_ref, be2_ref,             # layernorm2 gamma/beta (1, D) f32
    out_ref,                     # (1, tq, D)
    k_s, v_s,                    # (S, D) bf16 scratch (full-sequence K/V)
    h_s,                         # (n_q, tq, D) f32   LN1(x + attn)
    hb_s,                        # (n_q, tq, D) bf16  cached bf16 copy of h
    ffn_acc,                     # (n_q, tq, D) f32   FFN accumulator
    o_s,                         # (tq, D) bf16       per-tile attention output
    *,
    num_heads: int,
):
    f = pl.program_id(1)         # FFN hidden-slab index (reduction axis)
    qi = pl.program_id(2)        # query-tile index
    n_f = pl.num_programs(1)
    S, D = x_ref.shape[1], x_ref.shape[2]
    tq = out_ref.shape[1]
    hd = D // num_heads
    row0 = pl.multiple_of(qi * tq, tq)

    # ---- once per batch element: project K, V for the full sequence --------
    @pl.when(jnp.logical_and(f == 0, qi == 0))
    def _project_kv():
        xf = x_ref[0].astype(jnp.bfloat16)                              # (S, D)
        k = jnp.dot(xf, wk_ref[...],
                    preferred_element_type=jnp.float32) + bk_ref[...]
        v = jnp.dot(xf, wv_ref[...],
                    preferred_element_type=jnp.float32) + bv_ref[...]
        k_s[...] = k.astype(jnp.bfloat16)
        v_s[...] = v.astype(jnp.bfloat16)

    # ---- once per query tile: attention + residual + LayerNorm1 ------------
    @pl.when(f == 0)
    def _attention():
        x_q = x_ref[0, pl.ds(row0, tq), :]                              # (tq, D) f32
        q = jnp.dot(x_q.astype(jnp.bfloat16), wq_ref[...],
                    preferred_element_type=jnp.float32) + bq_ref[...]
        q = q * (1.0 / math.sqrt(hd))                                   # fold 1/sqrt(hd)

        # Static per-head loop: heads are contiguous lane slices. Each head's
        # output lands in its lane slice of o_s; wo is applied once after the
        # loop with a full D-wide contraction (fills the MXU, no per-head
        # f32 accumulator held live across the unrolled loop).
        for h in range(num_heads):
            sl = slice(h * hd, (h + 1) * hd)
            q_h = q[:, sl].astype(jnp.bfloat16)                         # (tq, hd)
            # Contract on the head dim of both operands (flash-attn style).
            s_h = jax.lax.dot_general(
                q_h, k_s[:, sl], (((1,), (1,)), ((), ())),
                preferred_element_type=jnp.float32)                     # (tq, S)
            m = jnp.max(s_h, axis=-1, keepdims=True)
            p = jnp.exp(s_h - m)
            denom = jnp.sum(p, axis=-1, keepdims=True)
            p = (p * pl.reciprocal(denom, approx=True)).astype(jnp.bfloat16)
            o_h = jnp.dot(p, v_s[:, sl],
                          preferred_element_type=jnp.float32)           # (tq, hd)
            o_s[:, sl] = o_h.astype(jnp.bfloat16)

        attn_out = jnp.dot(o_s[...], wo_ref[...],
                           preferred_element_type=jnp.float32) + bo_ref[...]
        h_tile = _layernorm(x_q + attn_out, g1_ref[...], be1_ref[...])
        h_s[qi] = h_tile
        hb_s[qi] = h_tile.astype(jnp.bfloat16)
        ffn_acc[qi] = jnp.zeros((tq, D), jnp.float32)

    # ---- every step: one dff_tile-wide slab of the feed-forward ------------
    f1 = jnp.dot(hb_s[qi], wf1_ref[...],
                 preferred_element_type=jnp.float32) + bf1_ref[...]     # (tq, dff_tile)
    f1 = jnp.maximum(f1, 0.0).astype(jnp.bfloat16)
    ffn_acc[qi] += jnp.dot(f1, wf2_ref[...],
                           preferred_element_type=jnp.float32)          # (tq, D)

    # ---- last FFN slab: residual + LayerNorm2 + store -----------------------
    @pl.when(f == n_f - 1)
    def _finalize():
        y = _layernorm(h_s[qi] + ffn_acc[qi] + bf2_ref[...],
                       g2_ref[...], be2_ref[...])
        out_ref[0] = y.astype(out_ref.dtype)


def _vmem_estimate(S, D, Dff, tq, dff_tile):
    bf16, f32 = 2, 4
    resident = (
        S * D * f32                                  # x window (single-buffered)
        + 4 * D * D * bf16                           # wq/wk/wv/wo (single-buffered)
        + 9 * D * f32                                # biases + LN params + bf2
        + 2 * (2 * D * dff_tile * bf16 + dff_tile * f32)  # wf1/wf2/bf1 slabs (x2 buf)
        + 2 * tq * D * f32                           # output tile (x2 buf)
    )
    scratch = (2 * S * D * bf16                      # k_s, v_s
               + 2 * S * D * f32 + S * D * bf16      # h_s, ffn_acc, hb_s
               + tq * D * bf16)                      # o_s
    live = (4 * tq * D + tq * S + 2 * tq * dff_tile) * f32
    return resident + scratch + live + (4 << 20)


def transformer_block(x, params, num_heads, *, tq=None, dff_tile=None):
    B, S, D = x.shape
    Dff = params["wf1"].shape[1]
    assert D % num_heads == 0

    # Generation-aware VMEM cap (v5e/v6e: 128 MiB, v7x: 64 MiB physical).
    try:
        vmem_cap = int(pltpu.get_tpu_info().vmem_capacity_bytes)
    except Exception:
        vmem_cap = 64 << 20          # conservative (v7x) if the query fails
    budget = int(vmem_cap * 0.85)

    if tq is None:
        tq = S if S <= 256 else 256
    if dff_tile is None:
        dff_tile = Dff               # resident FFN weights when they fit
        while (_vmem_estimate(S, D, Dff, tq, dff_tile) > budget
               and dff_tile % 2 == 0 and dff_tile > 256):
            dff_tile //= 2
    assert S % tq == 0 and Dff % dff_tile == 0
    n_q, n_f = S // tq, Dff // dff_tile

    vmem_limit = int(min(max(_vmem_estimate(S, D, Dff, tq, dff_tile), 16 << 20),
                         budget))

    flops = int(B * (24 * S * D * D + 4 * S * S * D))
    transcendentals = int(B * num_heads * S * S + 4 * B * S)
    bytes_accessed = int(2 * B * S * D * 4
                         + (4 * D * D + 2 * D * Dff) * 2
                         + (10 * D + Dff) * 4)

    kernel = functools.partial(transformer_block_kernel, num_heads=num_heads)

    def build(use_resident_hint):
        resident = pl.Buffered(1) if use_resident_hint else None

        def spec(shape, index_map, res=False):
            if res and resident is not None:
                return pl.BlockSpec(shape, index_map, pipeline_mode=resident)
            return pl.BlockSpec(shape, index_map)

        def const_spec(shape):
            n = len(shape)
            return spec(shape, lambda b, f, qi, _n=n: (0,) * _n, res=True)

        in_specs = [
            spec((1, S, D), lambda b, f, qi: (b, 0, 0), res=True),   # x full seq
            const_spec((D, D)), const_spec((1, D)),                  # wq, bq
            const_spec((D, D)), const_spec((1, D)),                  # wk, bk
            const_spec((D, D)), const_spec((1, D)),                  # wv, bv
            const_spec((D, D)), const_spec((1, D)),                  # wo, bo
            const_spec((1, D)), const_spec((1, D)),                  # g1, be1
            spec((D, dff_tile), lambda b, f, qi: (0, f)),            # wf1 slab
            spec((1, dff_tile), lambda b, f, qi: (0, f)),            # bf1 slab
            spec((dff_tile, D), lambda b, f, qi: (f, 0)),            # wf2 slab
            const_spec((1, D)),                                      # bf2
            const_spec((1, D)), const_spec((1, D)),                  # g2, be2
        ]
        out_spec = pl.BlockSpec((1, tq, D), lambda b, f, qi: (b, qi, 0))

        return pl.pallas_call(
            kernel,
            out_shape=jax.ShapeDtypeStruct((B, S, D), x.dtype),
            grid_spec=pltpu.PrefetchScalarGridSpec(
                num_scalar_prefetch=0,
                grid=(B, n_f, n_q),
                in_specs=in_specs,
                out_specs=out_spec,
                scratch_shapes=[
                    pltpu.VMEM((S, D), jnp.bfloat16),        # K (full sequence)
                    pltpu.VMEM((S, D), jnp.bfloat16),        # V (full sequence)
                    pltpu.VMEM((n_q, tq, D), jnp.float32),   # h = LN1(x + attn)
                    pltpu.VMEM((n_q, tq, D), jnp.bfloat16),  # bf16 copy of h
                    pltpu.VMEM((n_q, tq, D), jnp.float32),   # FFN accumulator
                    pltpu.VMEM((tq, D), jnp.bfloat16),       # attention output tile
                ],
            ),
            compiler_params=pltpu.CompilerParams(
                dimension_semantics=("parallel", "arbitrary", "arbitrary"),
                vmem_limit_bytes=vmem_limit,
            ),
            cost_estimate=pl.CostEstimate(
                flops=flops, transcendentals=transcendentals,
                bytes_accessed=bytes_accessed),
        )

    args = (
        x,
        params["wq"], params["bq"], params["wk"], params["bk"],
        params["wv"], params["bv"], params["wo"], params["bo"],
        params["g1"], params["be1"],
        params["wf1"], params["bf1"], params["wf2"], params["bf2"],
        params["g2"], params["be2"],
    )
    try:
        return build(True)(*args)
    except Exception:
        # TODO(synk): pipeline_mode=pl.Buffered(1) not accepted by this JAX
        # build; retry with default double-buffering (correctness unchanged).
        return build(False)(*args)


def reference(x, p, num_heads):
    """Pure-JAX f32 reference mirroring the PyTorch forward (eval mode)."""
    B, S, D = x.shape
    hd = D // num_heads

    def lin(t, w, b):
        return t @ w.astype(jnp.float32) + b

    q = lin(x, p["wq"], p["bq"]).reshape(B, S, num_heads, hd).transpose(0, 2, 1, 3)
    k = lin(x, p["wk"], p["bk"]).reshape(B, S, num_heads, hd).transpose(0, 2, 1, 3)
    v = lin(x, p["wv"], p["bv"]).reshape(B, S, num_heads, hd).transpose(0, 2, 1, 3)
    scores = jnp.einsum("bhqd,bhkd->bhqk", q, k) / math.sqrt(hd)
    attn = jax.nn.softmax(scores, axis=-1)
    o = jnp.einsum("bhqk,bhkd->bhqd", attn, v).transpose(0, 2, 1, 3).reshape(B, S, D)
    attn_out = lin(o, p["wo"], p["bo"])

    def ln(t, g, b, eps=1e-5):
        m = jnp.mean(t, -1, keepdims=True)
        var = jnp.mean((t - m) ** 2, -1, keepdims=True)
        return (t - m) * jax.lax.rsqrt(var + eps) * g + b

    h = ln(x + attn_out, p["g1"], p["be1"])
    f = jnp.maximum(lin(h, p["wf1"], p["bf1"]), 0.0)
    f = lin(f, p["wf2"], p["bf2"])
    return ln(h + f, p["g2"], p["be2"])


def init_params(key, d_model):
    dff = 4 * d_model
    ks = jax.random.split(key, 9)
    s = 1.0 / math.sqrt(d_model)
    sf = 1.0 / math.sqrt(dff)

    def u(k, shape, lim, dtype):
        return jax.random.uniform(k, shape, jnp.float32, -lim, lim).astype(dtype)

    # Linear weights stored (in, out) so the kernel computes x @ W + b, and in
    # bf16 (MXU operand dtype). Biases / LayerNorm params stay f32.
    return {
        "wq": u(ks[0], (d_model, d_model), s, jnp.bfloat16),
        "wk": u(ks[1], (d_model, d_model), s, jnp.bfloat16),
        "wv": u(ks[2], (d_model, d_model), s, jnp.bfloat16),
        "wo": u(ks[3], (d_model, d_model), s, jnp.bfloat16),
        "bq": u(ks[4], (1, d_model), s, jnp.float32),
        "bk": u(ks[5], (1, d_model), s, jnp.float32),
        "bv": u(ks[6], (1, d_model), s, jnp.float32),
        "bo": u(ks[7], (1, d_model), s, jnp.float32),
        "g1": jnp.ones((1, d_model), jnp.float32),
        "be1": jnp.zeros((1, d_model), jnp.float32),
        "wf1": u(ks[8], (d_model, dff), s, jnp.bfloat16),
        "bf1": u(jax.random.fold_in(key, 1), (1, dff), s, jnp.float32),
        "wf2": u(jax.random.fold_in(key, 2), (dff, d_model), sf, jnp.bfloat16),
        "bf2": u(jax.random.fold_in(key, 3), (1, d_model), sf, jnp.float32),
        "g2": jnp.ones((1, d_model), jnp.float32),
        "be2": jnp.zeros((1, d_model), jnp.float32),
    }


if __name__ == "__main__":
    # Small but exercises every grid axis: B=2 batches, 2 FFN hidden slabs
    # (accumulator path), 2 query tiles (K/V + h scratch reuse + output revisit).
    B, S, D, H = 2, 16, 64, 4
    key = jax.random.PRNGKey(0)
    kx, kp = jax.random.split(key)
    x = jax.random.normal(kx, (B, S, D), jnp.float32)
    params = init_params(kp, D)

    out = transformer_block(x, params, num_heads=H, tq=8, dff_tile=128)
    out = jax.block_until_ready(out)

    ref = reference(x, params, H)
    assert out.shape == (B, S, D)
    err = float(jnp.max(jnp.abs(out - ref)))
    # bf16 MXU operands (f32 accumulation) -> small drift vs. the f32 reference.
    assert jnp.allclose(out, ref, atol=5e-2, rtol=5e-2), f"max err {err}"
    print("KERNEL_OK")
</pallas_src>

<mosaic_0001>
module attributes {stable_mosaic.version = 11 : i64} {
  func.func @transformer_block_kernel(%arg0: i32, %arg1: i32, %arg2: i32, %arg3: memref<1x16x64xf32, #tpu.memory_space<vmem>>, %arg4: memref<64x64xbf16, #tpu.memory_space<vmem>>, %arg5: memref<1x64xf32, #tpu.memory_space<vmem>>, %arg6: memref<64x64xbf16, #tpu.memory_space<vmem>>, %arg7: memref<1x64xf32, #tpu.memory_space<vmem>>, %arg8: memref<64x64xbf16, #tpu.memory_space<vmem>>, %arg9: memref<1x64xf32, #tpu.memory_space<vmem>>, %arg10: memref<64x64xbf16, #tpu.memory_space<vmem>>, %arg11: memref<1x64xf32, #tpu.memory_space<vmem>>, %arg12: memref<1x64xf32, #tpu.memory_space<vmem>>, %arg13: memref<1x64xf32, #tpu.memory_space<vmem>>, %arg14: memref<64x128xbf16, #tpu.memory_space<vmem>>, %arg15: memref<1x128xf32, #tpu.memory_space<vmem>>, %arg16: memref<128x64xbf16, #tpu.memory_space<vmem>>, %arg17: memref<1x64xf32, #tpu.memory_space<vmem>>, %arg18: memref<1x64xf32, #tpu.memory_space<vmem>>, %arg19: memref<1x64xf32, #tpu.memory_space<vmem>>, %arg20: memref<1x8x64xf32, #tpu.memory_space<vmem>>, %arg21: memref<16x64xbf16, #tpu.memory_space<vmem>>, %arg22: memref<16x64xbf16, #tpu.memory_space<vmem>>, %arg23: memref<2x8x64xf32, #tpu.memory_space<vmem>>, %arg24: memref<2x8x64xbf16, #tpu.memory_space<vmem>>, %arg25: memref<2x8x64xf32, #tpu.memory_space<vmem>>, %arg26: memref<8x64xbf16, #tpu.memory_space<vmem>>) attributes {dimension_semantics = [#tpu.dimension_semantics<parallel>, #tpu.dimension_semantics<arbitrary>, #tpu.dimension_semantics<arbitrary>], iteration_bounds = array<i64: 2, 2, 2>, scalar_prefetch = 0 : i64, scratch_operands = 6 : i64, tpu.core_type = #tpu.core_type<tc>, window_params = [{pipeline_mode = #tpu.pipeline_mode<synchronous>, transform_indices = @transform_0, window_bounds = array<i64: 1, 16, 64>}, {pipeline_mode = #tpu.pipeline_mode<synchronous>, transform_indices = @transform_1, window_bounds = array<i64: 64, 64>}, {pipeline_mode = #tpu.pipeline_mode<synchronous>, transform_indices = @transform_2, window_bounds = array<i64: 1, 64>}, {pipeline_mode = #tpu.pipeline_mode<synchronous>, transform_indices = @transform_3, window_bounds = array<i64: 64, 64>}, {pipeline_mode = #tpu.pipeline_mode<synchronous>, transform_indices = @transform_4, window_bounds = array<i64: 1, 64>}, {pipeline_mode = #tpu.pipeline_mode<synchronous>, transform_indices = @transform_5, window_bounds = array<i64: 64, 64>}, {pipeline_mode = #tpu.pipeline_mode<synchronous>, transform_indices = @transform_6, window_bounds = array<i64: 1, 64>}, {pipeline_mode = #tpu.pipeline_mode<synchronous>, transform_indices = @transform_7, window_bounds = array<i64: 64, 64>}, {pipeline_mode = #tpu.pipeline_mode<synchronous>, transform_indices = @transform_8, window_bounds = array<i64: 1, 64>}, {pipeline_mode = #tpu.pipeline_mode<synchronous>, transform_indices = @transform_9, window_bounds = array<i64: 1, 64>}, {pipeline_mode = #tpu.pipeline_mode<synchronous>, transform_indices = @transform_10, window_bounds = array<i64: 1, 64>}, {transform_indices = @transform_11, window_bounds = array<i64: 64, 128>}, {transform_indices = @transform_12, window_bounds = array<i64: 1, 128>}, {transform_indices = @transform_13, window_bounds = array<i64: 128, 64>}, {pipeline_mode = #tpu.pipeline_mode<synchronous>, transform_indices = @transform_14, window_bounds = array<i64: 1, 64>}, {pipeline_mode = #tpu.pipeline_mode<synchronous>, transform_indices = @transform_15, window_bounds = array<i64: 1, 64>}, {pipeline_mode = #tpu.pipeline_mode<synchronous>, transform_indices = @transform_16, window_bounds = array<i64: 1, 64>}, {transform_indices = @transform_17, window_bounds = array<i64: 1, 8, 64>}]} {
    %c8_i32 = arith.constant 8 : i32
    %0 = arith.muli %arg2, %c8_i32 : i32
    %1 = tpu.assume_multiple %0, 8 : i32
    %c0_i32 = arith.constant 0 : i32
    %2 = arith.cmpi eq, %arg1, %c0_i32 : i32
    %c0_i32_0 = arith.constant 0 : i32
    %3 = arith.cmpi eq, %arg2, %c0_i32_0 : i32
    %4 = arith.andi %2, %3 : i1
    %5 = arith.extui %4 : i1 to i32
    %c0_i32_1 = arith.constant 0 : i32
    %6 = arith.cmpi ne, %5, %c0_i32_1 : i32
    scf.if %6 {
      %c0_18 = arith.constant 0 : index
      %c0_19 = arith.constant 0 : index
      %c0_20 = arith.constant 0 : index
      %34 = vector.load %arg3[%c0_18, %c0_19, %c0_20] : memref<1x16x64xf32, #tpu.memory_space<vmem>>, vector<1x16x64xf32>
      %35 = vector.shape_cast %34 : vector<1x16x64xf32> to vector<16x64xf32>
      %36 = arith.truncf %35 : vector<16x64xf32> to vector<16x64xbf16>
      %c0_21 = arith.constant 0 : index
      %c0_22 = arith.constant 0 : index
      %37 = vector.load %arg6[%c0_21, %c0_22] : memref<64x64xbf16, #tpu.memory_space<vmem>>, vector<64x64xbf16>
      %cst_23 = arith.constant dense<0.000000e+00> : vector<16x64xf32>
      %38 = tpu.matmul %36, %37, %cst_23 {dimension_numbers = #tpu.dot_dimension_numbers<[1], [0], [0], [1], [0, 0, 1, 1], [], []>} : vector<16x64xbf16>, vector<64x64xbf16>, vector<16x64xf32> -> vector<16x64xf32>
      %c0_24 = arith.constant 0 : index
      %c0_25 = arith.constant 0 : index
      %39 = vector.load %arg7[%c0_24, %c0_25] : memref<1x64xf32, #tpu.memory_space<vmem>>, vector<1x64xf32>
      %40 = vector.broadcast %39 : vector<1x64xf32> to vector<16x64xf32>
      %41 = arith.addf %38, %40 : vector<16x64xf32>
      %c0_26 = arith.constant 0 : index
      %c0_27 = arith.constant 0 : index
      %42 = vector.load %arg8[%c0_26, %c0_27] : memref<64x64xbf16, #tpu.memory_space<vmem>>, vector<64x64xbf16>
      %cst_28 = arith.constant dense<0.000000e+00> : vector<16x64xf32>
      %43 = tpu.matmul %36, %42, %cst_28 {dimension_numbers = #tpu.dot_dimension_numbers<[1], [0], [0], [1], [0, 0, 1, 1], [], []>} : vector<16x64xbf16>, vector<64x64xbf16>, vector<16x64xf32> -> vector<16x64xf32>
      %c0_29 = arith.constant 0 : index
      %c0_30 = arith.constant 0 : index
      %44 = vector.load %arg9[%c0_29, %c0_30] : memref<1x64xf32, #tpu.memory_space<vmem>>, vector<1x64xf32>
      %45 = vector.broadcast %44 : vector<1x64xf32> to vector<16x64xf32>
      %46 = arith.addf %43, %45 : vector<16x64xf32>
      %47 = arith.truncf %41 : vector<16x64xf32> to vector<16x64xbf16>
      %c0_31 = arith.constant 0 : index
      %c0_32 = arith.constant 0 : index
      %48 = vector.load %arg21[%c0_31, %c0_32] : memref<16x64xbf16, #tpu.memory_space<vmem>>, vector<16x64xbf16>
      tpu.vector_store %arg21[%c0_31, %c0_32], %47 {strides = array<i32>} : memref<16x64xbf16, #tpu.memory_space<vmem>>, vector<16x64xbf16>,
      %49 = arith.truncf %46 : vector<16x64xf32> to vector<16x64xbf16>
      %c0_33 = arith.constant 0 : index
      %c0_34 = arith.constant 0 : index
      %50 = vector.load %arg22[%c0_33, %c0_34] : memref<16x64xbf16, #tpu.memory_space<vmem>>, vector<16x64xbf16>
      tpu.vector_store %arg22[%c0_33, %c0_34], %49 {strides = array<i32>} : memref<16x64xbf16, #tpu.memory_space<vmem>>, vector<16x64xbf16>,
    } else {
    }
    %c0_i32_2 = arith.constant 0 : i32
    %7 = arith.cmpi eq, %arg1, %c0_i32_2 : i32
    %8 = arith.extui %7 : i1 to i32
    %c0_i32_3 = arith.constant 0 : i32
    %9 = arith.cmpi ne, %8, %c0_i32_3 : i32
    scf.if %9 {
      %c0_18 = arith.constant 0 : index
      %34 = arith.index_cast %1 : i32 to index
      %c0_19 = arith.constant 0 : index
      %35 = vector.load %arg3[%c0_18, %34, %c0_19] : memref<1x16x64xf32, #tpu.memory_space<vmem>>, vector<1x8x64xf32>
      %36 = vector.shape_cast %35 : vector<1x8x64xf32> to vector<8x64xf32>
      %37 = arith.truncf %36 : vector<8x64xf32> to vector<8x64xbf16>
      %c0_20 = arith.constant 0 : index
      %c0_21 = arith.constant 0 : index
      %38 = vector.load %arg4[%c0_20, %c0_21] : memref<64x64xbf16, #tpu.memory_space<vmem>>, vector<64x64xbf16>
      %cst_22 = arith.constant dense<0.000000e+00> : vector<8x64xf32>
      %39 = tpu.matmul %37, %38, %cst_22 {dimension_numbers = #tpu.dot_dimension_numbers<[1], [0], [0], [1], [0, 0, 1, 1], [], []>} : vector<8x64xbf16>, vector<64x64xbf16>, vector<8x64xf32> -> vector<8x64xf32>
      %c0_23 = arith.constant 0 : index
      %c0_24 = arith.constant 0 : index
      %40 = vector.load %arg5[%c0_23, %c0_24] : memref<1x64xf32, #tpu.memory_space<vmem>>, vector<1x64xf32>
      %41 = vector.broadcast %40 : vector<1x64xf32> to vector<8x64xf32>
      %42 = arith.addf %39, %41 : vector<8x64xf32>
      %cst_25 = arith.constant 2.500000e-01 : f32
      %43 = vector.broadcast %cst_25 : f32 to vector<8x64xf32>
      %44 = arith.mulf %42, %43 : vector<8x64xf32>
      %45 = vector.extract_strided_slice %44 {offsets = [0, 0], sizes = [8, 16], strides = [1, 1]} : vector<8x64xf32> to vector<8x16xf32>
      %46 = arith.truncf %45 : vector<8x16xf32> to vector<8x16xbf16>
      %c0_26 = arith.constant 0 : index
      %c0_27 = arith.constant 0 : index
      %47 = vector.load %arg21[%c0_26, %c0_27] : memref<16x64xbf16, #tpu.memory_space<vmem>>, vector<16x16xbf16>
      %cst_28 = arith.constant dense<0.000000e+00> : vector<8x16xf32>
      %48 = tpu.matmul %46, %47, %cst_28 {dimension_numbers = #tpu.dot_dimension_numbers<[1], [1], [0], [0], [0, 0, 1, 0], [], []>} : vector<8x16xbf16>, vector<16x16xbf16>, vector<8x16xf32> -> vector<8x16xf32>
      %cst_29 = arith.constant dense<0xFF800000> : vector<8xf32>
      %49 = vector.multi_reduction <maximumf>, %48, %cst_29 [1] : vector<8x16xf32> to vector<8xf32>
      %50 = vector.shape_cast %49 : vector<8xf32> to vector<8x1xf32>
      %51 = vector.broadcast %50 : vector<8x1xf32> to vector<8x16xf32>
      %52 = arith.subf %48, %51 : vector<8x16xf32>
      %53 = math.exp %52 : vector<8x16xf32>
      %cst_30 = arith.constant dense<0.000000e+00> : vector<8xf32>
      %54 = vector.multi_reduction <add>, %53, %cst_30 [1] : vector<8x16xf32> to vector<8xf32>
      %55 = vector.shape_cast %54 : vector<8xf32> to vector<8x1xf32>
      %56 = tpu.reciprocal %55 {approx = true} : vector<8x1xf32> -> vector<8x1xf32>
      %57 = vector.broadcast %56 : vector<8x1xf32> to vector<8x16xf32>
      %58 = arith.mulf %53, %57 : vector<8x16xf32>
      %59 = arith.truncf %58 : vector<8x16xf32> to vector<8x16xbf16>
      %c0_31 = arith.constant 0 : index
      %c0_32 = arith.constant 0 : index
      %60 = vector.load %arg22[%c0_31, %c0_32] : memref<16x64xbf16, #tpu.memory_space<vmem>>, vector<16x16xbf16>
      %cst_33 = arith.constant dense<0.000000e+00> : vector<8x16xf32>
      %61 = tpu.matmul %59, %60, %cst_33 {dimension_numbers = #tpu.dot_dimension_numbers<[1], [0], [0], [1], [0, 0, 1, 1], [], []>} : vector<8x16xbf16>, vector<16x16xbf16>, vector<8x16xf32> -> vector<8x16xf32>
      %62 = arith.truncf %61 : vector<8x16xf32> to vector<8x16xbf16>
      %c0_34 = arith.constant 0 : index
      %c0_35 = arith.constant 0 : index
      %63 = vector.load %arg26[%c0_34, %c0_35] : memref<8x64xbf16, #tpu.memory_space<vmem>>, vector<8x16xbf16>
      tpu.vector_store %arg26[%c0_34, %c0_35], %62 {strides = array<i32>} : memref<8x64xbf16, #tpu.memory_space<vmem>>, vector<8x16xbf16>,
      %64 = vector.extract_strided_slice %44 {offsets = [0, 16], sizes = [8, 16], strides = [1, 1]} : vector<8x64xf32> to vector<8x16xf32>
      %65 = arith.truncf %64 : vector<8x16xf32> to vector<8x16xbf16>
      %c0_36 = arith.constant 0 : index
      %c16 = arith.constant 16 : index
      %66 = vector.load %arg21[%c0_36, %c16] : memref<16x64xbf16, #tpu.memory_space<vmem>>, vector<16x16xbf16>
      %cst_37 = arith.constant dense<0.000000e+00> : vector<8x16xf32>
      %67 = tpu.matmul %65, %66, %cst_37 {dimension_numbers = #tpu.dot_dimension_numbers<[1], [1], [0], [0], [0, 0, 1, 0], [], []>} : vector<8x16xbf16>, vector<16x16xbf16>, vector<8x16xf32> -> vector<8x16xf32>
      %cst_38 = arith.constant dense<0xFF800000> : vector<8xf32>
      %68 = vector.multi_reduction <maximumf>, %67, %cst_38 [1] : vector<8x16xf32> to vector<8xf32>
      %69 = vector.shape_cast %68 : vector<8xf32> to vector<8x1xf32>
      %70 = vector.broadcast %69 : vector<8x1xf32> to vector<8x16xf32>
      %71 = arith.subf %67, %70 : vector<8x16xf32>
      %72 = math.exp %71 : vector<8x16xf32>
      %cst_39 = arith.constant dense<0.000000e+00> : vector<8xf32>
      %73 = vector.multi_reduction <add>, %72, %cst_39 [1] : vector<8x16xf32> to vector<8xf32>
      %74 = vector.shape_cast %73 : vector<8xf32> to vector<8x1xf32>
      %75 = tpu.reciprocal %74 {approx = true} : vector<8x1xf32> -> vector<8x1xf32>
      %76 = vector.broadcast %75 : vector<8x1xf32> to vector<8x16xf32>
      %77 = arith.mulf %72, %76 : vector<8x16xf32>
      %78 = arith.truncf %77 : vector<8x16xf32> to vector<8x16xbf16>
      %c0_40 = arith.constant 0 : index
      %c16_41 = arith.constant 16 : index
      %79 = vector.load %arg22[%c0_40, %c16_41] : memref<16x64xbf16, #tpu.memory_space<vmem>>, vector<16x16xbf16>
      %cst_42 = arith.constant dense<0.000000e+00> : vector<8x16xf32>
      %80 = tpu.matmul %78, %79, %cst_42 {dimension_numbers = #tpu.dot_dimension_numbers<[1], [0], [0], [1], [0, 0, 1, 1], [], []>} : vector<8x16xbf16>, vector<16x16xbf16>, vector<8x16xf32> -> vector<8x16xf32>
      %81 = arith.truncf %80 : vector<8x16xf32> to vector<8x16xbf16>
      %c0_43 = arith.constant 0 : index
      %c16_44 = arith.constant 16 : index
      %82 = vector.load %arg26[%c0_43, %c16_44] : memref<8x64xbf16, #tpu.memory_space<vmem>>, vector<8x16xbf16>
      tpu.vector_store %arg26[%c0_43, %c16_44], %81 {strides = array<i32>} : memref<8x64xbf16, #tpu.memory_space<vmem>>, vector<8x16xbf16>,
      %83 = vector.extract_strided_slice %44 {offsets = [0, 32], sizes = [8, 16], strides = [1, 1]} : vector<8x64xf32> to vector<8x16xf32>
      %84 = arith.truncf %83 : vector<8x16xf32> to vector<8x16xbf16>
      %c0_45 = arith.constant 0 : index
      %c32 = arith.constant 32 : index
      %85 = vector.load %arg21[%c0_45, %c32] : memref<16x64xbf16, #tpu.memory_space<vmem>>, vector<16x16xbf16>
      %cst_46 = arith.constant dense<0.000000e+00> : vector<8x16xf32>
      %86 = tpu.matmul %84, %85, %cst_46 {dimension_numbers = #tpu.dot_dimension_numbers<[1], [1], [0], [0], [0, 0, 1, 0], [], []>} : vector<8x16xbf16>, vector<16x16xbf16>, vector<8x16xf32> -> vector<8x16xf32>
      %cst_47 = arith.constant dense<0xFF800000> : vector<8xf32>
      %87 = vector.multi_reduction <maximumf>, %86, %cst_47 [1] : vector<8x16xf32> to vector<8xf32>
      %88 = vector.shape_cast %87 : vector<8xf32> to vector<8x1xf32>
      %89 = vector.broadcast %88 : vector<8x1xf32> to vector<8x16xf32>
      %90 = arith.subf %86, %89 : vector<8x16xf32>
      %91 = math.exp %90 : vector<8x16xf32>
      %cst_48 = arith.constant dense<0.000000e+00> : vector<8xf32>
      %92 = vector.multi_reduction <add>, %91, %cst_48 [1] : vector<8x16xf32> to vector<8xf32>
      %93 = vector.shape_cast %92 : vector<8xf32> to vector<8x1xf32>
      %94 = tpu.reciprocal %93 {approx = true} : vector<8x1xf32> -> vector<8x1xf32>
      %95 = vector.broadcast %94 : vector<8x1xf32> to vector<8x16xf32>
      %96 = arith.mulf %91, %95 : vector<8x16xf32>
      %97 = arith.truncf %96 : vector<8x16xf32> to vector<8x16xbf16>
      %c0_49 = arith.constant 0 : index
      %c32_50 = arith.constant 32 : index
      %98 = vector.load %arg22[%c0_49, %c32_50] : memref<16x64xbf16, #tpu.memory_space<vmem>>, vector<16x16xbf16>
      %cst_51 = arith.constant dense<0.000000e+00> : vector<8x16xf32>
      %99 = tpu.matmul %97, %98, %cst_51 {dimension_numbers = #tpu.dot_dimension_numbers<[1], [0], [0], [1], [0, 0, 1, 1], [], []>} : vector<8x16xbf16>, vector<16x16xbf16>, vector<8x16xf32> -> vector<8x16xf32>
      %100 = arith.truncf %99 : vector<8x16xf32> to vector<8x16xbf16>
      %c0_52 = arith.constant 0 : index
      %c32_53 = arith.constant 32 : index
      %101 = vector.load %arg26[%c0_52, %c32_53] : memref<8x64xbf16, #tpu.memory_space<vmem>>, vector<8x16xbf16>
      tpu.vector_store %arg26[%c0_52, %c32_53], %100 {strides = array<i32>} : memref<8x64xbf16, #tpu.memory_space<vmem>>, vector<8x16xbf16>,
      %102 = vector.extract_strided_slice %44 {offsets = [0, 48], sizes = [8, 16], strides = [1, 1]} : vector<8x64xf32> to vector<8x16xf32>
      %103 = arith.truncf %102 : vector<8x16xf32> to vector<8x16xbf16>
      %c0_54 = arith.constant 0 : index
      %c48 = arith.constant 48 : index
      %104 = vector.load %arg21[%c0_54, %c48] : memref<16x64xbf16, #tpu.memory_space<vmem>>, vector<16x16xbf16>
      %cst_55 = arith.constant dense<0.000000e+00> : vector<8x16xf32>
      %105 = tpu.matmul %103, %104, %cst_55 {dimension_numbers = #tpu.dot_dimension_numbers<[1], [1], [0], [0], [0, 0, 1, 0], [], []>} : vector<8x16xbf16>, vector<16x16xbf16>, vector<8x16xf32> -> vector<8x16xf32>
      %cst_56 = arith.constant dense<0xFF800000> : vector<8xf32>
      %106 = vector.multi_reduction <maximumf>, %105, %cst_56 [1] : vector<8x16xf32> to vector<8xf32>
      %107 = vector.shape_cast %106 : vector<8xf32> to vector<8x1xf32>
      %108 = vector.broadcast %107 : vector<8x1xf32> to vector<8x16xf32>
      %109 = arith.subf %105, %108 : vector<8x16xf32>
      %110 = math.exp %109 : vector<8x16xf32>
      %cst_57 = arith.constant dense<0.000000e+00> : vector<8xf32>
      %111 = vector.multi_reduction <add>, %110, %cst_57 [1] : vector<8x16xf32> to vector<8xf32>
      %112 = vector.shape_cast %111 : vector<8xf32> to vector<8x1xf32>
      %113 = tpu.reciprocal %112 {approx = true} : vector<8x1xf32> -> vector<8x1xf32>
      %114 = vector.broadcast %113 : vector<8x1xf32> to vector<8x16xf32>
      %115 = arith.mulf %110, %114 : vector<8x16xf32>
      %116 = arith.truncf %115 : vector<8x16xf32> to vector<8x16xbf16>
      %c0_58 = arith.constant 0 : index
      %c48_59 = arith.constant 48 : index
      %117 = vector.load %arg22[%c0_58, %c48_59] : memref<16x64xbf16, #tpu.memory_space<vmem>>, vector<16x16xbf16>
      %cst_60 = arith.constant dense<0.000000e+00> : vector<8x16xf32>
      %118 = tpu.matmul %116, %117, %cst_60 {dimension_numbers = #tpu.dot_dimension_numbers<[1], [0], [0], [1], [0, 0, 1, 1], [], []>} : vector<8x16xbf16>, vector<16x16xbf16>, vector<8x16xf32> -> vector<8x16xf32>
      %119 = arith.truncf %118 : vector<8x16xf32> to vector<8x16xbf16>
      %c0_61 = arith.constant 0 : index
      %c48_62 = arith.constant 48 : index
      %120 = vector.load %arg26[%c0_61, %c48_62] : memref<8x64xbf16, #tpu.memory_space<vmem>>, vector<8x16xbf16>
      tpu.vector_store %arg26[%c0_61, %c48_62], %119 {strides = array<i32>} : memref<8x64xbf16, #tpu.memory_space<vmem>>, vector<8x16xbf16>,
      %c0_63 = arith.constant 0 : index
      %c0_64 = arith.constant 0 : index
      %121 = vector.load %arg26[%c0_63, %c0_64] : memref<8x64xbf16, #tpu.memory_space<vmem>>, vector<8x64xbf16>
      %c0_65 = arith.constant 0 : index
      %c0_66 = arith.constant 0 : index
      %122 = vector.load %arg10[%c0_65, %c0_66] : memref<64x64xbf16, #tpu.memory_space<vmem>>, vector<64x64xbf16>
      %cst_67 = arith.constant dense<0.000000e+00> : vector<8x64xf32>
      %123 = tpu.matmul %121, %122, %cst_67 {dimension_numbers = #tpu.dot_dimension_numbers<[1], [0], [0], [1], [0, 0, 1, 1], [], []>} : vector<8x64xbf16>, vector<64x64xbf16>, vector<8x64xf32> -> vector<8x64xf32>
      %c0_68 = arith.constant 0 : index
      %c0_69 = arith.constant 0 : index
      %124 = vector.load %arg11[%c0_68, %c0_69] : memref<1x64xf32, #tpu.memory_space<vmem>>, vector<1x64xf32>
      %125 = vector.broadcast %124 : vector<1x64xf32> to vector<8x64xf32>
      %126 = arith.addf %123, %125 : vector<8x64xf32>
      %127 = arith.addf %36, %126 : vector<8x64xf32>
      %c0_70 = arith.constant 0 : index
      %c0_71 = arith.constant 0 : index
      %128 = vector.load %arg12[%c0_70, %c0_71] : memref<1x64xf32, #tpu.memory_space<vmem>>, vector<1x64xf32>
      %c0_72 = arith.constant 0 : index
      %c0_73 = arith.constant 0 : index
      %129 = vector.load %arg13[%c0_72, %c0_73] : memref<1x64xf32, #tpu.memory_space<vmem>>, vector<1x64xf32>
      %cst_74 = arith.constant dense<0.000000e+00> : vector<8xf32>
      %130 = vector.multi_reduction <add>, %127, %cst_74 [1] : vector<8x64xf32> to vector<8xf32>
      %131 = vector.shape_cast %130 : vector<8xf32> to vector<8x1xf32>
      %cst_75 = arith.constant 6.400000e+01 : f32
      %132 = vector.broadcast %cst_75 : f32 to vector<8x1xf32>
      %133 = arith.divf %131, %132 : vector<8x1xf32>
      %134 = vector.broadcast %133 : vector<8x1xf32> to vector<8x64xf32>
      %135 = arith.subf %127, %134 : vector<8x64xf32>
      %136 = arith.mulf %135, %135 : vector<8x64xf32>
      %cst_76 = arith.constant dense<0.000000e+00> : vector<8xf32>
      %137 = vector.multi_reduction <add>, %136, %cst_76 [1] : vector<8x64xf32> to vector<8xf32>
      %138 = vector.shape_cast %137 : vector<8xf32> to vector<8x1xf32>
      %cst_77 = arith.constant 6.400000e+01 : f32
      %139 = vector.broadcast %cst_77 : f32 to vector<8x1xf32>
      %140 = arith.divf %138, %139 : vector<8x1xf32>
      %141 = vector.broadcast %133 : vector<8x1xf32> to vector<8x64xf32>
      %142 = arith.subf %127, %141 : vector<8x64xf32>
      %cst_78 = arith.constant 9.99999974E-6 : f32
      %143 = vector.broadcast %cst_78 : f32 to vector<8x1xf32>
      %144 = arith.addf %140, %143 : vector<8x1xf32>
      %145 = math.rsqrt %144 : vector<8x1xf32>
      %146 = vector.broadcast %145 : vector<8x1xf32> to vector<8x64xf32>
      %147 = arith.mulf %142, %146 : vector<8x64xf32>
      %148 = vector.broadcast %128 : vector<1x64xf32> to vector<8x64xf32>
      %149 = arith.mulf %147, %148 : vector<8x64xf32>
      %150 = vector.broadcast %129 : vector<1x64xf32> to vector<8x64xf32>
      %151 = arith.addf %149, %150 : vector<8x64xf32>
      %152 = arith.index_cast %arg2 : i32 to index
      %c0_79 = arith.constant 0 : index
      %c0_80 = arith.constant 0 : index
      %153 = vector.load %arg23[%152, %c0_79, %c0_80] : memref<2x8x64xf32, #tpu.memory_space<vmem>>, vector<1x8x64xf32>
      %154 = vector.shape_cast %153 : vector<1x8x64xf32> to vector<8x64xf32>
      %155 = vector.shape_cast %151 : vector<8x64xf32> to vector<1x8x64xf32>
      tpu.vector_store %arg23[%152, %c0_79, %c0_80], %155 {strides = array<i32>} : memref<2x8x64xf32, #tpu.memory_space<vmem>>, vector<1x8x64xf32>,
      %156 = arith.truncf %151 : vector<8x64xf32> to vector<8x64xbf16>
      %157 = arith.index_cast %arg2 : i32 to index
      %c0_81 = arith.constant 0 : index
      %c0_82 = arith.constant 0 : index
      %158 = vector.load %arg24[%157, %c0_81, %c0_82] : memref<2x8x64xbf16, #tpu.memory_space<vmem>>, vector<1x8x64xbf16>
      %159 = vector.shape_cast %158 : vector<1x8x64xbf16> to vector<8x64xbf16>
      %160 = vector.shape_cast %156 : vector<8x64xbf16> to vector<1x8x64xbf16>
      tpu.vector_store %arg24[%157, %c0_81, %c0_82], %160 {strides = array<i32>} : memref<2x8x64xbf16, #tpu.memory_space<vmem>>, vector<1x8x64xbf16>,
      %cst_83 = arith.constant 0.000000e+00 : f32
      %161 = vector.broadcast %cst_83 : f32 to vector<8x64xf32>
      %162 = arith.index_cast %arg2 : i32 to index
      %c0_84 = arith.constant 0 : index
      %c0_85 = arith.constant 0 : index
      %163 = vector.load %arg25[%162, %c0_84, %c0_85] : memref<2x8x64xf32, #tpu.memory_space<vmem>>, vector<1x8x64xf32>
      %164 = vector.shape_cast %163 : vector<1x8x64xf32> to vector<8x64xf32>
      %165 = vector.shape_cast %161 : vector<8x64xf32> to vector<1x8x64xf32>
      tpu.vector_store %arg25[%162, %c0_84, %c0_85], %165 {strides = array<i32>} : memref<2x8x64xf32, #tpu.memory_space<vmem>>, vector<1x8x64xf32>,
    } else {
    }
    %10 = arith.index_cast %arg2 : i32 to index
    %c0 = arith.constant 0 : index
    %c0_4 = arith.constant 0 : index
    %11 = vector.load %arg24[%10, %c0, %c0_4] : memref<2x8x64xbf16, #tpu.memory_space<vmem>>, vector<1x8x64xbf16>
    %12 = vector.shape_cast %11 : vector<1x8x64xbf16> to vector<8x64xbf16>
    %c0_5 = arith.constant 0 : index
    %c0_6 = arith.constant 0 : index
    %13 = vector.load %arg14[%c0_5, %c0_6] : memref<64x128xbf16, #tpu.memory_space<vmem>>, vector<64x128xbf16>
    %cst = arith.constant dense<0.000000e+00> : vector<8x128xf32>
    %14 = tpu.matmul %12, %13, %cst {dimension_numbers = #tpu.dot_dimension_numbers<[1], [0], [0], [1], [0, 0, 1, 1], [], []>} : vector<8x64xbf16>, vector<64x128xbf16>, vector<8x128xf32> -> vector<8x128xf32>
    %c0_7 = arith.constant 0 : index
    %c0_8 = arith.constant 0 : index
    %15 = vector.load %arg15[%c0_7, %c0_8] : memref<1x128xf32, #tpu.memory_space<vmem>>, vector<1x128xf32>
    %16 = vector.broadcast %15 : vector<1x128xf32> to vector<8x128xf32>
    %17 = arith.addf %14, %16 : vector<8x128xf32>
    %cst_9 = arith.constant 0.000000e+00 : f32
    %18 = vector.broadcast %cst_9 : f32 to vector<8x128xf32>
    %19 = arith.maximumf %17, %18 : vector<8x128xf32>
    %20 = arith.truncf %19 : vector<8x128xf32> to vector<8x128xbf16>
    %21 = arith.index_cast %arg2 : i32 to index
    %c0_10 = arith.constant 0 : index
    %c0_11 = arith.constant 0 : index
    %22 = vector.load %arg25[%21, %c0_10, %c0_11] : memref<2x8x64xf32, #tpu.memory_space<vmem>>, vector<1x8x64xf32>
    %23 = vector.shape_cast %22 : vector<1x8x64xf32> to vector<8x64xf32>
    %c0_12 = arith.constant 0 : index
    %c0_13 = arith.constant 0 : index
    %24 = vector.load %arg16[%c0_12, %c0_13] : memref<128x64xbf16, #tpu.memory_space<vmem>>, vector<128x64xbf16>
    %cst_14 = arith.constant dense<0.000000e+00> : vector<8x64xf32>
    %25 = tpu.matmul %20, %24, %cst_14 {dimension_numbers = #tpu.dot_dimension_numbers<[1], [0], [0], [1], [0, 0, 1, 1], [], []>} : vector<8x128xbf16>, vector<128x64xbf16>, vector<8x64xf32> -> vector<8x64xf32>
    %26 = arith.addf %23, %25 : vector<8x64xf32>
    %27 = arith.index_cast %arg2 : i32 to index
    %c0_15 = arith.constant 0 : index
    %c0_16 = arith.constant 0 : index
    %28 = vector.load %arg25[%27, %c0_15, %c0_16] : memref<2x8x64xf32, #tpu.memory_space<vmem>>, vector<1x8x64xf32>
    %29 = vector.shape_cast %28 : vector<1x8x64xf32> to vector<8x64xf32>
    %30 = vector.shape_cast %26 : vector<8x64xf32> to vector<1x8x64xf32>
    tpu.vector_store %arg25[%27, %c0_15, %c0_16], %30 {strides = array<i32>} : memref<2x8x64xf32, #tpu.memory_space<vmem>>, vector<1x8x64xf32>,
    %c1_i32 = arith.constant 1 : i32
    %31 = arith.cmpi eq, %arg1, %c1_i32 : i32
    %32 = arith.extui %31 : i1 to i32
    %c0_i32_17 = arith.constant 0 : i32
    %33 = arith.cmpi ne, %32, %c0_i32_17 : i32
    scf.if %33 {
      %34 = arith.index_cast %arg2 : i32 to index
      %c0_18 = arith.constant 0 : index
      %c0_19 = arith.constant 0 : index
      %35 = vector.load %arg23[%34, %c0_18, %c0_19] : memref<2x8x64xf32, #tpu.memory_space<vmem>>, vector<1x8x64xf32>
      %36 = vector.shape_cast %35 : vector<1x8x64xf32> to vector<8x64xf32>
      %37 = arith.index_cast %arg2 : i32 to index
      %c0_20 = arith.constant 0 : index
      %c0_21 = arith.constant 0 : index
      %38 = vector.load %arg25[%37, %c0_20, %c0_21] : memref<2x8x64xf32, #tpu.memory_space<vmem>>, vector<1x8x64xf32>
      %39 = vector.shape_cast %38 : vector<1x8x64xf32> to vector<8x64xf32>
      %40 = arith.addf %36, %39 : vector<8x64xf32>
      %c0_22 = arith.constant 0 : index
      %c0_23 = arith.constant 0 : index
      %41 = vector.load %arg17[%c0_22, %c0_23] : memref<1x64xf32, #tpu.memory_space<vmem>>, vector<1x64xf32>
      %42 = vector.broadcast %41 : vector<1x64xf32> to vector<8x64xf32>
      %43 = arith.addf %40, %42 : vector<8x64xf32>
      %c0_24 = arith.constant 0 : index
      %c0_25 = arith.constant 0 : index
      %44 = vector.load %arg18[%c0_24, %c0_25] : memref<1x64xf32, #tpu.memory_space<vmem>>, vector<1x64xf32>
      %c0_26 = arith.constant 0 : index
      %c0_27 = arith.constant 0 : index
      %45 = vector.load %arg19[%c0_26, %c0_27] : memref<1x64xf32, #tpu.memory_space<vmem>>, vector<1x64xf32>
      %cst_28 = arith.constant dense<0.000000e+00> : vector<8xf32>
      %46 = vector.multi_reduction <add>, %43, %cst_28 [1] : vector<8x64xf32> to vector<8xf32>
      %47 = vector.shape_cast %46 : vector<8xf32> to vector<8x1xf32>
      %cst_29 = arith.constant 6.400000e+01 : f32
      %48 = vector.broadcast %cst_29 : f32 to vector<8x1xf32>
      %49 = arith.divf %47, %48 : vector<8x1xf32>
      %50 = vector.broadcast %49 : vector<8x1xf32> to vector<8x64xf32>
      %51 = arith.subf %43, %50 : vector<8x64xf32>
      %52 = arith.mulf %51, %51 : vector<8x64xf32>
      %cst_30 = arith.constant dense<0.000000e+00> : vector<8xf32>
      %53 = vector.multi_reduction <add>, %52, %cst_30 [1] : vector<8x64xf32> to vector<8xf32>
      %54 = vector.shape_cast %53 : vector<8xf32> to vector<8x1xf32>
      %cst_31 = arith.constant 6.400000e+01 : f32
      %55 = vector.broadcast %cst_31 : f32 to vector<8x1xf32>
      %56 = arith.divf %54, %55 : vector<8x1xf32>
      %57 = vector.broadcast %49 : vector<8x1xf32> to vector<8x64xf32>
      %58 = arith.subf %43, %57 : vector<8x64xf32>
      %cst_32 = arith.constant 9.99999974E-6 : f32
      %59 = vector.broadcast %cst_32 : f32 to vector<8x1xf32>
      %60 = arith.addf %56, %59 : vector<8x1xf32>
      %61 = math.rsqrt %60 : vector<8x1xf32>
      %62 = vector.broadcast %61 : vector<8x1xf32> to vector<8x64xf32>
      %63 = arith.mulf %58, %62 : vector<8x64xf32>
      %64 = vector.broadcast %44 : vector<1x64xf32> to vector<8x64xf32>
      %65 = arith.mulf %63, %64 : vector<8x64xf32>
      %66 = vector.broadcast %45 : vector<1x64xf32> to vector<8x64xf32>
      %67 = arith.addf %65, %66 : vector<8x64xf32>
      %c0_33 = arith.constant 0 : index
      %c0_34 = arith.constant 0 : index
      %c0_35 = arith.constant 0 : index
      %68 = vector.load %arg20[%c0_33, %c0_34, %c0_35] : memref<1x8x64xf32, #tpu.memory_space<vmem>>, vector<1x8x64xf32>
      %69 = vector.shape_cast %68 : vector<1x8x64xf32> to vector<8x64xf32>
      %70 = vector.shape_cast %67 : vector<8x64xf32> to vector<1x8x64xf32>
      tpu.vector_store %arg20[%c0_33, %c0_34, %c0_35], %70 {strides = array<i32>} : memref<1x8x64xf32, #tpu.memory_space<vmem>>, vector<1x8x64xf32>,
    } else {
    }
    return
  }
  func.func @transform_0(%arg0: i32, %arg1: i32, %arg2: i32) -> (i32, i32, i32) {
    %c0_i32 = arith.constant 0 : i32
    %c0_i32_0 = arith.constant 0 : i32
    %c0_i32_1 = arith.constant 0 : i32
    return %arg0, %c0_i32, %c0_i32_0 : i32, i32, i32
  }
  func.func @transform_1(%arg0: i32, %arg1: i32, %arg2: i32) -> (i32, i32) {
    %c0_i32 = arith.constant 0 : i32
    %c0_i32_0 = arith.constant 0 : i32
    %c0_i32_1 = arith.constant 0 : i32
    return %c0_i32, %c0_i32_0 : i32, i32
  }
  func.func @transform_2(%arg0: i32, %arg1: i32, %arg2: i32) -> (i32, i32) {
    %c0_i32 = arith.constant 0 : i32
    %c0_i32_0 = arith.constant 0 : i32
    %c0_i32_1 = arith.constant 0 : i32
    return %c0_i32, %c0_i32_0 : i32, i32
  }
  func.func @transform_3(%arg0: i32, %arg1: i32, %arg2: i32) -> (i32, i32) {
    %c0_i32 = arith.constant 0 : i32
    %c0_i32_0 = arith.constant 0 : i32
    %c0_i32_1 = arith.constant 0 : i32
    return %c0_i32, %c0_i32_0 : i32, i32
  }
  func.func @transform_4(%arg0: i32, %arg1: i32, %arg2: i32) -> (i32, i32) {
    %c0_i32 = arith.constant 0 : i32
    %c0_i32_0 = arith.constant 0 : i32
    %c0_i32_1 = arith.constant 0 : i32
    return %c0_i32, %c0_i32_0 : i32, i32
  }
  func.func @transform_5(%arg0: i32, %arg1: i32, %arg2: i32) -> (i32, i32) {
    %c0_i32 = arith.constant 0 : i32
    %c0_i32_0 = arith.constant 0 : i32
    %c0_i32_1 = arith.constant 0 : i32
    return %c0_i32, %c0_i32_0 : i32, i32
  }
  func.func @transform_6(%arg0: i32, %arg1: i32, %arg2: i32) -> (i32, i32) {
    %c0_i32 = arith.constant 0 : i32
    %c0_i32_0 = arith.constant 0 : i32
    %c0_i32_1 = arith.constant 0 : i32
    return %c0_i32, %c0_i32_0 : i32, i32
  }
  func.func @transform_7(%arg0: i32, %arg1: i32, %arg2: i32) -> (i32, i32) {
    %c0_i32 = arith.constant 0 : i32
    %c0_i32_0 = arith.constant 0 : i32
    %c0_i32_1 = arith.constant 0 : i32
    return %c0_i32, %c0_i32_0 : i32, i32
  }
  func.func @transform_8(%arg0: i32, %arg1: i32, %arg2: i32) -> (i32, i32) {
    %c0_i32 = arith.constant 0 : i32
    %c0_i32_0 = arith.constant 0 : i32
    %c0_i32_1 = arith.constant 0 : i32
    return %c0_i32, %c0_i32_0 : i32, i32
  }
  func.func @transform_9(%arg0: i32, %arg1: i32, %arg2: i32) -> (i32, i32) {
    %c0_i32 = arith.constant 0 : i32
    %c0_i32_0 = arith.constant 0 : i32
    %c0_i32_1 = arith.constant 0 : i32
    return %c0_i32, %c0_i32_0 : i32, i32
  }
  func.func @transform_10(%arg0: i32, %arg1: i32, %arg2: i32) -> (i32, i32) {
    %c0_i32 = arith.constant 0 : i32
    %c0_i32_0 = arith.constant 0 : i32
    %c0_i32_1 = arith.constant 0 : i32
    return %c0_i32, %c0_i32_0 : i32, i32
  }
  func.func @transform_11(%arg0: i32, %arg1: i32, %arg2: i32) -> (i32, i32) {
    %c0_i32 = arith.constant 0 : i32
    %c0_i32_0 = arith.constant 0 : i32
    return %c0_i32, %arg1 : i32, i32
  }
  func.func @transform_12(%arg0: i32, %arg1: i32, %arg2: i32) -> (i32, i32) {
    %c0_i32 = arith.constant 0 : i32
    %c0_i32_0 = arith.constant 0 : i32
    return %c0_i32, %arg1 : i32, i32
  }
  func.func @transform_13(%arg0: i32, %arg1: i32, %arg2: i32) -> (i32, i32) {
    %c0_i32 = arith.constant 0 : i32
    %c0_i32_0 = arith.constant 0 : i32
    return %arg1, %c0_i32 : i32, i32
  }
  func.func @transform_14(%arg0: i32, %arg1: i32, %arg2: i32) -> (i32, i32) {
    %c0_i32 = arith.constant 0 : i32
    %c0_i32_0 = arith.constant 0 : i32
    %c0_i32_1 = arith.constant 0 : i32
    return %c0_i32, %c0_i32_0 : i32, i32
  }
  func.func @transform_15(%arg0: i32, %arg1: i32, %arg2: i32) -> (i32, i32) {
    %c0_i32 = arith.constant 0 : i32
    %c0_i32_0 = arith.constant 0 : i32
    %c0_i32_1 = arith.constant 0 : i32
    return %c0_i32, %c0_i32_0 : i32, i32
  }
  func.func @transform_16(%arg0: i32, %arg1: i32, %arg2: i32) -> (i32, i32) {
    %c0_i32 = arith.constant 0 : i32
    %c0_i32_0 = arith.constant 0 : i32
    %c0_i32_1 = arith.constant 0 : i32
    return %c0_i32, %c0_i32_0 : i32, i32
  }
  func.func @transform_17(%arg0: i32, %arg1: i32, %arg2: i32) -> (i32, i32, i32) {
    %c0_i32 = arith.constant 0 : i32
    %c0_i32_0 = arith.constant 0 : i32
    return %arg0, %arg2, %c0_i32 : i32, i32, i32
  }
}

module attributes {stable_mosaic.version = 11 : i64} {
  func.func @transformer_block_kernel(%arg0: i32, %arg1: i32, %arg2: i32, %arg3: memref<1x16x64xf32, #tpu.memory_space<vmem>>, %arg4: memref<64x64xbf16, #tpu.memory_space<vmem>>, %arg5: memref<1x64xf32, #tpu.memory_space<vmem>>, %arg6: memref<64x64xbf16, #tpu.memory_space<vmem>>, %arg7: memref<1x64xf32, #tpu.memory_space<vmem>>, %arg8: memref<64x64xbf16, #tpu.memory_space<vmem>>, %arg9: memref<1x64xf32, #tpu.memory_space<vmem>>, %arg10: memref<64x64xbf16, #tpu.memory_space<vmem>>, %arg11: memref<1x64xf32, #tpu.memory_space<vmem>>, %arg12: memref<1x64xf32, #tpu.memory_space<vmem>>, %arg13: memref<1x64xf32, #tpu.memory_space<vmem>>, %arg14: memref<64x128xbf16, #tpu.memory_space<vmem>>, %arg15: memref<1x128xf32, #tpu.memory_space<vmem>>, %arg16: memref<128x64xbf16, #tpu.memory_space<vmem>>, %arg17: memref<1x64xf32, #tpu.memory_space<vmem>>, %arg18: memref<1x64xf32, #tpu.memory_space<vmem>>, %arg19: memref<1x64xf32, #tpu.memory_space<vmem>>, %arg20: memref<1x8x64xf32, #tpu.memory_space<vmem>>, %arg21: memref<16x64xbf16, #tpu.memory_space<vmem>>, %arg22: memref<16x64xbf16, #tpu.memory_space<vmem>>, %arg23: memref<2x8x64xf32, #tpu.memory_space<vmem>>, %arg24: memref<2x8x64xbf16, #tpu.memory_space<vmem>>, %arg25: memref<2x8x64xf32, #tpu.memory_space<vmem>>, %arg26: memref<8x64xbf16, #tpu.memory_space<vmem>>) attributes {dimension_semantics = [#tpu.dimension_semantics<parallel>, #tpu.dimension_semantics<arbitrary>, #tpu.dimension_semantics<arbitrary>], iteration_bounds = array<i64: 2, 2, 2>, scalar_prefetch = 0 : i64, scratch_operands = 6 : i64, tpu.core_type = #tpu.core_type<tc>, window_params = [{transform_indices = @transform_0, window_bounds = array<i64: 1, 16, 64>}, {pipeline_mode = #tpu.pipeline_mode<synchronous>, transform_indices = @transform_1, window_bounds = array<i64: 64, 64>}, {pipeline_mode = #tpu.pipeline_mode<synchronous>, transform_indices = @transform_2, window_bounds = array<i64: 1, 64>}, {pipeline_mode = #tpu.pipeline_mode<synchronous>, transform_indices = @transform_3, window_bounds = array<i64: 64, 64>}, {pipeline_mode = #tpu.pipeline_mode<synchronous>, transform_indices = @transform_4, window_bounds = array<i64: 1, 64>}, {pipeline_mode = #tpu.pipeline_mode<synchronous>, transform_indices = @transform_5, window_bounds = array<i64: 64, 64>}, {pipeline_mode = #tpu.pipeline_mode<synchronous>, transform_indices = @transform_6, window_bounds = array<i64: 1, 64>}, {pipeline_mode = #tpu.pipeline_mode<synchronous>, transform_indices = @transform_7, window_bounds = array<i64: 64, 64>}, {pipeline_mode = #tpu.pipeline_mode<synchronous>, transform_indices = @transform_8, window_bounds = array<i64: 1, 64>}, {pipeline_mode = #tpu.pipeline_mode<synchronous>, transform_indices = @transform_9, window_bounds = array<i64: 1, 64>}, {pipeline_mode = #tpu.pipeline_mode<synchronous>, transform_indices = @transform_10, window_bounds = array<i64: 1, 64>}, {transform_indices = @transform_11, window_bounds = array<i64: 64, 128>}, {transform_indices = @transform_12, window_bounds = array<i64: 1, 128>}, {transform_indices = @transform_13, window_bounds = array<i64: 128, 64>}, {pipeline_mode = #tpu.pipeline_mode<synchronous>, transform_indices = @transform_14, window_bounds = array<i64: 1, 64>}, {pipeline_mode = #tpu.pipeline_mode<synchronous>, transform_indices = @transform_15, window_bounds = array<i64: 1, 64>}, {pipeline_mode = #tpu.pipeline_mode<synchronous>, transform_indices = @transform_16, window_bounds = array<i64: 1, 64>}, {transform_indices = @transform_17, window_bounds = array<i64: 1, 8, 64>}]} {
    %c8_i32 = arith.constant 8 : i32
    %0 = arith.muli %arg2, %c8_i32 : i32
    %1 = tpu.assume_multiple %0, 8 : i32
    %c0_i32 = arith.constant 0 : i32
    %2 = arith.cmpi eq, %arg1, %c0_i32 : i32
    %c0_i32_0 = arith.constant 0 : i32
    %3 = arith.cmpi eq, %arg2, %c0_i32_0 : i32
    %4 = arith.andi %2, %3 : i1
    %5 = arith.extui %4 : i1 to i32
    %c0_i32_1 = arith.constant 0 : i32
    %6 = arith.cmpi ne, %5, %c0_i32_1 : i32
    scf.if %6 {
      %c0_18 = arith.constant 0 : index
      %c0_19 = arith.constant 0 : index
      %c0_20 = arith.constant 0 : index
      %34 = vector.load %arg3[%c0_18, %c0_19, %c0_20] : memref<1x16x64xf32, #tpu.memory_space<vmem>>, vector<1x16x64xf32>
      %35 = vector.shape_cast %34 : vector<1x16x64xf32> to vector<16x64xf32>
      %36 = arith.truncf %35 : vector<16x64xf32> to vector<16x64xbf16>
      %c0_21 = arith.constant 0 : index
      %c0_22 = arith.constant 0 : index
      %37 = vector.load %arg6[%c0_21, %c0_22] : memref<64x64xbf16, #tpu.memory_space<vmem>>, vector<64x64xbf16>
      %cst_23 = arith.constant dense<0.000000e+00> : vector<16x64xf32>
      %38 = tpu.matmul %36, %37, %cst_23 {dimension_numbers = #tpu.dot_dimension_numbers<[1], [0], [0], [1], [0, 0, 1, 1], [], []>} : vector<16x64xbf16>, vector<64x64xbf16>, vector<16x64xf32> -> vector<16x64xf32>
      %c0_24 = arith.constant 0 : index
      %c0_25 = arith.constant 0 : index
      %39 = vector.load %arg7[%c0_24, %c0_25] : memref<1x64xf32, #tpu.memory_space<vmem>>, vector<1x64xf32>
      %40 = vector.broadcast %39 : vector<1x64xf32> to vector<16x64xf32>
      %41 = arith.addf %38, %40 : vector<16x64xf32>
      %c0_26 = arith.constant 0 : index
      %c0_27 = arith.constant 0 : index
      %42 = vector.load %arg8[%c0_26, %c0_27] : memref<64x64xbf16, #tpu.memory_space<vmem>>, vector<64x64xbf16>
      %cst_28 = arith.constant dense<0.000000e+00> : vector<16x64xf32>
      %43 = tpu.matmul %36, %42, %cst_28 {dimension_numbers = #tpu.dot_dimension_numbers<[1], [0], [0], [1], [0, 0, 1, 1], [], []>} : vector<16x64xbf16>, vector<64x64xbf16>, vector<16x64xf32> -> vector<16x64xf32>
      %c0_29 = arith.constant 0 : index
      %c0_30 = arith.constant 0 : index
      %44 = vector.load %arg9[%c0_29, %c0_30] : memref<1x64xf32, #tpu.memory_space<vmem>>, vector<1x64xf32>
      %45 = vector.broadcast %44 : vector<1x64xf32> to vector<16x64xf32>
      %46 = arith.addf %43, %45 : vector<16x64xf32>
      %47 = arith.truncf %41 : vector<16x64xf32> to vector<16x64xbf16>
      %c0_31 = arith.constant 0 : index
      %c0_32 = arith.constant 0 : index
      %48 = vector.load %arg21[%c0_31, %c0_32] : memref<16x64xbf16, #tpu.memory_space<vmem>>, vector<16x64xbf16>
      tpu.vector_store %arg21[%c0_31, %c0_32], %47 {strides = array<i32>} : memref<16x64xbf16, #tpu.memory_space<vmem>>, vector<16x64xbf16>,
      %49 = arith.truncf %46 : vector<16x64xf32> to vector<16x64xbf16>
      %c0_33 = arith.constant 0 : index
      %c0_34 = arith.constant 0 : index
      %50 = vector.load %arg22[%c0_33, %c0_34] : memref<16x64xbf16, #tpu.memory_space<vmem>>, vector<16x64xbf16>
      tpu.vector_store %arg22[%c0_33, %c0_34], %49 {strides = array<i32>} : memref<16x64xbf16, #tpu.memory_space<vmem>>, vector<16x64xbf16>,
    } else {
    }
    %c0_i32_2 = arith.constant 0 : i32
    %7 = arith.cmpi eq, %arg1, %c0_i32_2 : i32
    %8 = arith.extui %7 : i1 to i32
    %c0_i32_3 = arith.constant 0 : i32
    %9 = arith.cmpi ne, %8, %c0_i32_3 : i32
    scf.if %9 {
      %c0_18 = arith.constant 0 : index
      %34 = arith.index_cast %1 : i32 to index
      %c0_19 = arith.constant 0 : index
      %35 = vector.load %arg3[%c0_18, %34, %c0_19] : memref<1x16x64xf32, #tpu.memory_space<vmem>>, vector<1x8x64xf32>
      %36 = vector.shape_cast %35 : vector<1x8x64xf32> to vector<8x64xf32>
      %37 = arith.truncf %36 : vector<8x64xf32> to vector<8x64xbf16>
      %c0_20 = arith.constant 0 : index
      %c0_21 = arith.constant 0 : index
      %38 = vector.load %arg4[%c0_20, %c0_21] : memref<64x64xbf16, #tpu.memory_space<vmem>>, vector<64x64xbf16>
      %cst_22 = arith.constant dense<0.000000e+00> : vector<8x64xf32>
      %39 = tpu.matmul %37, %38, %cst_22 {dimension_numbers = #tpu.dot_dimension_numbers<[1], [0], [0], [1], [0, 0, 1, 1], [], []>} : vector<8x64xbf16>, vector<64x64xbf16>, vector<8x64xf32> -> vector<8x64xf32>
      %c0_23 = arith.constant 0 : index
      %c0_24 = arith.constant 0 : index
      %40 = vector.load %arg5[%c0_23, %c0_24] : memref<1x64xf32, #tpu.memory_space<vmem>>, vector<1x64xf32>
      %41 = vector.broadcast %40 : vector<1x64xf32> to vector<8x64xf32>
      %42 = arith.addf %39, %41 : vector<8x64xf32>
      %cst_25 = arith.constant 2.500000e-01 : f32
      %43 = vector.broadcast %cst_25 : f32 to vector<8x64xf32>
      %44 = arith.mulf %42, %43 : vector<8x64xf32>
      %45 = vector.extract_strided_slice %44 {offsets = [0, 0], sizes = [8, 16], strides = [1, 1]} : vector<8x64xf32> to vector<8x16xf32>
      %46 = arith.truncf %45 : vector<8x16xf32> to vector<8x16xbf16>
      %c0_26 = arith.constant 0 : index
      %c0_27 = arith.constant 0 : index
      %47 = vector.load %arg21[%c0_26, %c0_27] : memref<16x64xbf16, #tpu.memory_space<vmem>>, vector<16x16xbf16>
      %cst_28 = arith.constant dense<0.000000e+00> : vector<8x16xf32>
      %48 = tpu.matmul %46, %47, %cst_28 {dimension_numbers = #tpu.dot_dimension_numbers<[1], [1], [0], [0], [0, 0, 1, 0], [], []>} : vector<8x16xbf16>, vector<16x16xbf16>, vector<8x16xf32> -> vector<8x16xf32>
      %cst_29 = arith.constant dense<0xFF800000> : vector<8xf32>
      %49 = vector.multi_reduction <maximumf>, %48, %cst_29 [1] : vector<8x16xf32> to vector<8xf32>
      %50 = vector.shape_cast %49 : vector<8xf32> to vector<8x1xf32>
      %51 = vector.broadcast %50 : vector<8x1xf32> to vector<8x16xf32>
      %52 = arith.subf %48, %51 : vector<8x16xf32>
      %53 = math.exp %52 : vector<8x16xf32>
      %cst_30 = arith.constant dense<0.000000e+00> : vector<8xf32>
      %54 = vector.multi_reduction <add>, %53, %cst_30 [1] : vector<8x16xf32> to vector<8xf32>
      %55 = vector.shape_cast %54 : vector<8xf32> to vector<8x1xf32>
      %56 = tpu.reciprocal %55 {approx = true} : vector<8x1xf32> -> vector<8x1xf32>
      %57 = vector.broadcast %56 : vector<8x1xf32> to vector<8x16xf32>
      %58 = arith.mulf %53, %57 : vector<8x16xf32>
      %59 = arith.truncf %58 : vector<8x16xf32> to vector<8x16xbf16>
      %c0_31 = arith.constant 0 : index
      %c0_32 = arith.constant 0 : index
      %60 = vector.load %arg22[%c0_31, %c0_32] : memref<16x64xbf16, #tpu.memory_space<vmem>>, vector<16x16xbf16>
      %cst_33 = arith.constant dense<0.000000e+00> : vector<8x16xf32>
      %61 = tpu.matmul %59, %60, %cst_33 {dimension_numbers = #tpu.dot_dimension_numbers<[1], [0], [0], [1], [0, 0, 1, 1], [], []>} : vector<8x16xbf16>, vector<16x16xbf16>, vector<8x16xf32> -> vector<8x16xf32>
      %62 = arith.truncf %61 : vector<8x16xf32> to vector<8x16xbf16>
      %c0_34 = arith.constant 0 : index
      %c0_35 = arith.constant 0 : index
      %63 = vector.load %arg26[%c0_34, %c0_35] : memref<8x64xbf16, #tpu.memory_space<vmem>>, vector<8x16xbf16>
      tpu.vector_store %arg26[%c0_34, %c0_35], %62 {strides = array<i32>} : memref<8x64xbf16, #tpu.memory_space<vmem>>, vector<8x16xbf16>,
      %64 = vector.extract_strided_slice %44 {offsets = [0, 16], sizes = [8, 16], strides = [1, 1]} : vector<8x64xf32> to vector<8x16xf32>
      %65 = arith.truncf %64 : vector<8x16xf32> to vector<8x16xbf16>
      %c0_36 = arith.constant 0 : index
      %c16 = arith.constant 16 : index
      %66 = vector.load %arg21[%c0_36, %c16] : memref<16x64xbf16, #tpu.memory_space<vmem>>, vector<16x16xbf16>
      %cst_37 = arith.constant dense<0.000000e+00> : vector<8x16xf32>
      %67 = tpu.matmul %65, %66, %cst_37 {dimension_numbers = #tpu.dot_dimension_numbers<[1], [1], [0], [0], [0, 0, 1, 0], [], []>} : vector<8x16xbf16>, vector<16x16xbf16>, vector<8x16xf32> -> vector<8x16xf32>
      %cst_38 = arith.constant dense<0xFF800000> : vector<8xf32>
      %68 = vector.multi_reduction <maximumf>, %67, %cst_38 [1] : vector<8x16xf32> to vector<8xf32>
      %69 = vector.shape_cast %68 : vector<8xf32> to vector<8x1xf32>
      %70 = vector.broadcast %69 : vector<8x1xf32> to vector<8x16xf32>
      %71 = arith.subf %67, %70 : vector<8x16xf32>
      %72 = math.exp %71 : vector<8x16xf32>
      %cst_39 = arith.constant dense<0.000000e+00> : vector<8xf32>
      %73 = vector.multi_reduction <add>, %72, %cst_39 [1] : vector<8x16xf32> to vector<8xf32>
      %74 = vector.shape_cast %73 : vector<8xf32> to vector<8x1xf32>
      %75 = tpu.reciprocal %74 {approx = true} : vector<8x1xf32> -> vector<8x1xf32>
      %76 = vector.broadcast %75 : vector<8x1xf32> to vector<8x16xf32>
      %77 = arith.mulf %72, %76 : vector<8x16xf32>
      %78 = arith.truncf %77 : vector<8x16xf32> to vector<8x16xbf16>
      %c0_40 = arith.constant 0 : index
      %c16_41 = arith.constant 16 : index
      %79 = vector.load %arg22[%c0_40, %c16_41] : memref<16x64xbf16, #tpu.memory_space<vmem>>, vector<16x16xbf16>
      %cst_42 = arith.constant dense<0.000000e+00> : vector<8x16xf32>
      %80 = tpu.matmul %78, %79, %cst_42 {dimension_numbers = #tpu.dot_dimension_numbers<[1], [0], [0], [1], [0, 0, 1, 1], [], []>} : vector<8x16xbf16>, vector<16x16xbf16>, vector<8x16xf32> -> vector<8x16xf32>
      %81 = arith.truncf %80 : vector<8x16xf32> to vector<8x16xbf16>
      %c0_43 = arith.constant 0 : index
      %c16_44 = arith.constant 16 : index
      %82 = vector.load %arg26[%c0_43, %c16_44] : memref<8x64xbf16, #tpu.memory_space<vmem>>, vector<8x16xbf16>
      tpu.vector_store %arg26[%c0_43, %c16_44], %81 {strides = array<i32>} : memref<8x64xbf16, #tpu.memory_space<vmem>>, vector<8x16xbf16>,
      %83 = vector.extract_strided_slice %44 {offsets = [0, 32], sizes = [8, 16], strides = [1, 1]} : vector<8x64xf32> to vector<8x16xf32>
      %84 = arith.truncf %83 : vector<8x16xf32> to vector<8x16xbf16>
      %c0_45 = arith.constant 0 : index
      %c32 = arith.constant 32 : index
      %85 = vector.load %arg21[%c0_45, %c32] : memref<16x64xbf16, #tpu.memory_space<vmem>>, vector<16x16xbf16>
      %cst_46 = arith.constant dense<0.000000e+00> : vector<8x16xf32>
      %86 = tpu.matmul %84, %85, %cst_46 {dimension_numbers = #tpu.dot_dimension_numbers<[1], [1], [0], [0], [0, 0, 1, 0], [], []>} : vector<8x16xbf16>, vector<16x16xbf16>, vector<8x16xf32> -> vector<8x16xf32>
      %cst_47 = arith.constant dense<0xFF800000> : vector<8xf32>
      %87 = vector.multi_reduction <maximumf>, %86, %cst_47 [1] : vector<8x16xf32> to vector<8xf32>
      %88 = vector.shape_cast %87 : vector<8xf32> to vector<8x1xf32>
      %89 = vector.broadcast %88 : vector<8x1xf32> to vector<8x16xf32>
      %90 = arith.subf %86, %89 : vector<8x16xf32>
      %91 = math.exp %90 : vector<8x16xf32>
      %cst_48 = arith.constant dense<0.000000e+00> : vector<8xf32>
      %92 = vector.multi_reduction <add>, %91, %cst_48 [1] : vector<8x16xf32> to vector<8xf32>
      %93 = vector.shape_cast %92 : vector<8xf32> to vector<8x1xf32>
      %94 = tpu.reciprocal %93 {approx = true} : vector<8x1xf32> -> vector<8x1xf32>
      %95 = vector.broadcast %94 : vector<8x1xf32> to vector<8x16xf32>
      %96 = arith.mulf %91, %95 : vector<8x16xf32>
      %97 = arith.truncf %96 : vector<8x16xf32> to vector<8x16xbf16>
      %c0_49 = arith.constant 0 : index
      %c32_50 = arith.constant 32 : index
      %98 = vector.load %arg22[%c0_49, %c32_50] : memref<16x64xbf16, #tpu.memory_space<vmem>>, vector<16x16xbf16>
      %cst_51 = arith.constant dense<0.000000e+00> : vector<8x16xf32>
      %99 = tpu.matmul %97, %98, %cst_51 {dimension_numbers = #tpu.dot_dimension_numbers<[1], [0], [0], [1], [0, 0, 1, 1], [], []>} : vector<8x16xbf16>, vector<16x16xbf16>, vector<8x16xf32> -> vector<8x16xf32>
      %100 = arith.truncf %99 : vector<8x16xf32> to vector<8x16xbf16>
      %c0_52 = arith.constant 0 : index
      %c32_53 = arith.constant 32 : index
      %101 = vector.load %arg26[%c0_52, %c32_53] : memref<8x64xbf16, #tpu.memory_space<vmem>>, vector<8x16xbf16>
      tpu.vector_store %arg26[%c0_52, %c32_53], %100 {strides = array<i32>} : memref<8x64xbf16, #tpu.memory_space<vmem>>, vector<8x16xbf16>,
      %102 = vector.extract_strided_slice %44 {offsets = [0, 48], sizes = [8, 16], strides = [1, 1]} : vector<8x64xf32> to vector<8x16xf32>
      %103 = arith.truncf %102 : vector<8x16xf32> to vector<8x16xbf16>
      %c0_54 = arith.constant 0 : index
      %c48 = arith.constant 48 : index
      %104 = vector.load %arg21[%c0_54, %c48] : memref<16x64xbf16, #tpu.memory_space<vmem>>, vector<16x16xbf16>
      %cst_55 = arith.constant dense<0.000000e+00> : vector<8x16xf32>
      %105 = tpu.matmul %103, %104, %cst_55 {dimension_numbers = #tpu.dot_dimension_numbers<[1], [1], [0], [0], [0, 0, 1, 0], [], []>} : vector<8x16xbf16>, vector<16x16xbf16>, vector<8x16xf32> -> vector<8x16xf32>
      %cst_56 = arith.constant dense<0xFF800000> : vector<8xf32>
      %106 = vector.multi_reduction <maximumf>, %105, %cst_56 [1] : vector<8x16xf32> to vector<8xf32>
      %107 = vector.shape_cast %106 : vector<8xf32> to vector<8x1xf32>
      %108 = vector.broadcast %107 : vector<8x1xf32> to vector<8x16xf32>
      %109 = arith.subf %105, %108 : vector<8x16xf32>
      %110 = math.exp %109 : vector<8x16xf32>
      %cst_57 = arith.constant dense<0.000000e+00> : vector<8xf32>
      %111 = vector.multi_reduction <add>, %110, %cst_57 [1] : vector<8x16xf32> to vector<8xf32>
      %112 = vector.shape_cast %111 : vector<8xf32> to vector<8x1xf32>
      %113 = tpu.reciprocal %112 {approx = true} : vector<8x1xf32> -> vector<8x1xf32>
      %114 = vector.broadcast %113 : vector<8x1xf32> to vector<8x16xf32>
      %115 = arith.mulf %110, %114 : vector<8x16xf32>
      %116 = arith.truncf %115 : vector<8x16xf32> to vector<8x16xbf16>
      %c0_58 = arith.constant 0 : index
      %c48_59 = arith.constant 48 : index
      %117 = vector.load %arg22[%c0_58, %c48_59] : memref<16x64xbf16, #tpu.memory_space<vmem>>, vector<16x16xbf16>
      %cst_60 = arith.constant dense<0.000000e+00> : vector<8x16xf32>
      %118 = tpu.matmul %116, %117, %cst_60 {dimension_numbers = #tpu.dot_dimension_numbers<[1], [0], [0], [1], [0, 0, 1, 1], [], []>} : vector<8x16xbf16>, vector<16x16xbf16>, vector<8x16xf32> -> vector<8x16xf32>
      %119 = arith.truncf %118 : vector<8x16xf32> to vector<8x16xbf16>
      %c0_61 = arith.constant 0 : index
      %c48_62 = arith.constant 48 : index
      %120 = vector.load %arg26[%c0_61, %c48_62] : memref<8x64xbf16, #tpu.memory_space<vmem>>, vector<8x16xbf16>
      tpu.vector_store %arg26[%c0_61, %c48_62], %119 {strides = array<i32>} : memref<8x64xbf16, #tpu.memory_space<vmem>>, vector<8x16xbf16>,
      %c0_63 = arith.constant 0 : index
      %c0_64 = arith.constant 0 : index
      %121 = vector.load %arg26[%c0_63, %c0_64] : memref<8x64xbf16, #tpu.memory_space<vmem>>, vector<8x64xbf16>
      %c0_65 = arith.constant 0 : index
      %c0_66 = arith.constant 0 : index
      %122 = vector.load %arg10[%c0_65, %c0_66] : memref<64x64xbf16, #tpu.memory_space<vmem>>, vector<64x64xbf16>
      %cst_67 = arith.constant dense<0.000000e+00> : vector<8x64xf32>
      %123 = tpu.matmul %121, %122, %cst_67 {dimension_numbers = #tpu.dot_dimension_numbers<[1], [0], [0], [1], [0, 0, 1, 1], [], []>} : vector<8x64xbf16>, vector<64x64xbf16>, vector<8x64xf32> -> vector<8x64xf32>
      %c0_68 = arith.constant 0 : index
      %c0_69 = arith.constant 0 : index
      %124 = vector.load %arg11[%c0_68, %c0_69] : memref<1x64xf32, #tpu.memory_space<vmem>>, vector<1x64xf32>
      %125 = vector.broadcast %124 : vector<1x64xf32> to vector<8x64xf32>
      %126 = arith.addf %123, %125 : vector<8x64xf32>
      %127 = arith.addf %36, %126 : vector<8x64xf32>
      %c0_70 = arith.constant 0 : index
      %c0_71 = arith.constant 0 : index
      %128 = vector.load %arg12[%c0_70, %c0_71] : memref<1x64xf32, #tpu.memory_space<vmem>>, vector<1x64xf32>
      %c0_72 = arith.constant 0 : index
      %c0_73 = arith.constant 0 : index
      %129 = vector.load %arg13[%c0_72, %c0_73] : memref<1x64xf32, #tpu.memory_space<vmem>>, vector<1x64xf32>
      %cst_74 = arith.constant dense<0.000000e+00> : vector<8xf32>
      %130 = vector.multi_reduction <add>, %127, %cst_74 [1] : vector<8x64xf32> to vector<8xf32>
      %131 = vector.shape_cast %130 : vector<8xf32> to vector<8x1xf32>
      %cst_75 = arith.constant 6.400000e+01 : f32
      %132 = vector.broadcast %cst_75 : f32 to vector<8x1xf32>
      %133 = arith.divf %131, %132 : vector<8x1xf32>
      %134 = vector.broadcast %133 : vector<8x1xf32> to vector<8x64xf32>
      %135 = arith.subf %127, %134 : vector<8x64xf32>
      %136 = arith.mulf %135, %135 : vector<8x64xf32>
      %cst_76 = arith.constant dense<0.000000e+00> : vector<8xf32>
      %137 = vector.multi_reduction <add>, %136, %cst_76 [1] : vector<8x64xf32> to vector<8xf32>
      %138 = vector.shape_cast %137 : vector<8xf32> to vector<8x1xf32>
      %cst_77 = arith.constant 6.400000e+01 : f32
      %139 = vector.broadcast %cst_77 : f32 to vector<8x1xf32>
      %140 = arith.divf %138, %139 : vector<8x1xf32>
      %141 = vector.broadcast %133 : vector<8x1xf32> to vector<8x64xf32>
      %142 = arith.subf %127, %141 : vector<8x64xf32>
      %cst_78 = arith.constant 9.99999974E-6 : f32
      %143 = vector.broadcast %cst_78 : f32 to vector<8x1xf32>
      %144 = arith.addf %140, %143 : vector<8x1xf32>
      %145 = math.rsqrt %144 : vector<8x1xf32>
      %146 = vector.broadcast %145 : vector<8x1xf32> to vector<8x64xf32>
      %147 = arith.mulf %142, %146 : vector<8x64xf32>
      %148 = vector.broadcast %128 : vector<1x64xf32> to vector<8x64xf32>
      %149 = arith.mulf %147, %148 : vector<8x64xf32>
      %150 = vector.broadcast %129 : vector<1x64xf32> to vector<8x64xf32>
      %151 = arith.addf %149, %150 : vector<8x64xf32>
      %152 = arith.index_cast %arg2 : i32 to index
      %c0_79 = arith.constant 0 : index
      %c0_80 = arith.constant 0 : index
      %153 = vector.load %arg23[%152, %c0_79, %c0_80] : memref<2x8x64xf32, #tpu.memory_space<vmem>>, vector<1x8x64xf32>
      %154 = vector.shape_cast %153 : vector<1x8x64xf32> to vector<8x64xf32>
      %155 = vector.shape_cast %151 : vector<8x64xf32> to vector<1x8x64xf32>
      tpu.vector_store %arg23[%152, %c0_79, %c0_80], %155 {strides = array<i32>} : memref<2x8x64xf32, #tpu.memory_space<vmem>>, vector<1x8x64xf32>,
      %156 = arith.truncf %151 : vector<8x64xf32> to vector<8x64xbf16>
      %157 = arith.index_cast %arg2 : i32 to index
      %c0_81 = arith.constant 0 : index
      %c0_82 = arith.constant 0 : index
      %158 = vector.load %arg24[%157, %c0_81, %c0_82] : memref<2x8x64xbf16, #tpu.memory_space<vmem>>, vector<1x8x64xbf16>
      %159 = vector.shape_cast %158 : vector<1x8x64xbf16> to vector<8x64xbf16>
      %160 = vector.shape_cast %156 : vector<8x64xbf16> to vector<1x8x64xbf16>
      tpu.vector_store %arg24[%157, %c0_81, %c0_82], %160 {strides = array<i32>} : memref<2x8x64xbf16, #tpu.memory_space<vmem>>, vector<1x8x64xbf16>,
      %cst_83 = arith.constant 0.000000e+00 : f32
      %161 = vector.broadcast %cst_83 : f32 to vector<8x64xf32>
      %162 = arith.index_cast %arg2 : i32 to index
      %c0_84 = arith.constant 0 : index
      %c0_85 = arith.constant 0 : index
      %163 = vector.load %arg25[%162, %c0_84, %c0_85] : memref<2x8x64xf32, #tpu.memory_space<vmem>>, vector<1x8x64xf32>
      %164 = vector.shape_cast %163 : vector<1x8x64xf32> to vector<8x64xf32>
      %165 = vector.shape_cast %161 : vector<8x64xf32> to vector<1x8x64xf32>
      tpu.vector_store %arg25[%162, %c0_84, %c0_85], %165 {strides = array<i32>} : memref<2x8x64xf32, #tpu.memory_space<vmem>>, vector<1x8x64xf32>,
    } else {
    }
    %10 = arith.index_cast %arg2 : i32 to index
    %c0 = arith.constant 0 : index
    %c0_4 = arith.constant 0 : index
    %11 = vector.load %arg24[%10, %c0, %c0_4] : memref<2x8x64xbf16, #tpu.memory_space<vmem>>, vector<1x8x64xbf16>
    %12 = vector.shape_cast %11 : vector<1x8x64xbf16> to vector<8x64xbf16>
    %c0_5 = arith.constant 0 : index
    %c0_6 = arith.constant 0 : index
    %13 = vector.load %arg14[%c0_5, %c0_6] : memref<64x128xbf16, #tpu.memory_space<vmem>>, vector<64x128xbf16>
    %cst = arith.constant dense<0.000000e+00> : vector<8x128xf32>
    %14 = tpu.matmul %12, %13, %cst {dimension_numbers = #tpu.dot_dimension_numbers<[1], [0], [0], [1], [0, 0, 1, 1], [], []>} : vector<8x64xbf16>, vector<64x128xbf16>, vector<8x128xf32> -> vector<8x128xf32>
    %c0_7 = arith.constant 0 : index
    %c0_8 = arith.constant 0 : index
    %15 = vector.load %arg15[%c0_7, %c0_8] : memref<1x128xf32, #tpu.memory_space<vmem>>, vector<1x128xf32>
    %16 = vector.broadcast %15 : vector<1x128xf32> to vector<8x128xf32>
    %17 = arith.addf %14, %16 : vector<8x128xf32>
    %cst_9 = arith.constant 0.000000e+00 : f32
    %18 = vector.broadcast %cst_9 : f32 to vector<8x128xf32>
    %19 = arith.maximumf %17, %18 : vector<8x128xf32>
    %20 = arith.truncf %19 : vector<8x128xf32> to vector<8x128xbf16>
    %21 = arith.index_cast %arg2 : i32 to index
    %c0_10 = arith.constant 0 : index
    %c0_11 = arith.constant 0 : index
    %22 = vector.load %arg25[%21, %c0_10, %c0_11] : memref<2x8x64xf32, #tpu.memory_space<vmem>>, vector<1x8x64xf32>
    %23 = vector.shape_cast %22 : vector<1x8x64xf32> to vector<8x64xf32>
    %c0_12 = arith.constant 0 : index
    %c0_13 = arith.constant 0 : index
    %24 = vector.load %arg16[%c0_12, %c0_13] : memref<128x64xbf16, #tpu.memory_space<vmem>>, vector<128x64xbf16>
    %cst_14 = arith.constant dense<0.000000e+00> : vector<8x64xf32>
    %25 = tpu.matmul %20, %24, %cst_14 {dimension_numbers = #tpu.dot_dimension_numbers<[1], [0], [0], [1], [0, 0, 1, 1], [], []>} : vector<8x128xbf16>, vector<128x64xbf16>, vector<8x64xf32> -> vector<8x64xf32>
    %26 = arith.addf %23, %25 : vector<8x64xf32>
    %27 = arith.index_cast %arg2 : i32 to index
    %c0_15 = arith.constant 0 : index
    %c0_16 = arith.constant 0 : index
    %28 = vector.load %arg25[%27, %c0_15, %c0_16] : memref<2x8x64xf32, #tpu.memory_space<vmem>>, vector<1x8x64xf32>
    %29 = vector.shape_cast %28 : vector<1x8x64xf32> to vector<8x64xf32>
    %30 = vector.shape_cast %26 : vector<8x64xf32> to vector<1x8x64xf32>
    tpu.vector_store %arg25[%27, %c0_15, %c0_16], %30 {strides = array<i32>} : memref<2x8x64xf32, #tpu.memory_space<vmem>>, vector<1x8x64xf32>,
    %c1_i32 = arith.constant 1 : i32
    %31 = arith.cmpi eq, %arg1, %c1_i32 : i32
    %32 = arith.extui %31 : i1 to i32
    %c0_i32_17 = arith.constant 0 : i32
    %33 = arith.cmpi ne, %32, %c0_i32_17 : i32
    scf.if %33 {
      %34 = arith.index_cast %arg2 : i32 to index
      %c0_18 = arith.constant 0 : index
      %c0_19 = arith.constant 0 : index
      %35 = vector.load %arg23[%34, %c0_18, %c0_19] : memref<2x8x64xf32, #tpu.memory_space<vmem>>, vector<1x8x64xf32>
      %36 = vector.shape_cast %35 : vector<1x8x64xf32> to vector<8x64xf32>
      %37 = arith.index_cast %arg2 : i32 to index
      %c0_20 = arith.constant 0 : index
      %c0_21 = arith.constant 0 : index
      %38 = vector.load %arg25[%37, %c0_20, %c0_21] : memref<2x8x64xf32, #tpu.memory_space<vmem>>, vector<1x8x64xf32>
      %39 = vector.shape_cast %38 : vector<1x8x64xf32> to vector<8x64xf32>
      %40 = arith.addf %36, %39 : vector<8x64xf32>
      %c0_22 = arith.constant 0 : index
      %c0_23 = arith.constant 0 : index
      %41 = vector.load %arg17[%c0_22, %c0_23] : memref<1x64xf32, #tpu.memory_space<vmem>>, vector<1x64xf32>
      %42 = vector.broadcast %41 : vector<1x64xf32> to vector<8x64xf32>
      %43 = arith.addf %40, %42 : vector<8x64xf32>
      %c0_24 = arith.constant 0 : index
      %c0_25 = arith.constant 0 : index
      %44 = vector.load %arg18[%c0_24, %c0_25] : memref<1x64xf32, #tpu.memory_space<vmem>>, vector<1x64xf32>
      %c0_26 = arith.constant 0 : index
      %c0_27 = arith.constant 0 : index
      %45 = vector.load %arg19[%c0_26, %c0_27] : memref<1x64xf32, #tpu.memory_space<vmem>>, vector<1x64xf32>
      %cst_28 = arith.constant dense<0.000000e+00> : vector<8xf32>
      %46 = vector.multi_reduction <add>, %43, %cst_28 [1] : vector<8x64xf32> to vector<8xf32>
      %47 = vector.shape_cast %46 : vector<8xf32> to vector<8x1xf32>
      %cst_29 = arith.constant 6.400000e+01 : f32
      %48 = vector.broadcast %cst_29 : f32 to vector<8x1xf32>
      %49 = arith.divf %47, %48 : vector<8x1xf32>
      %50 = vector.broadcast %49 : vector<8x1xf32> to vector<8x64xf32>
      %51 = arith.subf %43, %50 : vector<8x64xf32>
      %52 = arith.mulf %51, %51 : vector<8x64xf32>
      %cst_30 = arith.constant dense<0.000000e+00> : vector<8xf32>
      %53 = vector.multi_reduction <add>, %52, %cst_30 [1] : vector<8x64xf32> to vector<8xf32>
      %54 = vector.shape_cast %53 : vector<8xf32> to vector<8x1xf32>
      %cst_31 = arith.constant 6.400000e+01 : f32
      %55 = vector.broadcast %cst_31 : f32 to vector<8x1xf32>
      %56 = arith.divf %54, %55 : vector<8x1xf32>
      %57 = vector.broadcast %49 : vector<8x1xf32> to vector<8x64xf32>
      %58 = arith.subf %43, %57 : vector<8x64xf32>
      %cst_32 = arith.constant 9.99999974E-6 : f32
      %59 = vector.broadcast %cst_32 : f32 to vector<8x1xf32>
      %60 = arith.addf %56, %59 : vector<8x1xf32>
      %61 = math.rsqrt %60 : vector<8x1xf32>
      %62 = vector.broadcast %61 : vector<8x1xf32> to vector<8x64xf32>
      %63 = arith.mulf %58, %62 : vector<8x64xf32>
      %64 = vector.broadcast %44 : vector<1x64xf32> to vector<8x64xf32>
      %65 = arith.mulf %63, %64 : vector<8x64xf32>
      %66 = vector.broadcast %45 : vector<1x64xf32> to vector<8x64xf32>
      %67 = arith.addf %65, %66 : vector<8x64xf32>
      %c0_33 = arith.constant 0 : index
      %c0_34 = arith.constant 0 : index
      %c0_35 = arith.constant 0 : index
      %68 = vector.load %arg20[%c0_33, %c0_34, %c0_35] : memref<1x8x64xf32, #tpu.memory_space<vmem>>, vector<1x8x64xf32>
      %69 = vector.shape_cast %68 : vector<1x8x64xf32> to vector<8x64xf32>
      %70 = vector.shape_cast %67 : vector<8x64xf32> to vector<1x8x64xf32>
      tpu.vector_store %arg20[%c0_33, %c0_34, %c0_35], %70 {strides = array<i32>} : memref<1x8x64xf32, #tpu.memory_space<vmem>>, vector<1x8x64xf32>,
    } else {
    }
    return
  }
  func.func @transform_0(%arg0: i32, %arg1: i32, %arg2: i32) -> (i32, i32, i32) {
    %c0_i32 = arith.constant 0 : i32
    %c0_i32_0 = arith.constant 0 : i32
    %c0_i32_1 = arith.constant 0 : i32
    return %arg0, %c0_i32, %c0_i32_0 : i32, i32, i32
  }
  func.func @transform_1(%arg0: i32, %arg1: i32, %arg2: i32) -> (i32, i32) {
    %c0_i32 = arith.constant 0 : i32
    %c0_i32_0 = arith.constant 0 : i32
    %c0_i32_1 = arith.constant 0 : i32
    return %c0_i32, %c0_i32_0 : i32, i32
  }
  func.func @transform_2(%arg0: i32, %arg1: i32, %arg2: i32) -> (i32, i32) {
    %c0_i32 = arith.constant 0 : i32
    %c0_i32_0 = arith.constant 0 : i32
    %c0_i32_1 = arith.constant 0 : i32
    return %c0_i32, %c0_i32_0 : i32, i32
  }
  func.func @transform_3(%arg0: i32, %arg1: i32, %arg2: i32) -> (i32, i32) {
    %c0_i32 = arith.constant 0 : i32
    %c0_i32_0 = arith.constant 0 : i32
    %c0_i32_1 = arith.constant 0 : i32
    return %c0_i32, %c0_i32_0 : i32, i32
  }
  func.func @transform_4(%arg0: i32, %arg1: i32, %arg2: i32) -> (i32, i32) {
    %c0_i32 = arith.constant 0 : i32
    %c0_i32_0 = arith.constant 0 : i32
    %c0_i32_1 = arith.constant 0 : i32
    return %c0_i32, %c0_i32_0 : i32, i32
  }
  func.func @transform_5(%arg0: i32, %arg1: i32, %arg2: i32) -> (i32, i32) {
    %c0_i32 = arith.constant 0 : i32
    %c0_i32_0 = arith.constant 0 : i32
    %c0_i32_1 = arith.constant 0 : i32
    return %c0_i32, %c0_i32_0 : i32, i32
  }
  func.func @transform_6(%arg0: i32, %arg1: i32, %arg2: i32) -> (i32, i32) {
    %c0_i32 = arith.constant 0 : i32
    %c0_i32_0 = arith.constant 0 : i32
    %c0_i32_1 = arith.constant 0 : i32
    return %c0_i32, %c0_i32_0 : i32, i32
  }
  func.func @transform_7(%arg0: i32, %arg1: i32, %arg2: i32) -> (i32, i32) {
    %c0_i32 = arith.constant 0 : i32
    %c0_i32_0 = arith.constant 0 : i32
    %c0_i32_1 = arith.constant 0 : i32
    return %c0_i32, %c0_i32_0 : i32, i32
  }
  func.func @transform_8(%arg0: i32, %arg1: i32, %arg2: i32) -> (i32, i32) {
    %c0_i32 = arith.constant 0 : i32
    %c0_i32_0 = arith.constant 0 : i32
    %c0_i32_1 = arith.constant 0 : i32
    return %c0_i32, %c0_i32_0 : i32, i32
  }
  func.func @transform_9(%arg0: i32, %arg1: i32, %arg2: i32) -> (i32, i32) {
    %c0_i32 = arith.constant 0 : i32
    %c0_i32_0 = arith.constant 0 : i32
    %c0_i32_1 = arith.constant 0 : i32
    return %c0_i32, %c0_i32_0 : i32, i32
  }
  func.func @transform_10(%arg0: i32, %arg1: i32, %arg2: i32) -> (i32, i32) {
    %c0_i32 = arith.constant 0 : i32
    %c0_i32_0 = arith.constant 0 : i32
    %c0_i32_1 = arith.constant 0 : i32
    return %c0_i32, %c0_i32_0 : i32, i32
  }
  func.func @transform_11(%arg0: i32, %arg1: i32, %arg2: i32) -> (i32, i32) {
    %c0_i32 = arith.constant 0 : i32
    %c0_i32_0 = arith.constant 0 : i32
    return %c0_i32, %arg1 : i32, i32
  }
  func.func @transform_12(%arg0: i32, %arg1: i32, %arg2: i32) -> (i32, i32) {
    %c0_i32 = arith.constant 0 : i32
    %c0_i32_0 = arith.constant 0 : i32
    return %c0_i32, %arg1 : i32, i32
  }
  func.func @transform_13(%arg0: i32, %arg1: i32, %arg2: i32) -> (i32, i32) {
    %c0_i32 = arith.constant 0 : i32
    %c0_i32_0 = arith.constant 0 : i32
    return %arg1, %c0_i32 : i32, i32
  }
  func.func @transform_14(%arg0: i32, %arg1: i32, %arg2: i32) -> (i32, i32) {
    %c0_i32 = arith.constant 0 : i32
    %c0_i32_0 = arith.constant 0 : i32
    %c0_i32_1 = arith.constant 0 : i32
    return %c0_i32, %c0_i32_0 : i32, i32
  }
  func.func @transform_15(%arg0: i32, %arg1: i32, %arg2: i32) -> (i32, i32) {
    %c0_i32 = arith.constant 0 : i32
    %c0_i32_0 = arith.constant 0 : i32
    %c0_i32_1 = arith.constant 0 : i32
    return %c0_i32, %c0_i32_0 : i32, i32
  }
  func.func @transform_16(%arg0: i32, %arg1: i32, %arg2: i32) -> (i32, i32) {
    %c0_i32 = arith.constant 0 : i32
    %c0_i32_0 = arith.constant 0 : i32
    %c0_i32_1 = arith.constant 0 : i32
    return %c0_i32, %c0_i32_0 : i32, i32
  }
  func.func @transform_17(%arg0: i32, %arg1: i32, %arg2: i32) -> (i32, i32, i32) {
    %c0_i32 = arith.constant 0 : i32
    %c0_i32_0 = arith.constant 0 : i32
    return %arg0, %arg2, %c0_i32 : i32, i32, i32
  }
}

</mosaic_0001>

<llo_original>
// kernel: tpu_custom_call.1
$region0: #{tpu_custom_call.1}
  #allocation0 [shape = 'u32[]', space=smem, size = 0x4, offset = 0x4, fixed_abs, tag = 'smem constant byte address 0x4 - core index']
  #allocation1 [shape = 'u32[72,128]{1,0:T(1,128)}', space=vmem, size = 0x9000, scoped, tag = 'internal scratch']
  #allocation2 [shape = 'bf16[16,64]{1,0:T(8,128)(2,1)}', space=vmem, size = 0x1000, scoped, tag = 'scratch operand']
  #allocation3 [shape = 'bf16[16,64]{1,0:T(8,128)(2,1)}', space=vmem, size = 0x1000, scoped, tag = 'scratch operand']
  #allocation4 [shape = 'f32[2,8,64]{2,1,0:T(8,128)}', space=vmem, size = 0x2000, scoped, tag = 'scratch operand']
  #allocation5 [shape = 'bf16[2,8,64]{2,1,0:T(8,128)(2,1)}', space=vmem, size = 0x1000, scoped, tag = 'scratch operand']
  #allocation6 [shape = 'f32[2,8,64]{2,1,0:T(8,128)}', space=vmem, size = 0x2000, scoped, tag = 'scratch operand']
  #allocation7 [shape = 'bf16[8,64]{1,0:T(8,128)(2,1)}', space=vmem, size = 0x800, scoped, tag = 'scratch operand']
  %s0 = inlined_call_operand.vmem [shape: f32[2,16,64], index: 0, kind: input, shape index: {}]
  %s1 = inlined_call_operand.vmem [shape: bf16[64,64], index: 1, kind: input, shape index: {}]
  %s2 = inlined_call_operand.hbm [shape: f32[1,64], index: 2, kind: input, shape index: {}]
  %s3 = inlined_call_operand.vmem [shape: bf16[64,64], index: 3, kind: input, shape index: {}]
  %s4 = inlined_call_operand.hbm [shape: f32[1,64], index: 4, kind: input, shape index: {}]
  %s5 = inlined_call_operand.vmem [shape: bf16[64,64], index: 5, kind: input, shape index: {}]
  %s6 = inlined_call_operand.vmem [shape: f32[1,64], index: 6, kind: input, shape index: {}]
  %s7 = inlined_call_operand.hbm [shape: bf16[64,64], index: 7, kind: input, shape index: {}]
  %s8 = inlined_call_operand.vmem [shape: f32[1,64], index: 8, kind: input, shape index: {}]
  %s9 = inlined_call_operand.vmem [shape: f32[1,64], index: 9, kind: input, shape index: {}]
  %s10 = inlined_call_operand.vmem [shape: f32[1,64], index: 10, kind: input, shape index: {}]
  %s11 = inlined_call_operand.vmem [shape: bf16[64,256], index: 11, kind: input, shape index: {}]
  %s12 = inlined_call_operand.vmem [shape: f32[1,256], index: 12, kind: input, shape index: {}]
  %s13 = inlined_call_operand.vmem [shape: bf16[256,64], index: 13, kind: input, shape index: {}]
  %s14 = inlined_call_operand.vmem [shape: f32[1,64], index: 14, kind: input, shape index: {}]
  %s15 = inlined_call_operand.vmem [shape: f32[1,64], index: 15, kind: input, shape index: {}]
  %s16 = inlined_call_operand.vmem [shape: f32[1,64], index: 16, kind: input, shape index: {}]
  %s17 = inlined_call_operand.hbm [shape: f32[2,16,64], index: 17, kind: output, shape index: {}]
  %s18 = sld [smem:[#allocation0]]
  $region166: #{tpu_custom_call.1} parent=0
    _
  %s20 = ssub.s32 1, %s18
  %s21 = scalar_select 0, %s20, %s18
  $region1: #{tpu_custom_call.1} parent=0
    #allocation8 [shape = 'u8[512]{0}', space=vmem, size = 0x400, scoped, tag = 'input window, operand 2, single buffered']
    #allocation9 [shape = 's32[2]{0}', space=sflag, size = 0x8, scoped, tag = 'scoped memory for tpu_custom_call.1']
    #allocation10 [shape = 's32[2]{0}', space=sflag, size = 0x8, scoped, tag = 'scoped memory for tpu_custom_call.1']
    #allocation11 [shape = 'u8[512]{0}', space=vmem, size = 0x400, scoped, tag = 'input window, operand 4, single buffered']
    #allocation12 [shape = 's32[1]{0}', space=sflag, size = 0x4, scoped, tag = 'scoped memory for tpu_custom_call.1']
    #allocation13 [shape = 'u8[16384]{0}', space=vmem, size = 0x4000, scoped, tag = 'input window, operand 7, single buffered']
    #allocation14 [shape = 'u8[32768]{0}', space=vmem, size = 0x8000, scoped, tag = 'input window, operand 11']
    #allocation15 [shape = 'u8[8192]{0}', space=vmem, size = 0x2000, scoped, tag = 'output window, operand 0']
    %22 = vsyncpa [#allocation9], 0
    %23 = vsyncpa [#allocation12], 0
    %24 = vsyncpa [#allocation10], 0
    %s25 = scalar_lea.sflag [#allocation10], 1
    %26 = vsyncpa %s25, 0
    loop: start=0, step=1, limit=10
    $region2: #{tpu_custom_call.1} parent=1 // loop_pre_header
      _
    $region3: #{tpu_custom_call.1} parent=1 // loop_header
      %s28 = sphi 0, %s32
      %p29 = scmp.ge.s32.totalorder %s28, 10
      %s35 = sphi 0, %s54
      %s36 = sphi 0, %s50
      %s37 = sphi 0, %s46
      %s38 = sphi 0, %s35
      %s39 = sphi 0, %s36
      %s40 = sphi 0, %s37
      %s41 = sphi 0, %s38
      %s42 = sphi 0, %s39
      %s43 = sphi 0, %s40
      %s57 = sphi 0, %s59
      %s60 = sphi 0, %s57
      %s61 = sphi 0, %s60
      %s77 = sphi 0, %s61
      %s81 = sphi 0, %s81
      %s83 = sphi 0, %s81
      %s84 = sphi 0, %s83
      %s98 = sphi 0, %s84
      %s102 = sphi 0, %s102
      %s104 = sphi 0, %s102
      %s105 = sphi 0, %s104
      %s119 = sphi 0, %s105
      %s123 = sphi 0, %s123
      %s125 = sphi 0, %s123
      %s126 = sphi 0, %s125
      %s140 = sphi 0, %s126
      %s144 = sphi 0, %s144
      %s146 = sphi 0, %s144
      %s147 = sphi 0, %s146
      %s161 = sphi 0, %s147
      %s165 = sphi 0, %s165
      %s167 = sphi 0, %s165
      %s168 = sphi 0, %s167
      %s182 = sphi 0, %s168
      %s186 = sphi 0, %s186
      %s188 = sphi 0, %s186
      %s189 = sphi 0, %s188
      %s203 = sphi 0, %s189
      %s207 = sphi 0, %s207
      %s209 = sphi 0, %s207
      %s210 = sphi 0, %s209
      %s224 = sphi 0, %s210
      %s228 = sphi 0, %s228
      %s230 = sphi 0, %s228
      %s231 = sphi 0, %s230
      %s245 = sphi 0, %s231
      %s249 = sphi 0, %s249
      %s251 = sphi 0, %s249
      %s252 = sphi 0, %s251
      %s266 = sphi 0, %s252
      %s270 = sphi 0, %s270
      %s272 = sphi 0, %s270
      %s273 = sphi 0, %s272
      %s287 = sphi 0, %s273
      %s293 = sphi 0, %s295
      %s296 = sphi 0, %s293
      %s297 = sphi 0, %s296
      %s313 = sphi 0, %s297
      %s319 = sphi 0, %s321
      %s322 = sphi 0, %s319
      %s323 = sphi 0, %s322
      %s339 = sphi 0, %s323
      %s345 = sphi 0, %s347
      %s348 = sphi 0, %s345
      %s349 = sphi 0, %s348
      %s365 = sphi 0, %s349
      %s369 = sphi 0, %s369
      %s371 = sphi 0, %s369
      %s372 = sphi 0, %s371
      %s386 = sphi 0, %s372
      %s390 = sphi 0, %s390
      %s392 = sphi 0, %s390
      %s393 = sphi 0, %s392
      %s407 = sphi 0, %s393
      %s411 = sphi 0, %s411
      %s413 = sphi 0, %s411
      %s414 = sphi 0, %s413
      %s428 = sphi 0, %s414
      %s436 = sphi 0, %s438
      %s439 = sphi 0, %s436
      %s440 = sphi 0, %s439
      %s456 = sphi 0, %s440
    $region4: #{tpu_custom_call.1} parent=1 // loop_header_branch
      %31 = sbr.rel (%p29) target = $region8
    $region5: #{tpu_custom_call.1} parent=1 // loop_body
      %s33 = ssub.s32 %s28, 1
      %s34 = ssub.s32 %s28, 2
      %s44 = sadd.s32 1, %s37
      %p45 = scmp.ge.s32.totalorder %s44, 2
      %s46 = scalar_select %p45, 0, %s44
      %s47 = sadd.s32 1, %s36
      %s48 = scalar_select %p45, %s47, %s36
      %p49 = scmp.ge.s32.totalorder %s48, 2
      %s50 = scalar_select %p49, 0, %s48
      %s51 = sadd.s32 1, %s35
      %s52 = scalar_select %p49, %s51, %s35
      %p53 = scmp.ge.s32.totalorder %s52, 2
      %s54 = scalar_select %p53, 0, %s52
      %s55 = ssub.s32 %s35, %s54
      %p56 = scmp.eq.s32.totalorder %s55, 0
      %s58 = sadd.s32 %s57, 1
      %s59 = scalar_select %p56, %s57, %s58
      %p62 = pneg %p56
      %p63 = scmp.eq.s32.totalorder %s28, 7
      %p64 = por %p62, %p63
      %p65 = scmp.ne.s32.totalorder %s57, %s60
      %p66 = scmp.eq.s32.totalorder %s28, 0
      %p67 = por %p65, %p66
      %p68 = scmp.ne.s32.totalorder %s57, %s60
      %p69 = scmp.eq.s32.totalorder %s33, 7
      %p70 = por %p68, %p69
      %p71 = scmp.ne.s32.totalorder %s60, %s61
      %p72 = scmp.eq.s32.totalorder %s33, 0
      %p73 = por %p71, %p72
      %p74 = scmp.ne.s32.totalorder %s60, %s61
      %p75 = scmp.eq.s32.totalorder %s34, 7
      %p76 = por %p74, %p75
      %p78 = scmp.ne.s32.totalorder %s61, %s77
      %p79 = scmp.eq.s32.totalorder %s34, 0
      %p80 = por %p78, %p79
      %s82 = sadd.s32 %s81, 1
      %p85 = scmp.eq.s32.totalorder %s28, 7
      %p86 = scmp.ne.s32.totalorder %s81, %s83
      %p87 = scmp.eq.s32.totalorder %s28, 0
      %p88 = por %p86, %p87
      %p89 = scmp.ne.s32.totalorder %s81, %s83
      %p90 = scmp.eq.s32.totalorder %s33, 7
      %p91 = por %p89, %p90
      %p92 = scmp.ne.s32.totalorder %s83, %s84
      %p93 = scmp.eq.s32.totalorder %s33, 0
      %p94 = por %p92, %p93
      %p95 = scmp.ne.s32.totalorder %s83, %s84
      %p96 = scmp.eq.s32.totalorder %s34, 7
      %p97 = por %p95, %p96
      %p99 = scmp.ne.s32.totalorder %s84, %s98
      %p100 = scmp.eq.s32.totalorder %s34, 0
      %p101 = por %p99, %p100
      %s103 = sadd.s32 %s102, 1
      %p106 = scmp.eq.s32.totalorder %s28, 7
      %p107 = scmp.ne.s32.totalorder %s102, %s104
      %p108 = scmp.eq.s32.totalorder %s28, 0
      %p109 = por %p107, %p108
      %p110 = scmp.ne.s32.totalorder %s102, %s104
      %p111 = scmp.eq.s32.totalorder %s33, 7
      %p112 = por %p110, %p111
      %p113 = scmp.ne.s32.totalorder %s104, %s105
      %p114 = scmp.eq.s32.totalorder %s33, 0
      %p115 = por %p113, %p114
      %p116 = scmp.ne.s32.totalorder %s104, %s105
      %p117 = scmp.eq.s32.totalorder %s34, 7
      %p118 = por %p116, %p117
      %p120 = scmp.ne.s32.totalorder %s105, %s119
      %p121 = scmp.eq.s32.totalorder %s34, 0
      %p122 = por %p120, %p121
      %s124 = sadd.s32 %s123, 1
      %p127 = scmp.eq.s32.totalorder %s28, 7
      %p128 = scmp.ne.s32.totalorder %s123, %s125
      %p129 = scmp.eq.s32.totalorder %s28, 0
      %p130 = por %p128, %p129
      %p131 = scmp.ne.s32.totalorder %s123, %s125
      %p132 = scmp.eq.s32.totalorder %s33, 7
      %p133 = por %p131, %p132
      %p134 = scmp.ne.s32.totalorder %s125, %s126
      %p135 = scmp.eq.s32.totalorder %s33, 0
      %p136 = por %p134, %p135
      %p137 = scmp.ne.s32.totalorder %s125, %s126
      %p138 = scmp.eq.s32.totalorder %s34, 7
      %p139 = por %p137, %p138
      %p141 = scmp.ne.s32.totalorder %s126, %s140
      %p142 = scmp.eq.s32.totalorder %s34, 0
      %p143 = por %p141, %p142
      %s145 = sadd.s32 %s144, 1
      %p148 = scmp.eq.s32.totalorder %s28, 7
      %p149 = scmp.ne.s32.totalorder %s144, %s146
      %p150 = scmp.eq.s32.totalorder %s28, 0
      %p151 = por %p149, %p150
      %p152 = scmp.ne.s32.totalorder %s144, %s146
      %p153 = scmp.eq.s32.totalorder %s33, 7
      %p154 = por %p152, %p153
      %p155 = scmp.ne.s32.totalorder %s146, %s147
      %p156 = scmp.eq.s32.totalorder %s33, 0
      %p157 = por %p155, %p156
      %p158 = scmp.ne.s32.totalorder %s146, %s147
      %p159 = scmp.eq.s32.totalorder %s34, 7
      %p160 = por %p158, %p159
      %p162 = scmp.ne.s32.totalorder %s147, %s161
      %p163 = scmp.eq.s32.totalorder %s34, 0
      %p164 = por %p162, %p163
      %s166 = sadd.s32 %s165, 1
      %p169 = scmp.eq.s32.totalorder %s28, 7
      %p170 = scmp.ne.s32.totalorder %s165, %s167
      %p171 = scmp.eq.s32.totalorder %s28, 0
      %p172 = por %p170, %p171
      %p173 = scmp.ne.s32.totalorder %s165, %s167
      %p174 = scmp.eq.s32.totalorder %s33, 7
      %p175 = por %p173, %p174
      %p176 = scmp.ne.s32.totalorder %s167, %s168
      %p177 = scmp.eq.s32.totalorder %s33, 0
      %p178 = por %p176, %p177
      %p179 = scmp.ne.s32.totalorder %s167, %s168
      %p180 = scmp.eq.s32.totalorder %s34, 7
      %p181 = por %p179, %p180
      %p183 = scmp.ne.s32.totalorder %s168, %s182
      %p184 = scmp.eq.s32.totalorder %s34, 0
      %p185 = por %p183, %p184
      %s187 = sadd.s32 %s186, 1
      %p190 = scmp.eq.s32.totalorder %s28, 7
      %p191 = scmp.ne.s32.totalorder %s186, %s188
      %p192 = scmp.eq.s32.totalorder %s28, 0
      %p193 = por %p191, %p192
      %p194 = scmp.ne.s32.totalorder %s186, %s188
      %p195 = scmp.eq.s32.totalorder %s33, 7
      %p196 = por %p194, %p195
      %p197 = scmp.ne.s32.totalorder %s188, %s189
      %p198 = scmp.eq.s32.totalorder %s33, 0
      %p199 = por %p197, %p198
      %p200 = scmp.ne.s32.totalorder %s188, %s189
      %p201 = scmp.eq.s32.totalorder %s34, 7
      %p202 = por %p200, %p201
      %p204 = scmp.ne.s32.totalorder %s189, %s203
      %p205 = scmp.eq.s32.totalorder %s34, 0
      %p206 = por %p204, %p205
      %s208 = sadd.s32 %s207, 1
      %p211 = scmp.eq.s32.totalorder %s28, 7
      %p212 = scmp.ne.s32.totalorder %s207, %s209
      %p213 = scmp.eq.s32.totalorder %s28, 0
      %p214 = por %p212, %p213
      %p215 = scmp.ne.s32.totalorder %s207, %s209
      %p216 = scmp.eq.s32.totalorder %s33, 7
      %p217 = por %p215, %p216
      %p218 = scmp.ne.s32.totalorder %s209, %s210
      %p219 = scmp.eq.s32.totalorder %s33, 0
      %p220 = por %p218, %p219
      %p221 = scmp.ne.s32.totalorder %s209, %s210
      %p222 = scmp.eq.s32.totalorder %s34, 7
      %p223 = por %p221, %p222
      %p225 = scmp.ne.s32.totalorder %s210, %s224
      %p226 = scmp.eq.s32.totalorder %s34, 0
      %p227 = por %p225, %p226
      %s229 = sadd.s32 %s228, 1
      %p232 = scmp.eq.s32.totalorder %s28, 7
      %p233 = scmp.ne.s32.totalorder %s228, %s230
      %p234 = scmp.eq.s32.totalorder %s28, 0
      %p235 = por %p233, %p234
      %p236 = scmp.ne.s32.totalorder %s228, %s230
      %p237 = scmp.eq.s32.totalorder %s33, 7
      %p238 = por %p236, %p237
      %p239 = scmp.ne.s32.totalorder %s230, %s231
      %p240 = scmp.eq.s32.totalorder %s33, 0
      %p241 = por %p239, %p240
      %p242 = scmp.ne.s32.totalorder %s230, %s231
      %p243 = scmp.eq.s32.totalorder %s34, 7
      %p244 = por %p242, %p243
      %p246 = scmp.ne.s32.totalorder %s231, %s245
      %p247 = scmp.eq.s32.totalorder %s34, 0
      %p248 = por %p246, %p247
      %s250 = sadd.s32 %s249, 1
      %p253 = scmp.eq.s32.totalorder %s28, 7
      %p254 = scmp.ne.s32.totalorder %s249, %s251
      %p255 = scmp.eq.s32.totalorder %s28, 0
      %p256 = por %p254, %p255
      %p257 = scmp.ne.s32.totalorder %s249, %s251
      %p258 = scmp.eq.s32.totalorder %s33, 7
      %p259 = por %p257, %p258
      %p260 = scmp.ne.s32.totalorder %s251, %s252
      %p261 = scmp.eq.s32.totalorder %s33, 0
      %p262 = por %p260, %p261
      %p263 = scmp.ne.s32.totalorder %s251, %s252
      %p264 = scmp.eq.s32.totalorder %s34, 7
      %p265 = por %p263, %p264
      %p267 = scmp.ne.s32.totalorder %s252, %s266
      %p268 = scmp.eq.s32.totalorder %s34, 0
      %p269 = por %p267, %p268
      %s271 = sadd.s32 %s270, 1
      %p274 = scmp.eq.s32.totalorder %s28, 7
      %p275 = scmp.ne.s32.totalorder %s270, %s272
      %p276 = scmp.eq.s32.totalorder %s28, 0
      %p277 = por %p275, %p276
      %p278 = scmp.ne.s32.totalorder %s270, %s272
      %p279 = scmp.eq.s32.totalorder %s33, 7
      %p280 = por %p278, %p279
      %p281 = scmp.ne.s32.totalorder %s272, %s273
      %p282 = scmp.eq.s32.totalorder %s33, 0
      %p283 = por %p281, %p282
      %p284 = scmp.ne.s32.totalorder %s272, %s273
      %p285 = scmp.eq.s32.totalorder %s34, 7
      %p286 = por %p284, %p285
      %p288 = scmp.ne.s32.totalorder %s273, %s287
      %p289 = scmp.eq.s32.totalorder %s34, 0
      %p290 = por %p288, %p289
      %s291 = ssub.s32 %s36, %s50
      %p292 = scmp.eq.s32.totalorder %s291, 0
      %s294 = sadd.s32 %s293, 1
      %s295 = scalar_select %p292, %s293, %s294
      %p298 = pneg %p292
      %p299 = scmp.eq.s32.totalorder %s28, 7
      %p300 = por %p298, %p299
      %p301 = scmp.ne.s32.totalorder %s293, %s296
      %p302 = scmp.eq.s32.totalorder %s28, 0
      %p303 = por %p301, %p302
      %p304 = scmp.ne.s32.totalorder %s293, %s296
      %p305 = scmp.eq.s32.totalorder %s33, 7
      %p306 = por %p304, %p305
      %p307 = scmp.ne.s32.totalorder %s296, %s297
      %p308 = scmp.eq.s32.totalorder %s33, 0
      %p309 = por %p307, %p308
      %p310 = scmp.ne.s32.totalorder %s296, %s297
      %p311 = scmp.eq.s32.totalorder %s34, 7
      %p312 = por %p310, %p311
      %p314 = scmp.ne.s32.totalorder %s297, %s313
      %p315 = scmp.eq.s32.totalorder %s34, 0
      %p316 = por %p314, %p315
      %s317 = ssub.s32 %s36, %s50
      %p318 = scmp.eq.s32.totalorder %s317, 0
      %s320 = sadd.s32 %s319, 1
      %s321 = scalar_select %p318, %s319, %s320
      %p324 = pneg %p318
      %p325 = scmp.eq.s32.totalorder %s28, 7
      %p326 = por %p324, %p325
      %p327 = scmp.ne.s32.totalorder %s319, %s322
      %p328 = scmp.eq.s32.totalorder %s28, 0
      %p329 = por %p327, %p328
      %p330 = scmp.ne.s32.totalorder %s319, %s322
      %p331 = scmp.eq.s32.totalorder %s33, 7
      %p332 = por %p330, %p331
      %p333 = scmp.ne.s32.totalorder %s322, %s323
      %p334 = scmp.eq.s32.totalorder %s33, 0
      %p335 = por %p333, %p334
      %p336 = scmp.ne.s32.totalorder %s322, %s323
      %p337 = scmp.eq.s32.totalorder %s34, 7
      %p338 = por %p336, %p337
      %p340 = scmp.ne.s32.totalorder %s323, %s339
      %p341 = scmp.eq.s32.totalorder %s34, 0
      %p342 = por %p340, %p341
      %s343 = ssub.s32 %s36, %s50
      %p344 = scmp.eq.s32.totalorder %s343, 0
      %s346 = sadd.s32 %s345, 1
      %s347 = scalar_select %p344, %s345, %s346
      %p350 = pneg %p344
      %p351 = scmp.eq.s32.totalorder %s28, 7
      %p352 = por %p350, %p351
      %p353 = scmp.ne.s32.totalorder %s345, %s348
      %p354 = scmp.eq.s32.totalorder %s28, 0
      %p355 = por %p353, %p354
      %p356 = scmp.ne.s32.totalorder %s345, %s348
      %p357 = scmp.eq.s32.totalorder %s33, 7
      %p358 = por %p356, %p357
      %p359 = scmp.ne.s32.totalorder %s348, %s349
      %p360 = scmp.eq.s32.totalorder %s33, 0
      %p361 = por %p359, %p360
      %p362 = scmp.ne.s32.totalorder %s348, %s349
      %p363 = scmp.eq.s32.totalorder %s34, 7
      %p364 = por %p362, %p363
      %p366 = scmp.ne.s32.totalorder %s349, %s365
      %p367 = scmp.eq.s32.totalorder %s34, 0
      %p368 = por %p366, %p367
      %s370 = sadd.s32 %s369, 1
      %p373 = scmp.eq.s32.totalorder %s28, 7
      %p374 = scmp.ne.s32.totalorder %s369, %s371
      %p375 = scmp.eq.s32.totalorder %s28, 0
      %p376 = por %p374, %p375
      %p377 = scmp.ne.s32.totalorder %s369, %s371
      %p378 = scmp.eq.s32.totalorder %s33, 7
      %p379 = por %p377, %p378
      %p380 = scmp.ne.s32.totalorder %s371, %s372
      %p381 = scmp.eq.s32.totalorder %s33, 0
      %p382 = por %p380, %p381
      %p383 = scmp.ne.s32.totalorder %s371, %s372
      %p384 = scmp.eq.s32.totalorder %s34, 7
      %p385 = por %p383, %p384
      %p387 = scmp.ne.s32.totalorder %s372, %s386
      %p388 = scmp.eq.s32.totalorder %s34, 0
      %p389 = por %p387, %p388
      %s391 = sadd.s32 %s390, 1
      %p394 = scmp.eq.s32.totalorder %s28, 7
      %p395 = scmp.ne.s32.totalorder %s390, %s392
      %p396 = scmp.eq.s32.totalorder %s28, 0
      %p397 = por %p395, %p396
      %p398 = scmp.ne.s32.totalorder %s390, %s392
      %p399 = scmp.eq.s32.totalorder %s33, 7
      %p400 = por %p398, %p399
      %p401 = scmp.ne.s32.totalorder %s392, %s393
      %p402 = scmp.eq.s32.totalorder %s33, 0
      %p403 = por %p401, %p402
      %p404 = scmp.ne.s32.totalorder %s392, %s393
      %p405 = scmp.eq.s32.totalorder %s34, 7
      %p406 = por %p404, %p405
      %p408 = scmp.ne.s32.totalorder %s393, %s407
      %p409 = scmp.eq.s32.totalorder %s34, 0
      %p410 = por %p408, %p409
      %s412 = sadd.s32 %s411, 1
      %p415 = scmp.eq.s32.totalorder %s28, 7
      %p416 = scmp.ne.s32.totalorder %s411, %s413
      %p417 = scmp.eq.s32.totalorder %s28, 0
      %p418 = por %p416, %p417
      %p419 = scmp.ne.s32.totalorder %s411, %s413
      %p420 = scmp.eq.s32.totalorder %s33, 7
      %p421 = por %p419, %p420
      %p422 = scmp.ne.s32.totalorder %s413, %s414
      %p423 = scmp.eq.s32.totalorder %s33, 0
      %p424 = por %p422, %p423
      %p425 = scmp.ne.s32.totalorder %s413, %s414
      %p426 = scmp.eq.s32.totalorder %s34, 7
      %p427 = por %p425, %p426
      %p429 = scmp.ne.s32.totalorder %s414, %s428
      %p430 = scmp.eq.s32.totalorder %s34, 0
      %p431 = por %p429, %p430
      %s432 = ssub.s32 %s35, %s54
      %s433 = ssub.s32 %s37, %s46
      %s434 = sor.u32 %s432, %s433
      %p435 = scmp.eq.s32.totalorder %s434, 0
      %s437 = sadd.s32 %s436, 1
      %s438 = scalar_select %p435, %s436, %s437
      %p441 = pneg %p435
      %p442 = scmp.eq.s32.totalorder %s28, 7
      %p443 = por %p441, %p442
      %p444 = scmp.ne.s32.totalorder %s436, %s439
      %p445 = scmp.eq.s32.totalorder %s28, 0
      %p446 = por %p444, %p445
      %p447 = scmp.ne.s32.totalorder %s436, %s439
      %p448 = scmp.eq.s32.totalorder %s33, 7
      %p449 = por %p447, %p448
      %p450 = scmp.ne.s32.totalorder %s439, %s440
      %p451 = scmp.eq.s32.totalorder %s33, 0
      %p452 = por %p450, %p451
      %p453 = scmp.ne.s32.totalorder %s439, %s440
      %p454 = scmp.eq.s32.totalorder %s34, 7
      %p455 = por %p453, %p454
      %p457 = scmp.ne.s32.totalorder %s440, %s456
      %p458 = scmp.eq.s32.totalorder %s34, 0
      %p459 = por %p457, %p458
      %p460 = scmp.le.s32.totalorder 1, %s28
      %p461 = scmp.lt.s32.totalorder %s28, 9
      %p462 = pnand %p460, %p461
      %p463 = pneg %p462
      // Predicated region
      $region9: #{tpu_custom_call.1} parent=5 // pred_check
        _
      $region10: #{tpu_custom_call.1} parent=5 // pred_check_branch
        %465 = sbr.rel (%p462) target = $region12
      $region11: #{tpu_custom_call.1} parent=5 // pred_region
        %s466 = ssub.s32 %s28, 1
        // Predicated region
        $region13: #{tpu_custom_call.1} parent=11 // pred_check
          %p467 = pneg %p73
        $region14: #{tpu_custom_call.1} parent=11 // pred_check_branch
          %469 = sbr.rel (%p467) target = $region16
        $region15: #{tpu_custom_call.1} parent=11 // pred_region
          %p470 = scmp.lt.s32.totalorder %s38, 1
          %s471 = scalar_select %p470, %s38, 1
          %s472 = smul.addr %s471, 2
          %s473 = smul.addr %s472, 8
          %s474 = scalar_lea.vmem %s0, %s473
        $region16: #{tpu_custom_call.1} parent=11 // pred_fallthru
          _
        // Predicated region
        $region17: #{tpu_custom_call.1} parent=11 // pred_check
          %p475 = pneg %p94
        $region18: #{tpu_custom_call.1} parent=11 // pred_check_branch
          %477 = sbr.rel (%p475) target = $region20
        $region19: #{tpu_custom_call.1} parent=11 // pred_region
          _
        $region20: #{tpu_custom_call.1} parent=11 // pred_fallthru
          _
        // Predicated region
        $region21: #{tpu_custom_call.1} parent=11 // pred_check
          %p478 = pneg %p115
        $region22: #{tpu_custom_call.1} parent=11 // pred_check_branch
          %480 = sbr.rel (%p478) target = $region24
        $region23: #{tpu_custom_call.1} parent=11 // pred_region
          %482 = vsyncadd [#allocation9], 0
          %s484 = sshll.u32 %s2, 4
          %s485 = int_to_ptr.hbm [resolvable:$true] %s484
          %s486 = sshll.u32 [#allocation8], 4
          %s487 = int_to_ptr.vmem [resolvable:$true] %s486
          %489 = dma.hbm_to_vmem [thread:$0]  %s485, 16, %s487, [#allocation9]
        $region24: #{tpu_custom_call.1} parent=11 // pred_fallthru
          _
        // Predicated region
        $region25: #{tpu_custom_call.1} parent=11 // pred_check
          %p490 = pneg %p136
        $region26: #{tpu_custom_call.1} parent=11 // pred_check_branch
          %492 = sbr.rel (%p490) target = $region28
        $region27: #{tpu_custom_call.1} parent=11 // pred_region
          _
        $region28: #{tpu_custom_call.1} parent=11 // pred_fallthru
          _
        // Predicated region
        $region29: #{tpu_custom_call.1} parent=11 // pred_check
          %p493 = pneg %p157
        $region30: #{tpu_custom_call.1} parent=11 // pred_check_branch
          %495 = sbr.rel (%p493) target = $region32
        $region31: #{tpu_custom_call.1} parent=11 // pred_region
          %497 = vsyncadd [#allocation12], 0
          %s499 = sshll.u32 %s4, 4
          %s500 = int_to_ptr.hbm [resolvable:$true] %s499
          %s501 = sshll.u32 [#allocation11], 4
          %s502 = int_to_ptr.vmem [resolvable:$true] %s501
          %504 = dma.hbm_to_vmem [thread:$0]  %s500, 16, %s502, [#allocation12]
        $region32: #{tpu_custom_call.1} parent=11 // pred_fallthru
          _
        // Predicated region
        $region33: #{tpu_custom_call.1} parent=11 // pred_check
          %p505 = pneg %p178
        $region34: #{tpu_custom_call.1} parent=11 // pred_check_branch
          %507 = sbr.rel (%p505) target = $region36
        $region35: #{tpu_custom_call.1} parent=11 // pred_region
          _
        $region36: #{tpu_custom_call.1} parent=11 // pred_fallthru
          _
        // Predicated region
        $region37: #{tpu_custom_call.1} parent=11 // pred_check
          %p508 = pneg %p199
        $region38: #{tpu_custom_call.1} parent=11 // pred_check_branch
          %510 = sbr.rel (%p508) target = $region40
        $region39: #{tpu_custom_call.1} parent=11 // pred_region
          _
        $region40: #{tpu_custom_call.1} parent=11 // pred_fallthru
          _
        // Predicated region
        $region41: #{tpu_custom_call.1} parent=11 // pred_check
          %p511 = pneg %p220
        $region42: #{tpu_custom_call.1} parent=11 // pred_check_branch
          %513 = sbr.rel (%p511) target = $region44
        $region43: #{tpu_custom_call.1} parent=11 // pred_region
          %515 = vsyncadd [#allocation12], 0
          %s516 = sshll.u32 %s7, 4
          %s517 = int_to_ptr.hbm [resolvable:$true] %s516
          %s518 = sshll.u32 [#allocation13], 4
          %s519 = int_to_ptr.vmem [resolvable:$true] %s518
          %524 = dma.hbm_to_vmem [thread:$0]  %s517, 512, %s519, [#allocation12], 64, 64, 4
        $region44: #{tpu_custom_call.1} parent=11 // pred_fallthru
          _
        // Predicated region
        $region45: #{tpu_custom_call.1} parent=11 // pred_check
          %p525 = pneg %p241
        $region46: #{tpu_custom_call.1} parent=11 // pred_check_branch
          %527 = sbr.rel (%p525) target = $region48
        $region47: #{tpu_custom_call.1} parent=11 // pred_region
          _
        $region48: #{tpu_custom_call.1} parent=11 // pred_fallthru
          _
        // Predicated region
        $region49: #{tpu_custom_call.1} parent=11 // pred_check
          %p528 = pneg %p262
        $region50: #{tpu_custom_call.1} parent=11 // pred_check_branch
          %530 = sbr.rel (%p528) target = $region52
        $region51: #{tpu_custom_call.1} parent=11 // pred_region
          _
        $region52: #{tpu_custom_call.1} parent=11 // pred_fallthru
          _
        // Predicated region
        $region53: #{tpu_custom_call.1} parent=11 // pred_check
          %p531 = pneg %p283
        $region54: #{tpu_custom_call.1} parent=11 // pred_check_branch
          %533 = sbr.rel (%p531) target = $region56
        $region55: #{tpu_custom_call.1} parent=11 // pred_region
          _
        $region56: #{tpu_custom_call.1} parent=11 // pred_fallthru
          _
        // Predicated region
        $region57: #{tpu_custom_call.1} parent=11 // pred_check
          %p534 = pneg %p382
        $region58: #{tpu_custom_call.1} parent=11 // pred_check_branch
          %536 = sbr.rel (%p534) target = $region60
        $region59: #{tpu_custom_call.1} parent=11 // pred_region
          _
        $region60: #{tpu_custom_call.1} parent=11 // pred_fallthru
          _
        // Predicated region
        $region61: #{tpu_custom_call.1} parent=11 // pred_check
          %p537 = pneg %p403
        $region62: #{tpu_custom_call.1} parent=11 // pred_check_branch
          %539 = sbr.rel (%p537) target = $region64
        $region63: #{tpu_custom_call.1} parent=11 // pred_region
          _
        $region64: #{tpu_custom_call.1} parent=11 // pred_fallthru
          _
        // Predicated region
        $region65: #{tpu_custom_call.1} parent=11 // pred_check
          %p540 = pneg %p424
        $region66: #{tpu_custom_call.1} parent=11 // pred_check_branch
          %542 = sbr.rel (%p540) target = $region68
        $region67: #{tpu_custom_call.1} parent=11 // pred_region
          _
        $region68: #{tpu_custom_call.1} parent=11 // pred_fallthru
          _
      $region12: #{tpu_custom_call.1} parent=5 // pred_fallthru
        _
      %p543 = scmp.lt.s32.totalorder %s28, 8
      // Predicated region
      $region69: #{tpu_custom_call.1} parent=5 // pred_check
        %p544 = pneg %p543
      $region70: #{tpu_custom_call.1} parent=5 // pred_check_branch
        %546 = sbr.rel (%p544) target = $region72
      $region71: #{tpu_custom_call.1} parent=5 // pred_region
        // Predicated region
        $region73: #{tpu_custom_call.1} parent=71 // pred_check
          %p547 = pneg %p303
        $region74: #{tpu_custom_call.1} parent=71 // pred_check_branch
          %549 = sbr.rel (%p547) target = $region76
        $region75: #{tpu_custom_call.1} parent=71 // pred_region
          %s550 = sand.u32 %s293, 1
          %s551 = sand.u32 %s293, 1
          %s552 = smul.addr %s551, 32
          %s553 = scalar_lea.vmem [#allocation14], %s552
          %s554 = smul.addr %s36, 4
          %s555 = scalar_lea.vmem %s11, %s554
          // Predicated region
          $region77: #{tpu_custom_call.1} parent=75 // pred_check
            _
          $region78: #{tpu_custom_call.1} parent=75 // pred_check_branch
            %557 = sbr.rel (0) target = $region80
          $region79: #{tpu_custom_call.1} parent=75 // pred_region
            // Predicated region
            $region81: #{tpu_custom_call.1} parent=79 // pred_check
              _
            $region82: #{tpu_custom_call.1} parent=79 // pred_check_branch
              %559 = sbr.rel target = $region84
            $region83: #{tpu_custom_call.1} parent=79 // pred_region
              // Predicated region
              $region96: #{tpu_custom_call.1} parent=83 // pred_check
                _
              $region97: #{tpu_custom_call.1} parent=83 // pred_check_branch
                %589 = sbr.rel (0) target = $region99
              $region98: #{tpu_custom_call.1} parent=83 // pred_region
                loop: start=0, step=1, limit=1
                $region100: #{tpu_custom_call.1} parent=98 // loop_pre_header
                  _
                $region101: #{tpu_custom_call.1} parent=98 // loop_header
                  %s591 = sphi 0, %s595
                  %p592 = scmp.ge.s32.totalorder %s591, 1
                  %s596 = sphi %s555, %s555
                  %s597 = sphi %s553, %s553
                $region102: #{tpu_custom_call.1} parent=98 // loop_header_branch
                  %594 = sbr.rel (%p592) target = $region106
                $region103: #{tpu_custom_call.1} parent=98 // loop_body
                  _
                $region104: #{tpu_custom_call.1} parent=98 // loop_footer
                  %s595 = sadd.s32 1, %s591
                $region105: #{tpu_custom_call.1} parent=98 // loop_footer_branch
                  %590 = sbr.rel target = $region101
                $region106: #{tpu_custom_call.1} parent=98 // loop_exit
                  _
                %s599 = ssub.s32 16, 1
                loop: start=0, step=1, limit=1
                $region107: #{tpu_custom_call.1} parent=98 // loop_pre_header
                  _
                $region108: #{tpu_custom_call.1} parent=98 // loop_header
                  %s601 = sphi 0, %s605
                  %p602 = scmp.ge.s32.totalorder %s601, 1
                  %s606 = sphi %s555, %s555
                  %s607 = sphi %s553, %s553
                $region109: #{tpu_custom_call.1} parent=98 // loop_header_branch
                  %604 = sbr.rel (%p602) target = $region113
                $region110: #{tpu_custom_call.1} parent=98 // loop_body
                  %v608 = vld [vmem:[%s606] sm:%s599]
                  %609 = vst [vmem:[%s607] sm:%s599] %v608
                  %v610 = vld [vmem:[%s606 + $0x8] sm:%s599]
                  %611 = vst [vmem:[%s607 + $0x4] sm:%s599] %v610
                  %v612 = vld [vmem:[%s606 + $0x10] sm:%s599]
                  %613 = vst [vmem:[%s607 + $0x8] sm:%s599] %v612
                  %v614 = vld [vmem:[%s606 + $0x18] sm:%s599]
                  %615 = vst [vmem:[%s607 + $0xc] sm:%s599] %v614
                  %v616 = vld [vmem:[%s606 + $0x20] sm:%s599]
                  %617 = vst [vmem:[%s607 + $0x10] sm:%s599] %v616
                  %v618 = vld [vmem:[%s606 + $0x28] sm:%s599]
                  %619 = vst [vmem:[%s607 + $0x14] sm:%s599] %v618
                  %v620 = vld [vmem:[%s606 + $0x30] sm:%s599]
                  %621 = vst [vmem:[%s607 + $0x18] sm:%s599] %v620
                  %v622 = vld [vmem:[%s606 + $0x38] sm:%s599]
                  %623 = vst [vmem:[%s607 + $0x1c] sm:%s599] %v622
                $region111: #{tpu_custom_call.1} parent=98 // loop_footer
                  %s605 = sadd.s32 1, %s601
                $region112: #{tpu_custom_call.1} parent=98 // loop_footer_branch
                  %600 = sbr.rel target = $region108
                $region113: #{tpu_custom_call.1} parent=98 // loop_exit
                  _
              $region99: #{tpu_custom_call.1} parent=83 // pred_fallthru
                _
            $region84: #{tpu_custom_call.1} parent=79 // pred_fallthru
              _
            // Predicated region
            $region85: #{tpu_custom_call.1} parent=79 // pred_check
              _
            $region86: #{tpu_custom_call.1} parent=79 // pred_check_branch
              %561 = sbr.rel (0) target = $region88
            $region87: #{tpu_custom_call.1} parent=79 // pred_region
              %s563 = ssub.s32 16, 1
              loop: start=0, step=1, limit=1
              $region89: #{tpu_custom_call.1} parent=87 // loop_pre_header
                _
              $region90: #{tpu_custom_call.1} parent=87 // loop_header
                %s565 = sphi 0, %s569
                %p566 = scmp.ge.s32.totalorder %s565, 1
                %s570 = sphi %s555, %s555
                %s571 = sphi %s553, %s553
              $region91: #{tpu_custom_call.1} parent=87 // loop_header_branch
                %568 = sbr.rel (%p566) target = $region95
              $region92: #{tpu_custom_call.1} parent=87 // loop_body
                %v572 = vld [vmem:[%s570] sm:%s563]
                %573 = vst [vmem:[%s571] sm:%s563] %v572
                %v574 = vld [vmem:[%s570 + $0x8] sm:%s563]
                %575 = vst [vmem:[%s571 + $0x4] sm:%s563] %v574
                %v576 = vld [vmem:[%s570 + $0x10] sm:%s563]
                %577 = vst [vmem:[%s571 + $0x8] sm:%s563] %v576
                %v578 = vld [vmem:[%s570 + $0x18] sm:%s563]
                %579 = vst [vmem:[%s571 + $0xc] sm:%s563] %v578
                %v580 = vld [vmem:[%s570 + $0x20] sm:%s563]
                %581 = vst [vmem:[%s571 + $0x10] sm:%s563] %v580
                %v582 = vld [vmem:[%s570 + $0x28] sm:%s563]
                %583 = vst [vmem:[%s571 + $0x14] sm:%s563] %v582
                %v584 = vld [vmem:[%s570 + $0x30] sm:%s563]
                %585 = vst [vmem:[%s571 + $0x18] sm:%s563] %v584
                %v586 = vld [vmem:[%s570 + $0x38] sm:%s563]
                %587 = vst [vmem:[%s571 + $0x1c] sm:%s563] %v586
              $region93: #{tpu_custom_call.1} parent=87 // loop_footer
                %s569 = sadd.s32 1, %s565
              $region94: #{tpu_custom_call.1} parent=87 // loop_footer_branch
                %564 = sbr.rel target = $region90
              $region95: #{tpu_custom_call.1} parent=87 // loop_exit
                _
            $region88: #{tpu_custom_call.1} parent=79 // pred_fallthru
              _
          $region80: #{tpu_custom_call.1} parent=75 // pred_fallthru
            _
          %624 = vnop
        $region76: #{tpu_custom_call.1} parent=71 // pred_fallthru
          _
        // Predicated region
        $region114: #{tpu_custom_call.1} parent=71 // pred_check
          %p625 = pneg %p329
        $region115: #{tpu_custom_call.1} parent=71 // pred_check_branch
          %627 = sbr.rel (%p625) target = $region117
        $region116: #{tpu_custom_call.1} parent=71 // pred_region
          %p628 = scmp.lt.s32.totalorder %s36, 1
          %s629 = scalar_select %p628, %s36, 1
          %s630 = scalar_lea.vmem %s12, %s629
        $region117: #{tpu_custom_call.1} parent=71 // pred_fallthru
          _
        // Predicated region
        $region118: #{tpu_custom_call.1} parent=71 // pred_check
          %p631 = pneg %p355
        $region119: #{tpu_custom_call.1} parent=71 // pred_check_branch
          %633 = sbr.rel (%p631) target = $region121
        $region120: #{tpu_custom_call.1} parent=71 // pred_region
          %s634 = smul.u32 16, %s36
          %p635 = scmp.lt.s32.totalorder %s634, 31
          %s636 = scalar_select %p635, %s634, 31
          %s637 = smul.addr %s636, 4
          %s638 = scalar_lea.vmem %s13, %s637
          %s639 = smul.u32 16, %s36
        $region121: #{tpu_custom_call.1} parent=71 // pred_fallthru
          _
      $region72: #{tpu_custom_call.1} parent=5 // pred_fallthru
        _
      %p640 = scmp.le.s32.totalorder 1, %s28
      %p641 = scmp.lt.s32.totalorder %s28, 9
      %p642 = pnand %p640, %p641
      %p643 = pneg %p642
      // Predicated region
      $region122: #{tpu_custom_call.1} parent=5 // pred_check
        _
      $region123: #{tpu_custom_call.1} parent=5 // pred_check_branch
        %645 = sbr.rel (%p642) target = $region125
      $region124: #{tpu_custom_call.1} parent=5 // pred_region
        %s646 = ssub.s32 %s28, 1
        // Predicated region
        $region126: #{tpu_custom_call.1} parent=124 // pred_check
          %p647 = pneg %p115
        $region127: #{tpu_custom_call.1} parent=124 // pred_check_branch
          %649 = sbr.rel (%p647) target = $region129
        $region128: #{tpu_custom_call.1} parent=124 // pred_region
          %651 = dma.done [#allocation9], 16
        $region129: #{tpu_custom_call.1} parent=124 // pred_fallthru
          _
        // Predicated region
        $region130: #{tpu_custom_call.1} parent=124 // pred_check
          %p652 = pneg %p157
        $region131: #{tpu_custom_call.1} parent=124 // pred_check_branch
          %654 = sbr.rel (%p652) target = $region133
        $region132: #{tpu_custom_call.1} parent=124 // pred_region
          %656 = dma.done [#allocation12], 16
        $region133: #{tpu_custom_call.1} parent=124 // pred_fallthru
          _
        // Predicated region
        $region134: #{tpu_custom_call.1} parent=124 // pred_check
          %p657 = pneg %p220
        $region135: #{tpu_custom_call.1} parent=124 // pred_check_branch
          %659 = sbr.rel (%p657) target = $region137
        $region136: #{tpu_custom_call.1} parent=124 // pred_region
          %661 = dma.done [#allocation12], 512
        $region137: #{tpu_custom_call.1} parent=124 // pred_fallthru
          _
        %s662 = sand.u32 %s296, 1
        %s663 = sand.u32 %s296, 1
        %s664 = smul.addr %s663, 32
        %s665 = scalar_lea.vmem [#allocation14], %s664
        // Predicated region
        $region138: #{tpu_custom_call.1} parent=124 // pred_check
          %p666 = pneg %p309
        $region139: #{tpu_custom_call.1} parent=124 // pred_check_branch
          %668 = sbr.rel (%p666) target = $region141
        $region140: #{tpu_custom_call.1} parent=124 // pred_region
          _
        $region141: #{tpu_custom_call.1} parent=124 // pred_fallthru
          _
        %p669 = scmp.lt.s32.totalorder %s38, 1
        %s670 = scalar_select %p669, %s38, 1
        %s671 = smul.addr %s670, 2
        %s672 = smul.addr %s671, 8
        %s673 = scalar_lea.vmem %s0, %s672
        %p674 = pneg %p73
        %p675 = pneg %p70
        %p676 = pneg %p94
        %p677 = pneg %p91
        %p678 = pneg %p115
        %p679 = pneg %p112
        %p680 = pneg %p136
        %p681 = pneg %p133
        %p682 = pneg %p157
        %p683 = pneg %p154
        %p684 = pneg %p178
        %p685 = pneg %p175
        %p686 = pneg %p199
        %p687 = pneg %p196
        %p688 = pneg %p220
        %p689 = pneg %p217
        %p690 = pneg %p241
        %p691 = pneg %p238
        %p692 = pneg %p262
        %p693 = pneg %p259
        %p694 = pneg %p283
        %p695 = pneg %p280
        %s696 = sand.u32 %s296, 1
        %s697 = sand.u32 %s296, 1
        %s698 = smul.addr %s697, 32
        %s699 = scalar_lea.vmem [#allocation14], %s698
        %p700 = pneg %p309
        %p701 = pneg %p306
        %p702 = scmp.lt.s32.totalorder %s39, 1
        %s703 = scalar_select %p702, %s39, 1
        %s704 = scalar_lea.vmem %s12, %s703
        %p705 = pneg %p335
        %p706 = pneg %p332
        %s707 = smul.u32 16, %s39
        %p708 = scmp.lt.s32.totalorder %s707, 31
        %s709 = scalar_select %p708, %s707, 31
        %s710 = smul.addr %s709, 4
        %s711 = scalar_lea.vmem %s13, %s710
        %p712 = pneg %p361
        %p713 = pneg %p358
        %p714 = pneg %p382
        %p715 = pneg %p379
        %p716 = pneg %p403
        %p717 = pneg %p400
        %p718 = pneg %p424
        %p719 = pneg %p421
        %p720 = pneg %p452
        %p721 = pneg %p449
        %s722 = sand.u32 %s439, 1
        %s723 = scalar_lea.sflag [#allocation10], %s722
        %s724 = sand.u32 %s439, 1
        %s725 = smul.addr %s724, 8
        %s726 = scalar_lea.vmem [#allocation15], %s725
        %p727 = scmp.lt.s32.totalorder %s38, 1
        %s728 = scalar_select %p727, %s38, 1
        %s729 = smul.addr %s728, 2
        %s730 = smul.addr %s729, 8
        %s731 = scalar_lea.vmem %s0, %s730
        %p732 = scmp.lt.s32.totalorder %s39, 1
        %s733 = scalar_select %p732, %s39, 1
        %s734 = scalar_lea.vmem %s12, %s733
        %s735 = smul.u32 16, %s39
        %p736 = scmp.lt.s32.totalorder %s735, 31
        %s737 = scalar_select %p736, %s735, 31
        %s738 = smul.addr %s737, 4
        %s739 = scalar_lea.vmem %s13, %s738
        %s740 = smul.u32 16, %s39
        %s742 = smul.u32 %s40, 8
        %p743 = scmp.eq.s32.totalorder %s39, 0
        %p744 = scmp.eq.s32.totalorder %s40, 0
        %p745 = pnand %p743, %p744
        %p746 = pneg %p745
        // Predicated region
        $region142: #{tpu_custom_call.1} parent=124 // pred_check
          _
        $region143: #{tpu_custom_call.1} parent=124 // pred_check_branch
          %748 = sbr.rel (%p745) target = $region145
        $region144: #{tpu_custom_call.1} parent=124 // pred_region
          %v749 = vld [vmem:[%s731] sm:$0xff]
          %v750 = vld [vmem:[%s731 + $0x8] sm:$0xff]
          %v751 = vpack.c.bf16 %v750, %v749
          %v752 = vld [vmem:[%s3] sm:$0xf]
          %v753 = vld [vmem:[%s3 + $0x4] sm:$0xf]
          %v754 = vld [vmem:[%s3 + $0x8] sm:$0xf]
          %v755 = vld [vmem:[%s3 + $0xc] sm:$0xf]
          %v756 = vld [vmem:[%s3 + $0x10] sm:$0xf]
          %v757 = vld [vmem:[%s3 + $0x14] sm:$0xf]
          %v758 = vld [vmem:[%s3 + $0x18] sm:$0xf]
          %v759 = vld [vmem:[%s3 + $0x1c] sm:$0xf]
          %v760 = vld [vmem:[#allocation11] sm:$0x1]
          %v762 = vperm.slane %v760, 0
          %v772 = vunpack.c.l.b16 %v752
          %v773 = vunpack.c.l.b16 %v753
          %v774 = vunpack.c.l.b16 %v754
          %v775 = vunpack.c.l.b16 %v755
          %v776 = vunpack.c.l.b16 %v756
          %v777 = vunpack.c.l.b16 %v757
          %v778 = vunpack.c.l.b16 %v758
          %v779 = vunpack.c.l.b16 %v759
          %v780 = vpack.c.b16 %v773, %v772
          %v781 = vpack.c.b16 %v775, %v774
          %v782 = vpack.c.b16 %v777, %v776
          %v783 = vpack.c.b16 %v779, %v778
          %vm788 = vcmask 523264
          %v790 = vsel %vm788, %v751, 0
          %792 = vmatpush.bf16.msra.mxu0 0
          %793 = vmatpush.bf16.msra.mxu0 0
          %794 = vmatpush.bf16.msra.mxu0 0
          %795 = vmatpush.bf16.msra.mxu0 0
          %796 = vmatpush.bf16.msra.mxu0 %v783
          %797 = vmatpush.bf16.msra.mxu0 %v782
          %798 = vmatpush.bf16.msra.mxu0 %v781
          %799 = vmatpush.bf16.msra.mxu0 %v780
          %800 = vmatmul.bf16.gmra.mxu0 %v790
          %v801 = vpop.f32.mrf.mxu0
          %v802 = vadd.f32 %v762, %v801
          %v803 = vpop.f32.mrf.mxu0
          %v804 = vadd.f32 %v762, %v803
          %805 = vdwg.mxu0
          %v806 = vld [vmem:[%s5] sm:$0xf]
          %v807 = vld [vmem:[%s5 + $0x4] sm:$0xf]
          %v808 = vld [vmem:[%s5 + $0x8] sm:$0xf]
          %v809 = vld [vmem:[%s5 + $0xc] sm:$0xf]
          %v810 = vld [vmem:[%s5 + $0x10] sm:$0xf]
          %v811 = vld [vmem:[%s5 + $0x14] sm:$0xf]
          %v812 = vld [vmem:[%s5 + $0x18] sm:$0xf]
          %v813 = vld [vmem:[%s5 + $0x1c] sm:$0xf]
          %v814 = vld [vmem:[%s6] sm:$0x1]
          %v816 = vperm.slane %v814, 0
          %v826 = vunpack.c.l.b16 %v806
          %v827 = vunpack.c.l.b16 %v807
          %v828 = vunpack.c.l.b16 %v808
          %v829 = vunpack.c.l.b16 %v809
          %v830 = vunpack.c.l.b16 %v810
          %v831 = vunpack.c.l.b16 %v811
          %v832 = vunpack.c.l.b16 %v812
          %v833 = vunpack.c.l.b16 %v813
          %v834 = vpack.c.b16 %v827, %v826
          %v835 = vpack.c.b16 %v829, %v828
          %v836 = vpack.c.b16 %v831, %v830
          %v837 = vpack.c.b16 %v833, %v832
          %842 = vmatpush.bf16.msra.mxu0 0
          %843 = vmatpush.bf16.msra.mxu0 0
          %844 = vmatpush.bf16.msra.mxu0 0
          %845 = vmatpush.bf16.msra.mxu0 0
          %846 = vmatpush.bf16.msra.mxu0 %v837
          %847 = vmatpush.bf16.msra.mxu0 %v836
          %848 = vmatpush.bf16.msra.mxu0 %v835
          %849 = vmatpush.bf16.msra.mxu0 %v834
          %850 = vmatmul.bf16.gmra.mxu0 %v790
          %v851 = vpop.f32.mrf.mxu0
          %v852 = vadd.f32 %v816, %v851
          %v853 = vpop.f32.mrf.mxu0
          %v854 = vadd.f32 %v816, %v853
          %855 = vdwg.mxu0
          %v856 = vpack.c.bf16 %v802, %v802
          %v857 = vpack.c.bf16 %v804, %v804
          %vm858 = vcmask 519168
          %859 = vst.msk [vmem:[#allocation2] sm:$0xf] %vm858, %v856
          %860 = vst.msk [vmem:[#allocation2 + $0x4] sm:$0xf] %vm858, %v857
          %v861 = vpack.c.bf16 %v852, %v852
          %v862 = vpack.c.bf16 %v854, %v854
          %863 = vst.msk [vmem:[#allocation3] sm:$0xf] %vm858, %v861
          %864 = vst.msk [vmem:[#allocation3 + $0x4] sm:$0xf] %vm858, %v862
        $region145: #{tpu_custom_call.1} parent=124 // pred_fallthru
          _
        // Predicated region
        $region146: #{tpu_custom_call.1} parent=124 // pred_check
          %p865 = pneg %p743
        $region147: #{tpu_custom_call.1} parent=124 // pred_check_branch
          %867 = sbr.rel (%p865) target = $region149
        $region148: #{tpu_custom_call.1} parent=124 // pred_region
          %s868 = scalar_lea.vmem %s731, %s742
          %v869 = vld [vmem:[%s868] sm:$0xff]
          %v870 = vpack.c.bf16 %v869, %v869
          %v871 = vld [vmem:[%s1] sm:$0xf]
          %v872 = vld [vmem:[%s1 + $0x4] sm:$0xf]
          %v873 = vld [vmem:[%s1 + $0x8] sm:$0xf]
          %v874 = vld [vmem:[%s1 + $0xc] sm:$0xf]
          %v875 = vld [vmem:[%s1 + $0x10] sm:$0xf]
          %v876 = vld [vmem:[%s1 + $0x14] sm:$0xf]
          %v877 = vld [vmem:[%s1 + $0x18] sm:$0xf]
          %v878 = vld [vmem:[%s1 + $0x1c] sm:$0xf]
          %v879 = vld [vmem:[#allocation8] sm:$0x1]
          %v881 = vperm.slane %v879, 0
          %v891 = vunpack.c.l.b16 %v871
          %v892 = vunpack.c.l.b16 %v872
          %v893 = vunpack.c.l.b16 %v873
          %v894 = vunpack.c.l.b16 %v874
          %v895 = vunpack.c.l.b16 %v875
          %v896 = vunpack.c.l.b16 %v876
          %v897 = vunpack.c.l.b16 %v877
          %v898 = vunpack.c.l.b16 %v878
          %v899 = vpack.c.b16 %v892, %v891
          %v900 = vpack.c.b16 %v894, %v893
          %v901 = vpack.c.b16 %v896, %v895
          %v902 = vpack.c.b16 %v898, %v897
          %vm907 = vcmask 523264
          %v909 = vsel %vm907, %v870, 0
          %911 = vmatpush.bf16.msra.mxu0 0
          %912 = vmatpush.bf16.msra.mxu0 0
          %913 = vmatpush.bf16.msra.mxu0 0
          %914 = vmatpush.bf16.msra.mxu0 0
          %915 = vmatpush.bf16.msra.mxu0 %v902
          %916 = vmatpush.bf16.msra.mxu0 %v901
          %917 = vmatpush.bf16.msra.mxu0 %v900
          %918 = vmatpush.bf16.msra.mxu0 %v899
          %919 = vmatmul.bf16.gmra.mxu0 %v909
          %v920 = vpop.f32.mrf.mxu0
          %v921 = vadd.f32 %v881, %v920
          %v922 = vpop.f32.mrf.mxu0
          %923 = vdwg.mxu0
          %v924 = vmul.f32 %v921, 0.25
          %v925 = vpack.c.bf16 %v924, %v924
          %v926 = vld [vmem:[#allocation2] sm:$0xf]
          %v927 = vld [vmem:[#allocation2 + $0x4] sm:$0xf]
          %v930 = vunpack.c.l.b16 %v926
          %v931 = vunpack.c.l.b16 %v927
          %v932 = vpack.c.b16 %v931, %v930
          %vm933 = vcmask 130048
          %v935 = vsel %vm933, %v925, 0
          %v938 = vsel %vm933, %v932, 0
          %940 = vmatpush.bf16.xpose.msra.mxu0 0
          %941 = vmatpush.bf16.xpose.msra.mxu0 0
          %942 = vmatpush.bf16.xpose.msra.mxu0 0
          %943 = vmatpush.bf16.xpose.msra.mxu0 0
          %944 = vmatpush.bf16.xpose.msra.mxu0 0
          %945 = vmatpush.bf16.xpose.msra.mxu0 0
          %946 = vmatpush.bf16.xpose.msra.mxu0 0
          %947 = vmatpush.bf16.xpose.msra.mxu0 %v938
          %948 = vmatmul.bf16.gmra.mxu0 %v935
          %v949 = vpop.f32.mrf.mxu0
          %v950 = vadd.f32 0.0, %v949
          %v951 = vpop.f32.mrf.mxu0
          %952 = vdwg.mxu0
          %v953 = vsel %vm933, %v950, -inf
          %954 = vmax.xlane.f32.xlu0 %v953
          %v955 = vpop.xlane.xlu0 %954
          %v956 = vsub.f32 %v950, %v955
          %v957 = vmul.f32 %v956, 1.442695
          %v958 = vpow.pop %v957
          %v959 = vsel %vm933, %v958, 0.0
          %960 = vadd.xlane.f32.xlu0 %v959
          %v961 = vpop.xlane.xlu0 %960
          %v962 = vrcp.pop %v961
          %v963 = vmul.f32 %v958, %v962
          %v964 = vpack.c.bf16 %v963, %v963
          %v965 = vld [vmem:[#allocation3] sm:$0xf]
          %v966 = vld [vmem:[#allocation3 + $0x4] sm:$0xf]
          %v969 = vunpack.c.l.b16 %v965
          %v970 = vunpack.c.l.b16 %v966
          %v971 = vpack.c.b16 %v970, %v969
          %v974 = vsel %vm933, %v964, 0
          %976 = vmatpush.bf16.msra.mxu0 0
          %977 = vmatpush.bf16.msra.mxu0 0
          %978 = vmatpush.bf16.msra.mxu0 0
          %979 = vmatpush.bf16.msra.mxu0 0
          %980 = vmatpush.bf16.msra.mxu0 0
          %981 = vmatpush.bf16.msra.mxu0 0
          %982 = vmatpush.bf16.msra.mxu0 0
          %983 = vmatpush.bf16.msra.mxu0 %v971
          %984 = vmatmul.bf16.gmra.mxu0 %v974
          %v985 = vpop.f32.mrf.mxu0
          %v986 = vadd.f32 0.0, %v985
          %v987 = vpop.f32.mrf.mxu0
          %988 = vdwg.mxu0
          %v989 = vpack.c.bf16 %v986, %v986
          %vm990 = vcmask 125952
          %991 = vst.msk [vmem:[#allocation7] sm:$0xf] %vm990, %v989
          %v992 = vld [vmem:[#allocation2] sm:$0xf]
          %v993 = vld [vmem:[#allocation2 + $0x4] sm:$0xf]
          %995 = vrot.lane.b32.xlu0 %v925, 112
          %v996 = vpop.permute.xlu0 %995
          %v999 = vunpack.c.l.b16 %v992
          %v1000 = vunpack.c.l.b16 %v993
          %v1001 = vpack.c.b16 %v1000, %v999
          %1002 = vrot.lane.b32.xlu0 %v1001, 112
          %v1003 = vpop.permute.xlu0 %1002
          %v1005 = vsel %vm933, %v996, 0
          %v1008 = vsel %vm933, %v1003, 0
          %1010 = vmatpush.bf16.xpose.msra.mxu0 0
          %1011 = vmatpush.bf16.xpose.msra.mxu0 0
          %1012 = vmatpush.bf16.xpose.msra.mxu0 0
          %1013 = vmatpush.bf16.xpose.msra.mxu0 0
          %1014 = vmatpush.bf16.xpose.msra.mxu0 0
          %1015 = vmatpush.bf16.xpose.msra.mxu0 0
          %1016 = vmatpush.bf16.xpose.msra.mxu0 0
          %1017 = vmatpush.bf16.xpose.msra.mxu0 %v1008
          %1018 = vmatmul.bf16.gmra.mxu0 %v1005
          %v1019 = vpop.f32.mrf.mxu0
          %v1020 = vadd.f32 0.0, %v1019
          %v1021 = vpop.f32.mrf.mxu0
          %1022 = vdwg.mxu0
          %v1023 = vsel %vm933, %v1020, -inf
          %1024 = vmax.xlane.f32.xlu0 %v1023
          %v1025 = vpop.xlane.xlu0 %1024
          %v1026 = vsub.f32 %v1020, %v1025
          %v1027 = vmul.f32 %v1026, 1.442695
          %v1028 = vpow.pop %v1027
          %v1029 = vsel %vm933, %v1028, 0.0
          %1030 = vadd.xlane.f32.xlu0 %v1029
          %v1031 = vpop.xlane.xlu0 %1030
          %v1032 = vrcp.pop %v1031
          %v1033 = vmul.f32 %v1028, %v1032
          %v1034 = vpack.c.bf16 %v1033, %v1033
          %v1035 = vld [vmem:[#allocation3] sm:$0xf]
          %v1036 = vld [vmem:[#allocation3 + $0x4] sm:$0xf]
          %v1039 = vunpack.c.l.b16 %v1035
          %v1040 = vunpack.c.l.b16 %v1036
          %v1041 = vpack.c.b16 %v1040, %v1039
          %1042 = vrot.lane.b32.xlu0 %v1041, 112
          %v1043 = vpop.permute.xlu0 %1042
          %v1046 = vsel %vm933, %v1034, 0
          %1048 = vmatpush.bf16.msra.mxu0 0
          %1049 = vmatpush.bf16.msra.mxu0 0
          %1050 = vmatpush.bf16.msra.mxu0 0
          %1051 = vmatpush.bf16.msra.mxu0 0
          %1052 = vmatpush.bf16.msra.mxu0 0
          %1053 = vmatpush.bf16.msra.mxu0 0
          %1054 = vmatpush.bf16.msra.mxu0 0
          %1055 = vmatpush.bf16.msra.mxu0 %v1043
          %1056 = vmatmul.bf16.gmra.mxu0 %v1046
          %v1057 = vpop.f32.mrf.mxu0
          %v1058 = vadd.f32 0.0, %v1057
          %v1059 = vpop.f32.mrf.mxu0
          %1060 = vdwg.mxu0
          %v1061 = vpack.c.bf16 %v1058, %v1058
          %1063 = vrot.lane.b32.xlu0 %v1061, 16
          %v1064 = vpop.permute.xlu0 %1063
          %vm1066 = vcmask 257152
          %1067 = vst.msk [vmem:[#allocation7] sm:$0xf] %vm1066, %v1064
          %v1068 = vld [vmem:[#allocation2] sm:$0xf]
          %v1069 = vld [vmem:[#allocation2 + $0x4] sm:$0xf]
          %1070 = vrot.lane.b32.xlu0 %v925, 96
          %v1071 = vpop.permute.xlu0 %1070
          %v1074 = vunpack.c.l.b16 %v1068
          %v1075 = vunpack.c.l.b16 %v1069
          %v1076 = vpack.c.b16 %v1075, %v1074
          %1077 = vrot.lane.b32.xlu0 %v1076, 96
          %v1078 = vpop.permute.xlu0 %1077
          %v1080 = vsel %vm933, %v1071, 0
          %v1083 = vsel %vm933, %v1078, 0
          %1085 = vmatpush.bf16.xpose.msra.mxu0 0
          %1086 = vmatpush.bf16.xpose.msra.mxu0 0
          %1087 = vmatpush.bf16.xpose.msra.mxu0 0
          %1088 = vmatpush.bf16.xpose.msra.mxu0 0
          %1089 = vmatpush.bf16.xpose.msra.mxu0 0
          %1090 = vmatpush.bf16.xpose.msra.mxu0 0
          %1091 = vmatpush.bf16.xpose.msra.mxu0 0
          %1092 = vmatpush.bf16.xpose.msra.mxu0 %v1083
          %1093 = vmatmul.bf16.gmra.mxu0 %v1080
          %v1094 = vpop.f32.mrf.mxu0
          %v1095 = vadd.f32 0.0, %v1094
          %v1096 = vpop.f32.mrf.mxu0
          %1097 = vdwg.mxu0
          %v1098 = vsel %vm933, %v1095, -inf
          %1099 = vmax.xlane.f32.xlu0 %v1098
          %v1100 = vpop.xlane.xlu0 %1099
          %v1101 = vsub.f32 %v1095, %v1100
          %v1102 = vmul.f32 %v1101, 1.442695
          %v1103 = vpow.pop %v1102
          %v1104 = vsel %vm933, %v1103, 0.0
          %1105 = vadd.xlane.f32.xlu0 %v1104
          %v1106 = vpop.xlane.xlu0 %1105
          %v1107 = vrcp.pop %v1106
          %v1108 = vmul.f32 %v1103, %v1107
          %v1109 = vpack.c.bf16 %v1108, %v1108
          %v1110 = vld [vmem:[#allocation3] sm:$0xf]
          %v1111 = vld [vmem:[#allocation3 + $0x4] sm:$0xf]
          %v1114 = vunpack.c.l.b16 %v1110
          %v1115 = vunpack.c.l.b16 %v1111
          %v1116 = vpack.c.b16 %v1115, %v1114
          %1117 = vrot.lane.b32.xlu0 %v1116, 96
          %v1118 = vpop.permute.xlu0 %1117
          %v1121 = vsel %vm933, %v1109, 0
          %1123 = vmatpush.bf16.msra.mxu0 0
          %1124 = vmatpush.bf16.msra.mxu0 0
          %1125 = vmatpush.bf16.msra.mxu0 0
          %1126 = vmatpush.bf16.msra.mxu0 0
          %1127 = vmatpush.bf16.msra.mxu0 0
          %1128 = vmatpush.bf16.msra.mxu0 0
          %1129 = vmatpush.bf16.msra.mxu0 0
          %1130 = vmatpush.bf16.msra.mxu0 %v1118
          %1131 = vmatmul.bf16.gmra.mxu0 %v1121
          %v1132 = vpop.f32.mrf.mxu0
          %v1133 = vadd.f32 0.0, %v1132
          %v1134 = vpop.f32.mrf.mxu0
          %1135 = vdwg.mxu0
          %v1136 = vpack.c.bf16 %v1133, %v1133
          %1138 = vrot.lane.b32.xlu0 %v1136, 32
          %v1139 = vpop.permute.xlu0 %1138
          %vm1141 = vcmask 388352
          %1142 = vst.msk [vmem:[#allocation7] sm:$0xf] %vm1141, %v1139
          %v1143 = vld [vmem:[#allocation2] sm:$0xf]
          %v1144 = vld [vmem:[#allocation2 + $0x4] sm:$0xf]
          %1145 = vrot.lane.b32.xlu0 %v925, 80
          %v1146 = vpop.permute.xlu0 %1145
          %v1149 = vunpack.c.l.b16 %v1143
          %v1150 = vunpack.c.l.b16 %v1144
          %v1151 = vpack.c.b16 %v1150, %v1149
          %1152 = vrot.lane.b32.xlu0 %v1151, 80
          %v1153 = vpop.permute.xlu0 %1152
          %v1155 = vsel %vm933, %v1146, 0
          %v1158 = vsel %vm933, %v1153, 0
          %1160 = vmatpush.bf16.xpose.msra.mxu0 0
          %1161 = vmatpush.bf16.xpose.msra.mxu0 0
          %1162 = vmatpush.bf16.xpose.msra.mxu0 0
          %1163 = vmatpush.bf16.xpose.msra.mxu0 0
          %1164 = vmatpush.bf16.xpose.msra.mxu0 0
          %1165 = vmatpush.bf16.xpose.msra.mxu0 0
          %1166 = vmatpush.bf16.xpose.msra.mxu0 0
          %1167 = vmatpush.bf16.xpose.msra.mxu0 %v1158
          %1168 = vmatmul.bf16.gmra.mxu0 %v1155
          %v1169 = vpop.f32.mrf.mxu0
          %v1170 = vadd.f32 0.0, %v1169
          %v1171 = vpop.f32.mrf.mxu0
          %1172 = vdwg.mxu0
          %v1173 = vsel %vm933, %v1170, -inf
          %1174 = vmax.xlane.f32.xlu0 %v1173
          %v1175 = vpop.xlane.xlu0 %1174
          %v1176 = vsub.f32 %v1170, %v1175
          %v1177 = vmul.f32 %v1176, 1.442695
          %v1178 = vpow.pop %v1177
          %v1179 = vsel %vm933, %v1178, 0.0
          %1180 = vadd.xlane.f32.xlu0 %v1179
          %v1181 = vpop.xlane.xlu0 %1180
          %v1182 = vrcp.pop %v1181
          %v1183 = vmul.f32 %v1178, %v1182
          %v1184 = vpack.c.bf16 %v1183, %v1183
          %v1185 = vld [vmem:[#allocation3] sm:$0xf]
          %v1186 = vld [vmem:[#allocation3 + $0x4] sm:$0xf]
          %v1189 = vunpack.c.l.b16 %v1185
          %v1190 = vunpack.c.l.b16 %v1186
          %v1191 = vpack.c.b16 %v1190, %v1189
          %1192 = vrot.lane.b32.xlu0 %v1191, 80
          %v1193 = vpop.permute.xlu0 %1192
          %v1196 = vsel %vm933, %v1184, 0
          %1198 = vmatpush.bf16.msra.mxu0 0
          %1199 = vmatpush.bf16.msra.mxu0 0
          %1200 = vmatpush.bf16.msra.mxu0 0
          %1201 = vmatpush.bf16.msra.mxu0 0
          %1202 = vmatpush.bf16.msra.mxu0 0
          %1203 = vmatpush.bf16.msra.mxu0 0
          %1204 = vmatpush.bf16.msra.mxu0 0
          %1205 = vmatpush.bf16.msra.mxu0 %v1193
          %1206 = vmatmul.bf16.gmra.mxu0 %v1196
          %v1207 = vpop.f32.mrf.mxu0
          %v1208 = vadd.f32 0.0, %v1207
          %v1209 = vpop.f32.mrf.mxu0
          %1210 = vdwg.mxu0
          %v1211 = vpack.c.bf16 %v1208, %v1208
          %1213 = vrot.lane.b32.xlu0 %v1211, 48
          %v1214 = vpop.permute.xlu0 %1213
          %vm1216 = vcmask 519552
          %1217 = vst.msk [vmem:[#allocation7] sm:$0xf] %vm1216, %v1214
          %v1218 = vld [vmem:[#allocation7] sm:$0xf]
          %v1219 = vld [vmem:[#allocation13] sm:$0xf]
          %v1220 = vld [vmem:[#allocation13 + $0x4] sm:$0xf]
          %v1221 = vld [vmem:[#allocation13 + $0x8] sm:$0xf]
          %v1222 = vld [vmem:[#allocation13 + $0xc] sm:$0xf]
          %v1223 = vld [vmem:[#allocation13 + $0x10] sm:$0xf]
          %v1224 = vld [vmem:[#allocation13 + $0x14] sm:$0xf]
          %v1225 = vld [vmem:[#allocation13 + $0x18] sm:$0xf]
          %v1226 = vld [vmem:[#allocation13 + $0x1c] sm:$0xf]
          %v1227 = vld [vmem:[%s8] sm:$0x1]
          %v1229 = vperm.slane %v1227, 0
          %v1239 = vunpack.c.l.b16 %v1219
          %v1240 = vunpack.c.l.b16 %v1220
          %v1241 = vunpack.c.l.b16 %v1221
          %v1242 = vunpack.c.l.b16 %v1222
          %v1243 = vunpack.c.l.b16 %v1223
          %v1244 = vunpack.c.l.b16 %v1224
          %v1245 = vunpack.c.l.b16 %v1225
          %v1246 = vunpack.c.l.b16 %v1226
          %v1247 = vpack.c.b16 %v1240, %v1239
          %v1248 = vpack.c.b16 %v1242, %v1241
          %v1249 = vpack.c.b16 %v1244, %v1243
          %v1250 = vpack.c.b16 %v1246, %v1245
          %v1256 = vsel %vm907, %v1218, 0
          %1258 = vmatpush.bf16.msra.mxu0 0
          %1259 = vmatpush.bf16.msra.mxu0 0
          %1260 = vmatpush.bf16.msra.mxu0 0
          %1261 = vmatpush.bf16.msra.mxu0 0
          %1262 = vmatpush.bf16.msra.mxu0 %v1250
          %1263 = vmatpush.bf16.msra.mxu0 %v1249
          %1264 = vmatpush.bf16.msra.mxu0 %v1248
          %1265 = vmatpush.bf16.msra.mxu0 %v1247
          %1266 = vmatmul.bf16.gmra.mxu0 %v1256
          %v1267 = vpop.f32.mrf.mxu0
          %v1268 = vadd.f32 %v1229, %v1267
          %v1269 = vpop.f32.mrf.mxu0
          %1270 = vdwg.mxu0
          %v1271 = vadd.f32 %v869, %v1268
          %v1272 = vld [vmem:[%s9] sm:$0x1]
          %v1273 = vld [vmem:[%s10] sm:$0x1]
          %v1274 = vsel %vm907, %v1271, 0.0
          %1275 = vadd.xlane.f32.xlu0 %v1274
          %v1276 = vpop.xlane.xlu0 %1275
          %v1277 = vrcp.pop 64.0
          %v1278 = vmul.f32 64.0, %v1277
          %v1279 = vsub.f32 1.0, %v1278
          %v1280 = vmul.f32 %v1277, %v1279
          %v1281 = vadd.f32 %v1277, %v1280
          %vm1282 = vweird.f32 %v1277
          %v1283 = vsel %vm1282, %v1277, %v1281
          %v1284 = vmul.f32 %v1276, %v1283
          %v1285 = vsub.f32 %v1271, %v1284
          %v1286 = vmul.f32 %v1285, %v1285
          %v1287 = vsel %vm907, %v1286, 0.0
          %1288 = vadd.xlane.f32.xlu0 %v1287
          %v1289 = vpop.xlane.xlu0 %1288
          %v1290 = vmul.f32 %v1289, %v1283
          %v1291 = vadd.f32 %v1290, 1e-05
          %v1292 = vrsqrt.pop %v1291
          %v1293 = vmul.f32 %v1292, %v1291
          %v1294 = vmul.f32 %v1293, %v1292
          %v1295 = vmul.f32 0.5, %v1294
          %v1296 = vsub.f32 1.5, %v1295
          %v1297 = vmul.f32 %v1292, %v1296
          %vm1298 = vweird.f32 %v1291
          %vm1299 = vweird.f32 %v1292
          %vm1300 = vmor %vm1298, %vm1299
          %v1301 = vsel %vm1300, %v1292, %v1297
          %v1302 = vmul.f32 %v1285, %v1301
          %v1304 = vperm.slane %v1272, 0
          %v1306 = vmul.f32 %v1302, %v1304
          %v1308 = vperm.slane %v1273, 0
          %v1310 = vadd.f32 %v1306, %v1308
          %s1311 = scalar_lea.vmem [#allocation4], %s742
          %1312 = vst.msk [vmem:[%s1311] sm:$0xff] %vm907, %v1310
          %v1313 = vpack.c.bf16 %v1310, %v1310
          %s1314 = smul.addr %s40, 4
          %s1315 = scalar_lea.vmem [#allocation5], %s1314
          %vm1316 = vcmask 519168
          %1317 = vst.msk [vmem:[%s1315] sm:$0xf] %vm1316, %v1313
          %s1318 = scalar_lea.vmem [#allocation6], %s742
          %1319 = vst.msk [vmem:[%s1318] sm:$0xff] %vm907, 0.0
        $region149: #{tpu_custom_call.1} parent=124 // pred_fallthru
          _
        %s1320 = smul.addr %s40, 4
        %s1321 = scalar_lea.vmem [#allocation5], %s1320
        %v1322 = vld [vmem:[%s1321] sm:$0xf]
        %v1323 = vld [vmem:[%s665] sm:$0xf]
        %v1324 = vld [vmem:[%s665 + $0x4] sm:$0xf]
        %v1325 = vld [vmem:[%s665 + $0x8] sm:$0xf]
        %v1326 = vld [vmem:[%s665 + $0xc] sm:$0xf]
        %v1327 = vld [vmem:[%s665 + $0x10] sm:$0xf]
        %v1328 = vld [vmem:[%s665 + $0x14] sm:$0xf]
        %v1329 = vld [vmem:[%s665 + $0x18] sm:$0xf]
        %v1330 = vld [vmem:[%s665 + $0x1c] sm:$0xf]
        %v1331 = vld [vmem:[%s734] sm:$0x1]
        %v1333 = vperm.slane %v1331, 0
        %v1343 = vunpack.c.l.b16 %v1323
        %v1344 = vunpack.c.l.b16 %v1324
        %v1345 = vunpack.c.l.b16 %v1325
        %v1346 = vunpack.c.l.b16 %v1326
        %v1347 = vunpack.c.l.b16 %v1327
        %v1348 = vunpack.c.l.b16 %v1328
        %v1349 = vunpack.c.l.b16 %v1329
        %v1350 = vunpack.c.l.b16 %v1330
        %v1351 = vpack.c.b16 %v1344, %v1343
        %v1352 = vpack.c.b16 %v1346, %v1345
        %v1353 = vpack.c.b16 %v1348, %v1347
        %v1354 = vpack.c.b16 %v1350, %v1349
        %vm1359 = vcmask 523264
        %v1361 = vsel %vm1359, %v1322, 0
        %1363 = vmatpush.bf16.msra.mxu0 0
        %1364 = vmatpush.bf16.msra.mxu0 0
        %1365 = vmatpush.bf16.msra.mxu0 0
        %1366 = vmatpush.bf16.msra.mxu0 0
        %1367 = vmatpush.bf16.msra.mxu0 %v1354
        %1368 = vmatpush.bf16.msra.mxu0 %v1353
        %1369 = vmatpush.bf16.msra.mxu0 %v1352
        %1370 = vmatpush.bf16.msra.mxu0 %v1351
        %1371 = vmatmul.bf16.gmra.mxu0 %v1361
        %v1372 = vpop.f32.mrf.mxu0
        %v1373 = vadd.f32 %v1333, %v1372
        %v1374 = vpop.f32.mrf.mxu0
        %1375 = vdwg.mxu0
        %v1376 = vmax.f32 %v1373, 0.0
        %v1377 = vpack.c.bf16 %v1376, %v1376
        %s1378 = scalar_lea.vmem [#allocation6], %s742
        %v1379 = vld [vmem:[%s1378] sm:$0xff]
        %v1380 = vld [vmem:[%s739] sm:$0xf]
        %v1381 = vld [vmem:[%s739 + $0x4] sm:$0xf]
        %v1382 = vld [vmem:[%s739 + $0x8] sm:$0xf]
        %v1383 = vld [vmem:[%s739 + $0xc] sm:$0xf]
        %v1384 = vld [vmem:[%s739 + $0x10] sm:$0xf]
        %v1385 = vld [vmem:[%s739 + $0x14] sm:$0xf]
        %v1386 = vld [vmem:[%s739 + $0x18] sm:$0xf]
        %v1387 = vld [vmem:[%s739 + $0x1c] sm:$0xf]
        %v1388 = vld [vmem:[%s739 + $0x20] sm:$0xf]
        %v1389 = vld [vmem:[%s739 + $0x24] sm:$0xf]
        %v1390 = vld [vmem:[%s739 + $0x28] sm:$0xf]
        %v1391 = vld [vmem:[%s739 + $0x2c] sm:$0xf]
        %v1392 = vld [vmem:[%s739 + $0x30] sm:$0xf]
        %v1393 = vld [vmem:[%s739 + $0x34] sm:$0xf]
        %v1394 = vld [vmem:[%s739 + $0x38] sm:$0xf]
        %v1395 = vld [vmem:[%s739 + $0x3c] sm:$0xf]
        %v1412 = vunpack.c.l.b16 %v1380
        %v1413 = vunpack.c.l.b16 %v1381
        %v1414 = vunpack.c.l.b16 %v1382
        %v1415 = vunpack.c.l.b16 %v1383
        %v1416 = vunpack.c.l.b16 %v1384
        %v1417 = vunpack.c.l.b16 %v1385
        %v1418 = vunpack.c.l.b16 %v1386
        %v1419 = vunpack.c.l.b16 %v1387
        %v1420 = vunpack.c.l.b16 %v1388
        %v1421 = vunpack.c.l.b16 %v1389
        %v1422 = vunpack.c.l.b16 %v1390
        %v1423 = vunpack.c.l.b16 %v1391
        %v1424 = vunpack.c.l.b16 %v1392
        %v1425 = vunpack.c.l.b16 %v1393
        %v1426 = vunpack.c.l.b16 %v1394
        %v1427 = vunpack.c.l.b16 %v1395
        %v1428 = vpack.c.b16 %v1413, %v1412
        %v1429 = vpack.c.b16 %v1415, %v1414
        %v1430 = vpack.c.b16 %v1417, %v1416
        %v1431 = vpack.c.b16 %v1419, %v1418
        %v1432 = vpack.c.b16 %v1421, %v1420
        %v1433 = vpack.c.b16 %v1423, %v1422
        %v1434 = vpack.c.b16 %v1425, %v1424
        %v1435 = vpack.c.b16 %v1427, %v1426
        %1444 = vmatpush.bf16.msra.mxu0 %v1435
        %1445 = vmatpush.bf16.msra.mxu0 %v1434
        %1446 = vmatpush.bf16.msra.mxu0 %v1433
        %1447 = vmatpush.bf16.msra.mxu0 %v1432
        %1448 = vmatpush.bf16.msra.mxu0 %v1431
        %1449 = vmatpush.bf16.msra.mxu0 %v1430
        %1450 = vmatpush.bf16.msra.mxu0 %v1429
        %1451 = vmatpush.bf16.msra.mxu0 %v1428
        %1452 = vmatmul.bf16.gmra.mxu0 %v1377
        %v1453 = vpop.f32.mrf.mxu0
        %v1454 = vadd.f32 0.0, %v1453
        %v1455 = vpop.f32.mrf.mxu0
        %1456 = vdwg.mxu0
        %v1457 = vadd.f32 %v1379, %v1454
        %1458 = vst.msk [vmem:[%s1378] sm:$0xff] %vm1359, %v1457
        %p1459 = scmp.eq.s32.totalorder %s39, 1
        // Predicated region
        $region150: #{tpu_custom_call.1} parent=124 // pred_check
          %p1460 = pneg %p1459
        $region151: #{tpu_custom_call.1} parent=124 // pred_check_branch
          %1462 = sbr.rel (%p1460) target = $region153
        $region152: #{tpu_custom_call.1} parent=124 // pred_region
          %s1463 = scalar_lea.vmem [#allocation4], %s742
          %v1464 = vld [vmem:[%s1463] sm:$0xff]
          %v1465 = vld [vmem:[%s1378] sm:$0xff]
          %v1466 = vadd.f32 %v1464, %v1465
          %v1467 = vld [vmem:[%s14] sm:$0x1]
          %v1469 = vperm.slane %v1467, 0
          %v1471 = vadd.f32 %v1466, %v1469
          %v1472 = vld [vmem:[%s15] sm:$0x1]
          %v1473 = vld [vmem:[%s16] sm:$0x1]
          %v1474 = vsel %vm1359, %v1471, 0.0
          %1475 = vadd.xlane.f32.xlu0 %v1474
          %v1476 = vpop.xlane.xlu0 %1475
          %v1477 = vrcp.pop 64.0
          %v1478 = vmul.f32 64.0, %v1477
          %v1479 = vsub.f32 1.0, %v1478
          %v1480 = vmul.f32 %v1477, %v1479
          %v1481 = vadd.f32 %v1477, %v1480
          %vm1482 = vweird.f32 %v1477
          %v1483 = vsel %vm1482, %v1477, %v1481
          %v1484 = vmul.f32 %v1476, %v1483
          %v1485 = vsub.f32 %v1471, %v1484
          %v1486 = vmul.f32 %v1485, %v1485
          %v1487 = vsel %vm1359, %v1486, 0.0
          %1488 = vadd.xlane.f32.xlu0 %v1487
          %v1489 = vpop.xlane.xlu0 %1488
          %v1490 = vmul.f32 %v1489, %v1483
          %v1491 = vadd.f32 %v1490, 1e-05
          %v1492 = vrsqrt.pop %v1491
          %v1493 = vmul.f32 %v1492, %v1491
          %v1494 = vmul.f32 %v1493, %v1492
          %v1495 = vmul.f32 0.5, %v1494
          %v1496 = vsub.f32 1.5, %v1495
          %v1497 = vmul.f32 %v1492, %v1496
          %vm1498 = vweird.f32 %v1491
          %vm1499 = vweird.f32 %v1492
          %vm1500 = vmor %vm1498, %vm1499
          %v1501 = vsel %vm1500, %v1492, %v1497
          %v1502 = vmul.f32 %v1485, %v1501
          %v1504 = vperm.slane %v1472, 0
          %v1506 = vmul.f32 %v1502, %v1504
          %v1508 = vperm.slane %v1473, 0
          %v1510 = vadd.f32 %v1506, %v1508
          %1511 = vst.msk [vmem:[%s726] sm:$0xff] %vm1359, %v1510
        $region153: #{tpu_custom_call.1} parent=124 // pred_fallthru
          _
        %s1512 = sand.u32 %s439, 1
        %s1513 = scalar_lea.sflag [#allocation10], %s1512
        %s1514 = sand.u32 %s439, 1
        %s1515 = smul.addr %s1514, 8
        %s1516 = scalar_lea.vmem [#allocation15], %s1515
        // Predicated region
        $region154: #{tpu_custom_call.1} parent=124 // pred_check
          %p1517 = pneg %p449
        $region155: #{tpu_custom_call.1} parent=124 // pred_check_branch
          %1519 = sbr.rel (%p1517) target = $region157
        $region156: #{tpu_custom_call.1} parent=124 // pred_region
          %1521 = vsyncadd %s1513, 0
          %s1522 = smul.addr %s38, 2
          %s1523 = sadd.s32 %s40, %s1522
          %s1524 = smul.addr %s1523, 8
          %s1525 = scalar_lea.hbm %s17, %s1524
          %s1527 = sshll.u32 %s1516, 4
          %s1528 = int_to_ptr.vmem [resolvable:$true] %s1527
          %s1529 = sshll.u32 %s1525, 4
          %s1530 = int_to_ptr.hbm [resolvable:$true] %s1529
          %1532 = dma.vmem_to_hbm [thread:$0]  %s1528, 128, %s1530, %s1513
        $region157: #{tpu_custom_call.1} parent=124 // pred_fallthru
          _
      $region125: #{tpu_custom_call.1} parent=5 // pred_fallthru
        _
      %p1533 = scmp.le.s32.totalorder 2, %s28
      // Predicated region
      $region158: #{tpu_custom_call.1} parent=5 // pred_check
        %p1534 = pneg %p1533
      $region159: #{tpu_custom_call.1} parent=5 // pred_check_branch
        %1536 = sbr.rel (%p1534) target = $region161
      $region160: #{tpu_custom_call.1} parent=5 // pred_region
        %s1537 = ssub.s32 %s28, 2
        // Predicated region
        $region162: #{tpu_custom_call.1} parent=160 // pred_check
          %p1538 = pneg %p455
        $region163: #{tpu_custom_call.1} parent=160 // pred_check_branch
          %1540 = sbr.rel (%p1538) target = $region165
        $region164: #{tpu_custom_call.1} parent=160 // pred_region
          %s1541 = sand.u32 %s440, 1
          %s1542 = scalar_lea.sflag [#allocation10], %s1541
          %s1543 = sand.u32 %s440, 1
          %s1544 = smul.addr %s1543, 8
          %s1545 = scalar_lea.vmem [#allocation15], %s1544
          %1547 = dma.done %s1542, 128
        $region165: #{tpu_custom_call.1} parent=160 // pred_fallthru
          _
      $region161: #{tpu_custom_call.1} parent=5 // pred_fallthru
        _
    $region6: #{tpu_custom_call.1} parent=1 // loop_footer
      %s32 = sadd.s32 1, %s28
    $region7: #{tpu_custom_call.1} parent=1 // loop_footer_branch
      %27 = sbr.rel target = $region3
    $region8: #{tpu_custom_call.1} parent=1 // loop_exit
      _
    %1548 = vsyncpa [#allocation9], 1
    %s1549 = scalar_lea.sflag [#allocation9], 1
    %1550 = vsyncpa %s1549, 1
    %1551 = vsyncpa [#allocation12], 1
    %1552 = vsyncpa [#allocation10], 1
    %s1553 = scalar_lea.sflag [#allocation10], 1
    %1554 = vsyncpa %s1553, 1

// kernel: tpu_custom_call.1
$region0: #{tpu_custom_call.1}
  #allocation0 [shape = 'u32[]', space=smem, size = 0x4, offset = 0x4, fixed_abs, tag = 'smem constant byte address 0x4 - core index']
  #allocation1 [shape = 'u32[72,128]{1,0:T(1,128)}', space=vmem, size = 0x9000, scoped, tag = 'internal scratch']
  #allocation2 [shape = 'bf16[16,64]{1,0:T(8,128)(2,1)}', space=vmem, size = 0x1000, scoped, tag = 'scratch operand']
  #allocation3 [shape = 'bf16[16,64]{1,0:T(8,128)(2,1)}', space=vmem, size = 0x1000, scoped, tag = 'scratch operand']
  #allocation4 [shape = 'f32[2,8,64]{2,1,0:T(8,128)}', space=vmem, size = 0x2000, scoped, tag = 'scratch operand']
  #allocation5 [shape = 'bf16[2,8,64]{2,1,0:T(8,128)(2,1)}', space=vmem, size = 0x1000, scoped, tag = 'scratch operand']
  #allocation6 [shape = 'f32[2,8,64]{2,1,0:T(8,128)}', space=vmem, size = 0x2000, scoped, tag = 'scratch operand']
  #allocation7 [shape = 'bf16[8,64]{1,0:T(8,128)(2,1)}', space=vmem, size = 0x800, scoped, tag = 'scratch operand']
  %s0 = inlined_call_operand.vmem [shape: f32[2,16,64], index: 0, kind: input, shape index: {}]
  %s1 = inlined_call_operand.vmem [shape: bf16[64,64], index: 1, kind: input, shape index: {}]
  %s2 = inlined_call_operand.hbm [shape: f32[1,64], index: 2, kind: input, shape index: {}]
  %s3 = inlined_call_operand.vmem [shape: bf16[64,64], index: 3, kind: input, shape index: {}]
  %s4 = inlined_call_operand.hbm [shape: f32[1,64], index: 4, kind: input, shape index: {}]
  %s5 = inlined_call_operand.vmem [shape: bf16[64,64], index: 5, kind: input, shape index: {}]
  %s6 = inlined_call_operand.vmem [shape: f32[1,64], index: 6, kind: input, shape index: {}]
  %s7 = inlined_call_operand.hbm [shape: bf16[64,64], index: 7, kind: input, shape index: {}]
  %s8 = inlined_call_operand.vmem [shape: f32[1,64], index: 8, kind: input, shape index: {}]
  %s9 = inlined_call_operand.vmem [shape: f32[1,64], index: 9, kind: input, shape index: {}]
  %s10 = inlined_call_operand.vmem [shape: f32[1,64], index: 10, kind: input, shape index: {}]
  %s11 = inlined_call_operand.vmem [shape: bf16[64,256], index: 11, kind: input, shape index: {}]
  %s12 = inlined_call_operand.vmem [shape: f32[1,256], index: 12, kind: input, shape index: {}]
  %s13 = inlined_call_operand.vmem [shape: bf16[256,64], index: 13, kind: input, shape index: {}]
  %s14 = inlined_call_operand.vmem [shape: f32[1,64], index: 14, kind: input, shape index: {}]
  %s15 = inlined_call_operand.vmem [shape: f32[1,64], index: 15, kind: input, shape index: {}]
  %s16 = inlined_call_operand.vmem [shape: f32[1,64], index: 16, kind: input, shape index: {}]
  %s17 = inlined_call_operand.hbm [shape: f32[2,16,64], index: 17, kind: output, shape index: {}]
  %s18 = sld [smem:[#allocation0]]
  $region166: #{tpu_custom_call.1} parent=0
    _
  %s20 = ssub.s32 1, %s18
  %s21 = scalar_select 0, %s20, %s18
  $region1: #{tpu_custom_call.1} parent=0
    #allocation8 [shape = 'u8[512]{0}', space=vmem, size = 0x400, scoped, tag = 'input window, operand 2, single buffered']
    #allocation9 [shape = 's32[2]{0}', space=sflag, size = 0x8, scoped, tag = 'scoped memory for tpu_custom_call.1']
    #allocation10 [shape = 's32[2]{0}', space=sflag, size = 0x8, scoped, tag = 'scoped memory for tpu_custom_call.1']
    #allocation11 [shape = 'u8[512]{0}', space=vmem, size = 0x400, scoped, tag = 'input window, operand 4, single buffered']
    #allocation12 [shape = 's32[1]{0}', space=sflag, size = 0x4, scoped, tag = 'scoped memory for tpu_custom_call.1']
    #allocation13 [shape = 'u8[16384]{0}', space=vmem, size = 0x4000, scoped, tag = 'input window, operand 7, single buffered']
    #allocation14 [shape = 'u8[32768]{0}', space=vmem, size = 0x8000, scoped, tag = 'input window, operand 11']
    #allocation15 [shape = 'u8[8192]{0}', space=vmem, size = 0x2000, scoped, tag = 'output window, operand 0']
    %22 = vsyncpa [#allocation9], 0
    %23 = vsyncpa [#allocation12], 0
    %24 = vsyncpa [#allocation10], 0
    %s25 = scalar_lea.sflag [#allocation10], 1
    %26 = vsyncpa %s25, 0
    loop: start=0, step=1, limit=10
    $region2: #{tpu_custom_call.1} parent=1 // loop_pre_header
      _
    $region3: #{tpu_custom_call.1} parent=1 // loop_header
      %s28 = sphi 0, %s32
      %p29 = scmp.ge.s32.totalorder %s28, 10
      %s35 = sphi 0, %s54
      %s36 = sphi 0, %s50
      %s37 = sphi 0, %s46
      %s38 = sphi 0, %s35
      %s39 = sphi 0, %s36
      %s40 = sphi 0, %s37
      %s41 = sphi 0, %s38
      %s42 = sphi 0, %s39
      %s43 = sphi 0, %s40
      %s57 = sphi 0, %s59
      %s60 = sphi 0, %s57
      %s61 = sphi 0, %s60
      %s77 = sphi 0, %s61
      %s81 = sphi 0, %s81
      %s83 = sphi 0, %s81
      %s84 = sphi 0, %s83
      %s98 = sphi 0, %s84
      %s102 = sphi 0, %s102
      %s104 = sphi 0, %s102
      %s105 = sphi 0, %s104
      %s119 = sphi 0, %s105
      %s123 = sphi 0, %s123
      %s125 = sphi 0, %s123
      %s126 = sphi 0, %s125
      %s140 = sphi 0, %s126
      %s144 = sphi 0, %s144
      %s146 = sphi 0, %s144
      %s147 = sphi 0, %s146
      %s161 = sphi 0, %s147
      %s165 = sphi 0, %s165
      %s167 = sphi 0, %s165
      %s168 = sphi 0, %s167
      %s182 = sphi 0, %s168
      %s186 = sphi 0, %s186
      %s188 = sphi 0, %s186
      %s189 = sphi 0, %s188
      %s203 = sphi 0, %s189
      %s207 = sphi 0, %s207
      %s209 = sphi 0, %s207
      %s210 = sphi 0, %s209
      %s224 = sphi 0, %s210
      %s228 = sphi 0, %s228
      %s230 = sphi 0, %s228
      %s231 = sphi 0, %s230
      %s245 = sphi 0, %s231
      %s249 = sphi 0, %s249
      %s251 = sphi 0, %s249
      %s252 = sphi 0, %s251
      %s266 = sphi 0, %s252
      %s270 = sphi 0, %s270
      %s272 = sphi 0, %s270
      %s273 = sphi 0, %s272
      %s287 = sphi 0, %s273
      %s293 = sphi 0, %s295
      %s296 = sphi 0, %s293
      %s297 = sphi 0, %s296
      %s313 = sphi 0, %s297
      %s319 = sphi 0, %s321
      %s322 = sphi 0, %s319
      %s323 = sphi 0, %s322
      %s339 = sphi 0, %s323
      %s345 = sphi 0, %s347
      %s348 = sphi 0, %s345
      %s349 = sphi 0, %s348
      %s365 = sphi 0, %s349
      %s369 = sphi 0, %s369
      %s371 = sphi 0, %s369
      %s372 = sphi 0, %s371
      %s386 = sphi 0, %s372
      %s390 = sphi 0, %s390
      %s392 = sphi 0, %s390
      %s393 = sphi 0, %s392
      %s407 = sphi 0, %s393
      %s411 = sphi 0, %s411
      %s413 = sphi 0, %s411
      %s414 = sphi 0, %s413
      %s428 = sphi 0, %s414
      %s436 = sphi 0, %s438
      %s439 = sphi 0, %s436
      %s440 = sphi 0, %s439
      %s456 = sphi 0, %s440
    $region4: #{tpu_custom_call.1} parent=1 // loop_header_branch
      %31 = sbr.rel (%p29) target = $region8
    $region5: #{tpu_custom_call.1} parent=1 // loop_body
      %s33 = ssub.s32 %s28, 1
      %s34 = ssub.s32 %s28, 2
      %s44 = sadd.s32 1, %s37
      %p45 = scmp.ge.s32.totalorder %s44, 2
      %s46 = scalar_select %p45, 0, %s44
      %s47 = sadd.s32 1, %s36
      %s48 = scalar_select %p45, %s47, %s36
      %p49 = scmp.ge.s32.totalorder %s48, 2
      %s50 = scalar_select %p49, 0, %s48
      %s51 = sadd.s32 1, %s35
      %s52 = scalar_select %p49, %s51, %s35
      %p53 = scmp.ge.s32.totalorder %s52, 2
      %s54 = scalar_select %p53, 0, %s52
      %s55 = ssub.s32 %s35, %s54
      %p56 = scmp.eq.s32.totalorder %s55, 0
      %s58 = sadd.s32 %s57, 1
      %s59 = scalar_select %p56, %s57, %s58
      %p62 = pneg %p56
      %p63 = scmp.eq.s32.totalorder %s28, 7
      %p64 = por %p62, %p63
      %p65 = scmp.ne.s32.totalorder %s57, %s60
      %p66 = scmp.eq.s32.totalorder %s28, 0
      %p67 = por %p65, %p66
      %p68 = scmp.ne.s32.totalorder %s57, %s60
      %p69 = scmp.eq.s32.totalorder %s33, 7
      %p70 = por %p68, %p69
      %p71 = scmp.ne.s32.totalorder %s60, %s61
      %p72 = scmp.eq.s32.totalorder %s33, 0
      %p73 = por %p71, %p72
      %p74 = scmp.ne.s32.totalorder %s60, %s61
      %p75 = scmp.eq.s32.totalorder %s34, 7
      %p76 = por %p74, %p75
      %p78 = scmp.ne.s32.totalorder %s61, %s77
      %p79 = scmp.eq.s32.totalorder %s34, 0
      %p80 = por %p78, %p79
      %s82 = sadd.s32 %s81, 1
      %p85 = scmp.eq.s32.totalorder %s28, 7
      %p86 = scmp.ne.s32.totalorder %s81, %s83
      %p87 = scmp.eq.s32.totalorder %s28, 0
      %p88 = por %p86, %p87
      %p89 = scmp.ne.s32.totalorder %s81, %s83
      %p90 = scmp.eq.s32.totalorder %s33, 7
      %p91 = por %p89, %p90
      %p92 = scmp.ne.s32.totalorder %s83, %s84
      %p93 = scmp.eq.s32.totalorder %s33, 0
      %p94 = por %p92, %p93
      %p95 = scmp.ne.s32.totalorder %s83, %s84
      %p96 = scmp.eq.s32.totalorder %s34, 7
      %p97 = por %p95, %p96
      %p99 = scmp.ne.s32.totalorder %s84, %s98
      %p100 = scmp.eq.s32.totalorder %s34, 0
      %p101 = por %p99, %p100
      %s103 = sadd.s32 %s102, 1
      %p106 = scmp.eq.s32.totalorder %s28, 7
      %p107 = scmp.ne.s32.totalorder %s102, %s104
      %p108 = scmp.eq.s32.totalorder %s28, 0
      %p109 = por %p107, %p108
      %p110 = scmp.ne.s32.totalorder %s102, %s104
      %p111 = scmp.eq.s32.totalorder %s33, 7
      %p112 = por %p110, %p111
      %p113 = scmp.ne.s32.totalorder %s104, %s105
      %p114 = scmp.eq.s32.totalorder %s33, 0
      %p115 = por %p113, %p114
      %p116 = scmp.ne.s32.totalorder %s104, %s105
      %p117 = scmp.eq.s32.totalorder %s34, 7
      %p118 = por %p116, %p117
      %p120 = scmp.ne.s32.totalorder %s105, %s119
      %p121 = scmp.eq.s32.totalorder %s34, 0
      %p122 = por %p120, %p121
      %s124 = sadd.s32 %s123, 1
      %p127 = scmp.eq.s32.totalorder %s28, 7
      %p128 = scmp.ne.s32.totalorder %s123, %s125
      %p129 = scmp.eq.s32.totalorder %s28, 0
      %p130 = por %p128, %p129
      %p131 = scmp.ne.s32.totalorder %s123, %s125
      %p132 = scmp.eq.s32.totalorder %s33, 7
      %p133 = por %p131, %p132
      %p134 = scmp.ne.s32.totalorder %s125, %s126
      %p135 = scmp.eq.s32.totalorder %s33, 0
      %p136 = por %p134, %p135
      %p137 = scmp.ne.s32.totalorder %s125, %s126
      %p138 = scmp.eq.s32.totalorder %s34, 7
      %p139 = por %p137, %p138
      %p141 = scmp.ne.s32.totalorder %s126, %s140
      %p142 = scmp.eq.s32.totalorder %s34, 0
      %p143 = por %p141, %p142
      %s145 = sadd.s32 %s144, 1
      %p148 = scmp.eq.s32.totalorder %s28, 7
      %p149 = scmp.ne.s32.totalorder %s144, %s146
      %p150 = scmp.eq.s32.totalorder %s28, 0
      %p151 = por %p149, %p150
      %p152 = scmp.ne.s32.totalorder %s144, %s146
      %p153 = scmp.eq.s32.totalorder %s33, 7
      %p154 = por %p152, %p153
      %p155 = scmp.ne.s32.totalorder %s146, %s147
      %p156 = scmp.eq.s32.totalorder %s33, 0
      %p157 = por %p155, %p156
      %p158 = scmp.ne.s32.totalorder %s146, %s147
      %p159 = scmp.eq.s32.totalorder %s34, 7
      %p160 = por %p158, %p159
      %p162 = scmp.ne.s32.totalorder %s147, %s161
      %p163 = scmp.eq.s32.totalorder %s34, 0
      %p164 = por %p162, %p163
      %s166 = sadd.s32 %s165, 1
      %p169 = scmp.eq.s32.totalorder %s28, 7
      %p170 = scmp.ne.s32.totalorder %s165, %s167
      %p171 = scmp.eq.s32.totalorder %s28, 0
      %p172 = por %p170, %p171
      %p173 = scmp.ne.s32.totalorder %s165, %s167
      %p174 = scmp.eq.s32.totalorder %s33, 7
      %p175 = por %p173, %p174
      %p176 = scmp.ne.s32.totalorder %s167, %s168
      %p177 = scmp.eq.s32.totalorder %s33, 0
      %p178 = por %p176, %p177
      %p179 = scmp.ne.s32.totalorder %s167, %s168
      %p180 = scmp.eq.s32.totalorder %s34, 7
      %p181 = por %p179, %p180
      %p183 = scmp.ne.s32.totalorder %s168, %s182
      %p184 = scmp.eq.s32.totalorder %s34, 0
      %p185 = por %p183, %p184
      %s187 = sadd.s32 %s186, 1
      %p190 = scmp.eq.s32.totalorder %s28, 7
      %p191 = scmp.ne.s32.totalorder %s186, %s188
      %p192 = scmp.eq.s32.totalorder %s28, 0
      %p193 = por %p191, %p192
      %p194 = scmp.ne.s32.totalorder %s186, %s188
      %p195 = scmp.eq.s32.totalorder %s33, 7
      %p196 = por %p194, %p195
      %p197 = scmp.ne.s32.totalorder %s188, %s189
      %p198 = scmp.eq.s32.totalorder %s33, 0
      %p199 = por %p197, %p198
      %p200 = scmp.ne.s32.totalorder %s188, %s189
      %p201 = scmp.eq.s32.totalorder %s34, 7
      %p202 = por %p200, %p201
      %p204 = scmp.ne.s32.totalorder %s189, %s203
      %p205 = scmp.eq.s32.totalorder %s34, 0
      %p206 = por %p204, %p205
      %s208 = sadd.s32 %s207, 1
      %p211 = scmp.eq.s32.totalorder %s28, 7
      %p212 = scmp.ne.s32.totalorder %s207, %s209
      %p213 = scmp.eq.s32.totalorder %s28, 0
      %p214 = por %p212, %p213
      %p215 = scmp.ne.s32.totalorder %s207, %s209
      %p216 = scmp.eq.s32.totalorder %s33, 7
      %p217 = por %p215, %p216
      %p218 = scmp.ne.s32.totalorder %s209, %s210
      %p219 = scmp.eq.s32.totalorder %s33, 0
      %p220 = por %p218, %p219
      %p221 = scmp.ne.s32.totalorder %s209, %s210
      %p222 = scmp.eq.s32.totalorder %s34, 7
      %p223 = por %p221, %p222
      %p225 = scmp.ne.s32.totalorder %s210, %s224
      %p226 = scmp.eq.s32.totalorder %s34, 0
      %p227 = por %p225, %p226
      %s229 = sadd.s32 %s228, 1
      %p232 = scmp.eq.s32.totalorder %s28, 7
      %p233 = scmp.ne.s32.totalorder %s228, %s230
      %p234 = scmp.eq.s32.totalorder %s28, 0
      %p235 = por %p233, %p234
      %p236 = scmp.ne.s32.totalorder %s228, %s230
      %p237 = scmp.eq.s32.totalorder %s33, 7
      %p238 = por %p236, %p237
      %p239 = scmp.ne.s32.totalorder %s230, %s231
      %p240 = scmp.eq.s32.totalorder %s33, 0
      %p241 = por %p239, %p240
      %p242 = scmp.ne.s32.totalorder %s230, %s231
      %p243 = scmp.eq.s32.totalorder %s34, 7
      %p244 = por %p242, %p243
      %p246 = scmp.ne.s32.totalorder %s231, %s245
      %p247 = scmp.eq.s32.totalorder %s34, 0
      %p248 = por %p246, %p247
      %s250 = sadd.s32 %s249, 1
      %p253 = scmp.eq.s32.totalorder %s28, 7
      %p254 = scmp.ne.s32.totalorder %s249, %s251
      %p255 = scmp.eq.s32.totalorder %s28, 0
      %p256 = por %p254, %p255
      %p257 = scmp.ne.s32.totalorder %s249, %s251
      %p258 = scmp.eq.s32.totalorder %s33, 7
      %p259 = por %p257, %p258
      %p260 = scmp.ne.s32.totalorder %s251, %s252
      %p261 = scmp.eq.s32.totalorder %s33, 0
      %p262 = por %p260, %p261
      %p263 = scmp.ne.s32.totalorder %s251, %s252
      %p264 = scmp.eq.s32.totalorder %s34, 7
      %p265 = por %p263, %p264
      %p267 = scmp.ne.s32.totalorder %s252, %s266
      %p268 = scmp.eq.s32.totalorder %s34, 0
      %p269 = por %p267, %p268
      %s271 = sadd.s32 %s270, 1
      %p274 = scmp.eq.s32.totalorder %s28, 7
      %p275 = scmp.ne.s32.totalorder %s270, %s272
      %p276 = scmp.eq.s32.totalorder %s28, 0
      %p277 = por %p275, %p276
      %p278 = scmp.ne.s32.totalorder %s270, %s272
      %p279 = scmp.eq.s32.totalorder %s33, 7
      %p280 = por %p278, %p279
      %p281 = scmp.ne.s32.totalorder %s272, %s273
      %p282 = scmp.eq.s32.totalorder %s33, 0
      %p283 = por %p281, %p282
      %p284 = scmp.ne.s32.totalorder %s272, %s273
      %p285 = scmp.eq.s32.totalorder %s34, 7
      %p286 = por %p284, %p285
      %p288 = scmp.ne.s32.totalorder %s273, %s287
      %p289 = scmp.eq.s32.totalorder %s34, 0
      %p290 = por %p288, %p289
      %s291 = ssub.s32 %s36, %s50
      %p292 = scmp.eq.s32.totalorder %s291, 0
      %s294 = sadd.s32 %s293, 1
      %s295 = scalar_select %p292, %s293, %s294
      %p298 = pneg %p292
      %p299 = scmp.eq.s32.totalorder %s28, 7
      %p300 = por %p298, %p299
      %p301 = scmp.ne.s32.totalorder %s293, %s296
      %p302 = scmp.eq.s32.totalorder %s28, 0
      %p303 = por %p301, %p302
      %p304 = scmp.ne.s32.totalorder %s293, %s296
      %p305 = scmp.eq.s32.totalorder %s33, 7
      %p306 = por %p304, %p305
      %p307 = scmp.ne.s32.totalorder %s296, %s297
      %p308 = scmp.eq.s32.totalorder %s33, 0
      %p309 = por %p307, %p308
      %p310 = scmp.ne.s32.totalorder %s296, %s297
      %p311 = scmp.eq.s32.totalorder %s34, 7
      %p312 = por %p310, %p311
      %p314 = scmp.ne.s32.totalorder %s297, %s313
      %p315 = scmp.eq.s32.totalorder %s34, 0
      %p316 = por %p314, %p315
      %s317 = ssub.s32 %s36, %s50
      %p318 = scmp.eq.s32.totalorder %s317, 0
      %s320 = sadd.s32 %s319, 1
      %s321 = scalar_select %p318, %s319, %s320
      %p324 = pneg %p318
      %p325 = scmp.eq.s32.totalorder %s28, 7
      %p326 = por %p324, %p325
      %p327 = scmp.ne.s32.totalorder %s319, %s322
      %p328 = scmp.eq.s32.totalorder %s28, 0
      %p329 = por %p327, %p328
      %p330 = scmp.ne.s32.totalorder %s319, %s322
      %p331 = scmp.eq.s32.totalorder %s33, 7
      %p332 = por %p330, %p331
      %p333 = scmp.ne.s32.totalorder %s322, %s323
      %p334 = scmp.eq.s32.totalorder %s33, 0
      %p335 = por %p333, %p334
      %p336 = scmp.ne.s32.totalorder %s322, %s323
      %p337 = scmp.eq.s32.totalorder %s34, 7
      %p338 = por %p336, %p337
      %p340 = scmp.ne.s32.totalorder %s323, %s339
      %p341 = scmp.eq.s32.totalorder %s34, 0
      %p342 = por %p340, %p341
      %s343 = ssub.s32 %s36, %s50
      %p344 = scmp.eq.s32.totalorder %s343, 0
      %s346 = sadd.s32 %s345, 1
      %s347 = scalar_select %p344, %s345, %s346
      %p350 = pneg %p344
      %p351 = scmp.eq.s32.totalorder %s28, 7
      %p352 = por %p350, %p351
      %p353 = scmp.ne.s32.totalorder %s345, %s348
      %p354 = scmp.eq.s32.totalorder %s28, 0
      %p355 = por %p353, %p354
      %p356 = scmp.ne.s32.totalorder %s345, %s348
      %p357 = scmp.eq.s32.totalorder %s33, 7
      %p358 = por %p356, %p357
      %p359 = scmp.ne.s32.totalorder %s348, %s349
      %p360 = scmp.eq.s32.totalorder %s33, 0
      %p361 = por %p359, %p360
      %p362 = scmp.ne.s32.totalorder %s348, %s349
      %p363 = scmp.eq.s32.totalorder %s34, 7
      %p364 = por %p362, %p363
      %p366 = scmp.ne.s32.totalorder %s349, %s365
      %p367 = scmp.eq.s32.totalorder %s34, 0
      %p368 = por %p366, %p367
      %s370 = sadd.s32 %s369, 1
      %p373 = scmp.eq.s32.totalorder %s28, 7
      %p374 = scmp.ne.s32.totalorder %s369, %s371
      %p375 = scmp.eq.s32.totalorder %s28, 0
      %p376 = por %p374, %p375
      %p377 = scmp.ne.s32.totalorder %s369, %s371
      %p378 = scmp.eq.s32.totalorder %s33, 7
      %p379 = por %p377, %p378
      %p380 = scmp.ne.s32.totalorder %s371, %s372
      %p381 = scmp.eq.s32.totalorder %s33, 0
      %p382 = por %p380, %p381
      %p383 = scmp.ne.s32.totalorder %s371, %s372
      %p384 = scmp.eq.s32.totalorder %s34, 7
      %p385 = por %p383, %p384
      %p387 = scmp.ne.s32.totalorder %s372, %s386
      %p388 = scmp.eq.s32.totalorder %s34, 0
      %p389 = por %p387, %p388
      %s391 = sadd.s32 %s390, 1
      %p394 = scmp.eq.s32.totalorder %s28, 7
      %p395 = scmp.ne.s32.totalorder %s390, %s392
      %p396 = scmp.eq.s32.totalorder %s28, 0
      %p397 = por %p395, %p396
      %p398 = scmp.ne.s32.totalorder %s390, %s392
      %p399 = scmp.eq.s32.totalorder %s33, 7
      %p400 = por %p398, %p399
      %p401 = scmp.ne.s32.totalorder %s392, %s393
      %p402 = scmp.eq.s32.totalorder %s33, 0
      %p403 = por %p401, %p402
      %p404 = scmp.ne.s32.totalorder %s392, %s393
      %p405 = scmp.eq.s32.totalorder %s34, 7
      %p406 = por %p404, %p405
      %p408 = scmp.ne.s32.totalorder %s393, %s407
      %p409 = scmp.eq.s32.totalorder %s34, 0
      %p410 = por %p408, %p409
      %s412 = sadd.s32 %s411, 1
      %p415 = scmp.eq.s32.totalorder %s28, 7
      %p416 = scmp.ne.s32.totalorder %s411, %s413
      %p417 = scmp.eq.s32.totalorder %s28, 0
      %p418 = por %p416, %p417
      %p419 = scmp.ne.s32.totalorder %s411, %s413
      %p420 = scmp.eq.s32.totalorder %s33, 7
      %p421 = por %p419, %p420
      %p422 = scmp.ne.s32.totalorder %s413, %s414
      %p423 = scmp.eq.s32.totalorder %s33, 0
      %p424 = por %p422, %p423
      %p425 = scmp.ne.s32.totalorder %s413, %s414
      %p426 = scmp.eq.s32.totalorder %s34, 7
      %p427 = por %p425, %p426
      %p429 = scmp.ne.s32.totalorder %s414, %s428
      %p430 = scmp.eq.s32.totalorder %s34, 0
      %p431 = por %p429, %p430
      %s432 = ssub.s32 %s35, %s54
      %s433 = ssub.s32 %s37, %s46
      %s434 = sor.u32 %s432, %s433
      %p435 = scmp.eq.s32.totalorder %s434, 0
      %s437 = sadd.s32 %s436, 1
      %s438 = scalar_select %p435, %s436, %s437
      %p441 = pneg %p435
      %p442 = scmp.eq.s32.totalorder %s28, 7
      %p443 = por %p441, %p442
      %p444 = scmp.ne.s32.totalorder %s436, %s439
      %p445 = scmp.eq.s32.totalorder %s28, 0
      %p446 = por %p444, %p445
      %p447 = scmp.ne.s32.totalorder %s436, %s439
      %p448 = scmp.eq.s32.totalorder %s33, 7
      %p449 = por %p447, %p448
      %p450 = scmp.ne.s32.totalorder %s439, %s440
      %p451 = scmp.eq.s32.totalorder %s33, 0
      %p452 = por %p450, %p451
      %p453 = scmp.ne.s32.totalorder %s439, %s440
      %p454 = scmp.eq.s32.totalorder %s34, 7
      %p455 = por %p453, %p454
      %p457 = scmp.ne.s32.totalorder %s440, %s456
      %p458 = scmp.eq.s32.totalorder %s34, 0
      %p459 = por %p457, %p458
      %p460 = scmp.le.s32.totalorder 1, %s28
      %p461 = scmp.lt.s32.totalorder %s28, 9
      %p462 = pnand %p460, %p461
      %p463 = pneg %p462
      // Predicated region
      $region9: #{tpu_custom_call.1} parent=5 // pred_check
        _
      $region10: #{tpu_custom_call.1} parent=5 // pred_check_branch
        %465 = sbr.rel (%p462) target = $region12
      $region11: #{tpu_custom_call.1} parent=5 // pred_region
        %s466 = ssub.s32 %s28, 1
        // Predicated region
        $region13: #{tpu_custom_call.1} parent=11 // pred_check
          %p467 = pneg %p94
        $region14: #{tpu_custom_call.1} parent=11 // pred_check_branch
          %469 = sbr.rel (%p467) target = $region16
        $region15: #{tpu_custom_call.1} parent=11 // pred_region
          _
        $region16: #{tpu_custom_call.1} parent=11 // pred_fallthru
          _
        // Predicated region
        $region17: #{tpu_custom_call.1} parent=11 // pred_check
          %p470 = pneg %p115
        $region18: #{tpu_custom_call.1} parent=11 // pred_check_branch
          %472 = sbr.rel (%p470) target = $region20
        $region19: #{tpu_custom_call.1} parent=11 // pred_region
          %474 = vsyncadd [#allocation9], 0
          %s476 = sshll.u32 %s2, 4
          %s477 = int_to_ptr.hbm [resolvable:$true] %s476
          %s478 = sshll.u32 [#allocation8], 4
          %s479 = int_to_ptr.vmem [resolvable:$true] %s478
          %481 = dma.hbm_to_vmem [thread:$0]  %s477, 16, %s479, [#allocation9]
        $region20: #{tpu_custom_call.1} parent=11 // pred_fallthru
          _
        // Predicated region
        $region21: #{tpu_custom_call.1} parent=11 // pred_check
          %p482 = pneg %p136
        $region22: #{tpu_custom_call.1} parent=11 // pred_check_branch
          %484 = sbr.rel (%p482) target = $region24
        $region23: #{tpu_custom_call.1} parent=11 // pred_region
          _
        $region24: #{tpu_custom_call.1} parent=11 // pred_fallthru
          _
        // Predicated region
        $region25: #{tpu_custom_call.1} parent=11 // pred_check
          %p485 = pneg %p157
        $region26: #{tpu_custom_call.1} parent=11 // pred_check_branch
          %487 = sbr.rel (%p485) target = $region28
        $region27: #{tpu_custom_call.1} parent=11 // pred_region
          %489 = vsyncadd [#allocation12], 0
          %s491 = sshll.u32 %s4, 4
          %s492 = int_to_ptr.hbm [resolvable:$true] %s491
          %s493 = sshll.u32 [#allocation11], 4
          %s494 = int_to_ptr.vmem [resolvable:$true] %s493
          %496 = dma.hbm_to_vmem [thread:$0]  %s492, 16, %s494, [#allocation12]
        $region28: #{tpu_custom_call.1} parent=11 // pred_fallthru
          _
        // Predicated region
        $region29: #{tpu_custom_call.1} parent=11 // pred_check
          %p497 = pneg %p178
        $region30: #{tpu_custom_call.1} parent=11 // pred_check_branch
          %499 = sbr.rel (%p497) target = $region32
        $region31: #{tpu_custom_call.1} parent=11 // pred_region
          _
        $region32: #{tpu_custom_call.1} parent=11 // pred_fallthru
          _
        // Predicated region
        $region33: #{tpu_custom_call.1} parent=11 // pred_check
          %p500 = pneg %p199
        $region34: #{tpu_custom_call.1} parent=11 // pred_check_branch
          %502 = sbr.rel (%p500) target = $region36
        $region35: #{tpu_custom_call.1} parent=11 // pred_region
          _
        $region36: #{tpu_custom_call.1} parent=11 // pred_fallthru
          _
        // Predicated region
        $region37: #{tpu_custom_call.1} parent=11 // pred_check
          %p503 = pneg %p220
        $region38: #{tpu_custom_call.1} parent=11 // pred_check_branch
          %505 = sbr.rel (%p503) target = $region40
        $region39: #{tpu_custom_call.1} parent=11 // pred_region
          %507 = vsyncadd [#allocation12], 0
          %s508 = sshll.u32 %s7, 4
          %s509 = int_to_ptr.hbm [resolvable:$true] %s508
          %s510 = sshll.u32 [#allocation13], 4
          %s511 = int_to_ptr.vmem [resolvable:$true] %s510
          %516 = dma.hbm_to_vmem [thread:$0]  %s509, 512, %s511, [#allocation12], 64, 64, 4
        $region40: #{tpu_custom_call.1} parent=11 // pred_fallthru
          _
        // Predicated region
        $region41: #{tpu_custom_call.1} parent=11 // pred_check
          %p517 = pneg %p241
        $region42: #{tpu_custom_call.1} parent=11 // pred_check_branch
          %519 = sbr.rel (%p517) target = $region44
        $region43: #{tpu_custom_call.1} parent=11 // pred_region
          _
        $region44: #{tpu_custom_call.1} parent=11 // pred_fallthru
          _
        // Predicated region
        $region45: #{tpu_custom_call.1} parent=11 // pred_check
          %p520 = pneg %p262
        $region46: #{tpu_custom_call.1} parent=11 // pred_check_branch
          %522 = sbr.rel (%p520) target = $region48
        $region47: #{tpu_custom_call.1} parent=11 // pred_region
          _
        $region48: #{tpu_custom_call.1} parent=11 // pred_fallthru
          _
        // Predicated region
        $region49: #{tpu_custom_call.1} parent=11 // pred_check
          %p523 = pneg %p283
        $region50: #{tpu_custom_call.1} parent=11 // pred_check_branch
          %525 = sbr.rel (%p523) target = $region52
        $region51: #{tpu_custom_call.1} parent=11 // pred_region
          _
        $region52: #{tpu_custom_call.1} parent=11 // pred_fallthru
          _
        // Predicated region
        $region53: #{tpu_custom_call.1} parent=11 // pred_check
          %p526 = pneg %p382
        $region54: #{tpu_custom_call.1} parent=11 // pred_check_branch
          %528 = sbr.rel (%p526) target = $region56
        $region55: #{tpu_custom_call.1} parent=11 // pred_region
          _
        $region56: #{tpu_custom_call.1} parent=11 // pred_fallthru
          _
        // Predicated region
        $region57: #{tpu_custom_call.1} parent=11 // pred_check
          %p529 = pneg %p403
        $region58: #{tpu_custom_call.1} parent=11 // pred_check_branch
          %531 = sbr.rel (%p529) target = $region60
        $region59: #{tpu_custom_call.1} parent=11 // pred_region
          _
        $region60: #{tpu_custom_call.1} parent=11 // pred_fallthru
          _
        // Predicated region
        $region61: #{tpu_custom_call.1} parent=11 // pred_check
          %p532 = pneg %p424
        $region62: #{tpu_custom_call.1} parent=11 // pred_check_branch
          %534 = sbr.rel (%p532) target = $region64
        $region63: #{tpu_custom_call.1} parent=11 // pred_region
          _
        $region64: #{tpu_custom_call.1} parent=11 // pred_fallthru
          _
      $region12: #{tpu_custom_call.1} parent=5 // pred_fallthru
        _
      %p535 = scmp.lt.s32.totalorder %s28, 8
      // Predicated region
      $region65: #{tpu_custom_call.1} parent=5 // pred_check
        %p536 = pneg %p535
      $region66: #{tpu_custom_call.1} parent=5 // pred_check_branch
        %538 = sbr.rel (%p536) target = $region68
      $region67: #{tpu_custom_call.1} parent=5 // pred_region
        // Predicated region
        $region69: #{tpu_custom_call.1} parent=67 // pred_check
          %p539 = pneg %p67
        $region70: #{tpu_custom_call.1} parent=67 // pred_check_branch
          %541 = sbr.rel (%p539) target = $region72
        $region71: #{tpu_custom_call.1} parent=67 // pred_region
          %p542 = scmp.lt.s32.totalorder %s35, 1
          %s543 = scalar_select %p542, %s35, 1
          %s544 = smul.addr %s543, 2
          %s545 = smul.addr %s544, 8
          %s546 = scalar_lea.vmem %s0, %s545
        $region72: #{tpu_custom_call.1} parent=67 // pred_fallthru
          _
        // Predicated region
        $region73: #{tpu_custom_call.1} parent=67 // pred_check
          %p547 = pneg %p303
        $region74: #{tpu_custom_call.1} parent=67 // pred_check_branch
          %549 = sbr.rel (%p547) target = $region76
        $region75: #{tpu_custom_call.1} parent=67 // pred_region
          %s550 = sand.u32 %s293, 1
          %s551 = sand.u32 %s293, 1
          %s552 = smul.addr %s551, 32
          %s553 = scalar_lea.vmem [#allocation14], %s552
          %s554 = smul.addr %s36, 4
          %s555 = scalar_lea.vmem %s11, %s554
          // Predicated region
          $region77: #{tpu_custom_call.1} parent=75 // pred_check
            _
          $region78: #{tpu_custom_call.1} parent=75 // pred_check_branch
            %557 = sbr.rel (0) target = $region80
          $region79: #{tpu_custom_call.1} parent=75 // pred_region
            // Predicated region
            $region81: #{tpu_custom_call.1} parent=79 // pred_check
              _
            $region82: #{tpu_custom_call.1} parent=79 // pred_check_branch
              %559 = sbr.rel target = $region84
            $region83: #{tpu_custom_call.1} parent=79 // pred_region
              // Predicated region
              $region96: #{tpu_custom_call.1} parent=83 // pred_check
                _
              $region97: #{tpu_custom_call.1} parent=83 // pred_check_branch
                %589 = sbr.rel (0) target = $region99
              $region98: #{tpu_custom_call.1} parent=83 // pred_region
                loop: start=0, step=1, limit=1
                $region100: #{tpu_custom_call.1} parent=98 // loop_pre_header
                  _
                $region101: #{tpu_custom_call.1} parent=98 // loop_header
                  %s591 = sphi 0, %s595
                  %p592 = scmp.ge.s32.totalorder %s591, 1
                  %s596 = sphi %s555, %s555
                  %s597 = sphi %s553, %s553
                $region102: #{tpu_custom_call.1} parent=98 // loop_header_branch
                  %594 = sbr.rel (%p592) target = $region106
                $region103: #{tpu_custom_call.1} parent=98 // loop_body
                  _
                $region104: #{tpu_custom_call.1} parent=98 // loop_footer
                  %s595 = sadd.s32 1, %s591
                $region105: #{tpu_custom_call.1} parent=98 // loop_footer_branch
                  %590 = sbr.rel target = $region101
                $region106: #{tpu_custom_call.1} parent=98 // loop_exit
                  _
                %s599 = ssub.s32 16, 1
                loop: start=0, step=1, limit=1
                $region107: #{tpu_custom_call.1} parent=98 // loop_pre_header
                  _
                $region108: #{tpu_custom_call.1} parent=98 // loop_header
                  %s601 = sphi 0, %s605
                  %p602 = scmp.ge.s32.totalorder %s601, 1
                  %s606 = sphi %s555, %s555
                  %s607 = sphi %s553, %s553
                $region109: #{tpu_custom_call.1} parent=98 // loop_header_branch
                  %604 = sbr.rel (%p602) target = $region113
                $region110: #{tpu_custom_call.1} parent=98 // loop_body
                  %v608 = vld [vmem:[%s606] sm:%s599]
                  %609 = vst [vmem:[%s607] sm:%s599] %v608
                  %v610 = vld [vmem:[%s606 + $0x8] sm:%s599]
                  %611 = vst [vmem:[%s607 + $0x4] sm:%s599] %v610
                  %v612 = vld [vmem:[%s606 + $0x10] sm:%s599]
                  %613 = vst [vmem:[%s607 + $0x8] sm:%s599] %v612
                  %v614 = vld [vmem:[%s606 + $0x18] sm:%s599]
                  %615 = vst [vmem:[%s607 + $0xc] sm:%s599] %v614
                  %v616 = vld [vmem:[%s606 + $0x20] sm:%s599]
                  %617 = vst [vmem:[%s607 + $0x10] sm:%s599] %v616
                  %v618 = vld [vmem:[%s606 + $0x28] sm:%s599]
                  %619 = vst [vmem:[%s607 + $0x14] sm:%s599] %v618
                  %v620 = vld [vmem:[%s606 + $0x30] sm:%s599]
                  %621 = vst [vmem:[%s607 + $0x18] sm:%s599] %v620
                  %v622 = vld [vmem:[%s606 + $0x38] sm:%s599]
                  %623 = vst [vmem:[%s607 + $0x1c] sm:%s599] %v622
                $region111: #{tpu_custom_call.1} parent=98 // loop_footer
                  %s605 = sadd.s32 1, %s601
                $region112: #{tpu_custom_call.1} parent=98 // loop_footer_branch
                  %600 = sbr.rel target = $region108
                $region113: #{tpu_custom_call.1} parent=98 // loop_exit
                  _
              $region99: #{tpu_custom_call.1} parent=83 // pred_fallthru
                _
            $region84: #{tpu_custom_call.1} parent=79 // pred_fallthru
              _
            // Predicated region
            $region85: #{tpu_custom_call.1} parent=79 // pred_check
              _
            $region86: #{tpu_custom_call.1} parent=79 // pred_check_branch
              %561 = sbr.rel (0) target = $region88
            $region87: #{tpu_custom_call.1} parent=79 // pred_region
              %s563 = ssub.s32 16, 1
              loop: start=0, step=1, limit=1
              $region89: #{tpu_custom_call.1} parent=87 // loop_pre_header
                _
              $region90: #{tpu_custom_call.1} parent=87 // loop_header
                %s565 = sphi 0, %s569
                %p566 = scmp.ge.s32.totalorder %s565, 1
                %s570 = sphi %s555, %s555
                %s571 = sphi %s553, %s553
              $region91: #{tpu_custom_call.1} parent=87 // loop_header_branch
                %568 = sbr.rel (%p566) target = $region95
              $region92: #{tpu_custom_call.1} parent=87 // loop_body
                %v572 = vld [vmem:[%s570] sm:%s563]
                %573 = vst [vmem:[%s571] sm:%s563] %v572
                %v574 = vld [vmem:[%s570 + $0x8] sm:%s563]
                %575 = vst [vmem:[%s571 + $0x4] sm:%s563] %v574
                %v576 = vld [vmem:[%s570 + $0x10] sm:%s563]
                %577 = vst [vmem:[%s571 + $0x8] sm:%s563] %v576
                %v578 = vld [vmem:[%s570 + $0x18] sm:%s563]
                %579 = vst [vmem:[%s571 + $0xc] sm:%s563] %v578
                %v580 = vld [vmem:[%s570 + $0x20] sm:%s563]
                %581 = vst [vmem:[%s571 + $0x10] sm:%s563] %v580
                %v582 = vld [vmem:[%s570 + $0x28] sm:%s563]
                %583 = vst [vmem:[%s571 + $0x14] sm:%s563] %v582
                %v584 = vld [vmem:[%s570 + $0x30] sm:%s563]
                %585 = vst [vmem:[%s571 + $0x18] sm:%s563] %v584
                %v586 = vld [vmem:[%s570 + $0x38] sm:%s563]
                %587 = vst [vmem:[%s571 + $0x1c] sm:%s563] %v586
              $region93: #{tpu_custom_call.1} parent=87 // loop_footer
                %s569 = sadd.s32 1, %s565
              $region94: #{tpu_custom_call.1} parent=87 // loop_footer_branch
                %564 = sbr.rel target = $region90
              $region95: #{tpu_custom_call.1} parent=87 // loop_exit
                _
            $region88: #{tpu_custom_call.1} parent=79 // pred_fallthru
              _
          $region80: #{tpu_custom_call.1} parent=75 // pred_fallthru
            _
          %624 = vnop
        $region76: #{tpu_custom_call.1} parent=67 // pred_fallthru
          _
        // Predicated region
        $region114: #{tpu_custom_call.1} parent=67 // pred_check
          %p625 = pneg %p329
        $region115: #{tpu_custom_call.1} parent=67 // pred_check_branch
          %627 = sbr.rel (%p625) target = $region117
        $region116: #{tpu_custom_call.1} parent=67 // pred_region
          %p628 = scmp.lt.s32.totalorder %s36, 1
          %s629 = scalar_select %p628, %s36, 1
          %s630 = scalar_lea.vmem %s12, %s629
        $region117: #{tpu_custom_call.1} parent=67 // pred_fallthru
          _
        // Predicated region
        $region118: #{tpu_custom_call.1} parent=67 // pred_check
          %p631 = pneg %p355
        $region119: #{tpu_custom_call.1} parent=67 // pred_check_branch
          %633 = sbr.rel (%p631) target = $region121
        $region120: #{tpu_custom_call.1} parent=67 // pred_region
          %s634 = smul.u32 16, %s36
          %p635 = scmp.lt.s32.totalorder %s634, 31
          %s636 = scalar_select %p635, %s634, 31
          %s637 = smul.addr %s636, 4
          %s638 = scalar_lea.vmem %s13, %s637
          %s639 = smul.u32 16, %s36
        $region121: #{tpu_custom_call.1} parent=67 // pred_fallthru
          _
      $region68: #{tpu_custom_call.1} parent=5 // pred_fallthru
        _
      %p640 = scmp.le.s32.totalorder 1, %s28
      %p641 = scmp.lt.s32.totalorder %s28, 9
      %p642 = pnand %p640, %p641
      %p643 = pneg %p642
      // Predicated region
      $region122: #{tpu_custom_call.1} parent=5 // pred_check
        _
      $region123: #{tpu_custom_call.1} parent=5 // pred_check_branch
        %645 = sbr.rel (%p642) target = $region125
      $region124: #{tpu_custom_call.1} parent=5 // pred_region
        %s646 = ssub.s32 %s28, 1
        // Predicated region
        $region126: #{tpu_custom_call.1} parent=124 // pred_check
          %p647 = pneg %p115
        $region127: #{tpu_custom_call.1} parent=124 // pred_check_branch
          %649 = sbr.rel (%p647) target = $region129
        $region128: #{tpu_custom_call.1} parent=124 // pred_region
          %651 = dma.done [#allocation9], 16
        $region129: #{tpu_custom_call.1} parent=124 // pred_fallthru
          _
        // Predicated region
        $region130: #{tpu_custom_call.1} parent=124 // pred_check
          %p652 = pneg %p157
        $region131: #{tpu_custom_call.1} parent=124 // pred_check_branch
          %654 = sbr.rel (%p652) target = $region133
        $region132: #{tpu_custom_call.1} parent=124 // pred_region
          %656 = dma.done [#allocation12], 16
        $region133: #{tpu_custom_call.1} parent=124 // pred_fallthru
          _
        // Predicated region
        $region134: #{tpu_custom_call.1} parent=124 // pred_check
          %p657 = pneg %p220
        $region135: #{tpu_custom_call.1} parent=124 // pred_check_branch
          %659 = sbr.rel (%p657) target = $region137
        $region136: #{tpu_custom_call.1} parent=124 // pred_region
          %661 = dma.done [#allocation12], 512
        $region137: #{tpu_custom_call.1} parent=124 // pred_fallthru
          _
        %s662 = sand.u32 %s296, 1
        %s663 = sand.u32 %s296, 1
        %s664 = smul.addr %s663, 32
        %s665 = scalar_lea.vmem [#allocation14], %s664
        // Predicated region
        $region138: #{tpu_custom_call.1} parent=124 // pred_check
          %p666 = pneg %p309
        $region139: #{tpu_custom_call.1} parent=124 // pred_check_branch
          %668 = sbr.rel (%p666) target = $region141
        $region140: #{tpu_custom_call.1} parent=124 // pred_region
          _
        $region141: #{tpu_custom_call.1} parent=124 // pred_fallthru
          _
        %p669 = scmp.lt.s32.totalorder %s38, 1
        %s670 = scalar_select %p669, %s38, 1
        %s671 = smul.addr %s670, 2
        %s672 = smul.addr %s671, 8
        %s673 = scalar_lea.vmem %s0, %s672
        %p674 = pneg %p73
        %p675 = pneg %p70
        %p676 = pneg %p94
        %p677 = pneg %p91
        %p678 = pneg %p115
        %p679 = pneg %p112
        %p680 = pneg %p136
        %p681 = pneg %p133
        %p682 = pneg %p157
        %p683 = pneg %p154
        %p684 = pneg %p178
        %p685 = pneg %p175
        %p686 = pneg %p199
        %p687 = pneg %p196
        %p688 = pneg %p220
        %p689 = pneg %p217
        %p690 = pneg %p241
        %p691 = pneg %p238
        %p692 = pneg %p262
        %p693 = pneg %p259
        %p694 = pneg %p283
        %p695 = pneg %p280
        %s696 = sand.u32 %s296, 1
        %s697 = sand.u32 %s296, 1
        %s698 = smul.addr %s697, 32
        %s699 = scalar_lea.vmem [#allocation14], %s698
        %p700 = pneg %p309
        %p701 = pneg %p306
        %p702 = scmp.lt.s32.totalorder %s39, 1
        %s703 = scalar_select %p702, %s39, 1
        %s704 = scalar_lea.vmem %s12, %s703
        %p705 = pneg %p335
        %p706 = pneg %p332
        %s707 = smul.u32 16, %s39
        %p708 = scmp.lt.s32.totalorder %s707, 31
        %s709 = scalar_select %p708, %s707, 31
        %s710 = smul.addr %s709, 4
        %s711 = scalar_lea.vmem %s13, %s710
        %p712 = pneg %p361
        %p713 = pneg %p358
        %p714 = pneg %p382
        %p715 = pneg %p379
        %p716 = pneg %p403
        %p717 = pneg %p400
        %p718 = pneg %p424
        %p719 = pneg %p421
        %p720 = pneg %p452
        %p721 = pneg %p449
        %s722 = sand.u32 %s439, 1
        %s723 = scalar_lea.sflag [#allocation10], %s722
        %s724 = sand.u32 %s439, 1
        %s725 = smul.addr %s724, 8
        %s726 = scalar_lea.vmem [#allocation15], %s725
        %p727 = scmp.lt.s32.totalorder %s38, 1
        %s728 = scalar_select %p727, %s38, 1
        %s729 = smul.addr %s728, 2
        %s730 = smul.addr %s729, 8
        %s731 = scalar_lea.vmem %s0, %s730
        %p732 = scmp.lt.s32.totalorder %s39, 1
        %s733 = scalar_select %p732, %s39, 1
        %s734 = scalar_lea.vmem %s12, %s733
        %s735 = smul.u32 16, %s39
        %p736 = scmp.lt.s32.totalorder %s735, 31
        %s737 = scalar_select %p736, %s735, 31
        %s738 = smul.addr %s737, 4
        %s739 = scalar_lea.vmem %s13, %s738
        %s740 = smul.u32 16, %s39
        %s742 = smul.u32 %s40, 8
        %p743 = scmp.eq.s32.totalorder %s39, 0
        %p744 = scmp.eq.s32.totalorder %s40, 0
        %p745 = pnand %p743, %p744
        %p746 = pneg %p745
        // Predicated region
        $region142: #{tpu_custom_call.1} parent=124 // pred_check
          _
        $region143: #{tpu_custom_call.1} parent=124 // pred_check_branch
          %748 = sbr.rel (%p745) target = $region145
        $region144: #{tpu_custom_call.1} parent=124 // pred_region
          %v749 = vld [vmem:[%s731] sm:$0xff]
          %v750 = vld [vmem:[%s731 + $0x8] sm:$0xff]
          %v751 = vpack.c.bf16 %v750, %v749
          %v752 = vld [vmem:[%s3] sm:$0xf]
          %v753 = vld [vmem:[%s3 + $0x4] sm:$0xf]
          %v754 = vld [vmem:[%s3 + $0x8] sm:$0xf]
          %v755 = vld [vmem:[%s3 + $0xc] sm:$0xf]
          %v756 = vld [vmem:[%s3 + $0x10] sm:$0xf]
          %v757 = vld [vmem:[%s3 + $0x14] sm:$0xf]
          %v758 = vld [vmem:[%s3 + $0x18] sm:$0xf]
          %v759 = vld [vmem:[%s3 + $0x1c] sm:$0xf]
          %v760 = vld [vmem:[#allocation11] sm:$0x1]
          %v762 = vperm.slane %v760, 0
          %v772 = vunpack.c.l.b16 %v752
          %v773 = vunpack.c.l.b16 %v753
          %v774 = vunpack.c.l.b16 %v754
          %v775 = vunpack.c.l.b16 %v755
          %v776 = vunpack.c.l.b16 %v756
          %v777 = vunpack.c.l.b16 %v757
          %v778 = vunpack.c.l.b16 %v758
          %v779 = vunpack.c.l.b16 %v759
          %v780 = vpack.c.b16 %v773, %v772
          %v781 = vpack.c.b16 %v775, %v774
          %v782 = vpack.c.b16 %v777, %v776
          %v783 = vpack.c.b16 %v779, %v778
          %vm788 = vcmask 523264
          %v790 = vsel %vm788, %v751, 0
          %792 = vmatpush.bf16.msra.mxu0 0
          %793 = vmatpush.bf16.msra.mxu0 0
          %794 = vmatpush.bf16.msra.mxu0 0
          %795 = vmatpush.bf16.msra.mxu0 0
          %796 = vmatpush.bf16.msra.mxu0 %v783
          %797 = vmatpush.bf16.msra.mxu0 %v782
          %798 = vmatpush.bf16.msra.mxu0 %v781
          %799 = vmatpush.bf16.msra.mxu0 %v780
          %800 = vmatmul.bf16.gmra.mxu0 %v790
          %v801 = vpop.f32.mrf.mxu0
          %v802 = vadd.f32 %v762, %v801
          %v803 = vpop.f32.mrf.mxu0
          %v804 = vadd.f32 %v762, %v803
          %805 = vdwg.mxu0
          %v806 = vld [vmem:[%s5] sm:$0xf]
          %v807 = vld [vmem:[%s5 + $0x4] sm:$0xf]
          %v808 = vld [vmem:[%s5 + $0x8] sm:$0xf]
          %v809 = vld [vmem:[%s5 + $0xc] sm:$0xf]
          %v810 = vld [vmem:[%s5 + $0x10] sm:$0xf]
          %v811 = vld [vmem:[%s5 + $0x14] sm:$0xf]
          %v812 = vld [vmem:[%s5 + $0x18] sm:$0xf]
          %v813 = vld [vmem:[%s5 + $0x1c] sm:$0xf]
          %v814 = vld [vmem:[%s6] sm:$0x1]
          %v816 = vperm.slane %v814, 0
          %v826 = vunpack.c.l.b16 %v806
          %v827 = vunpack.c.l.b16 %v807
          %v828 = vunpack.c.l.b16 %v808
          %v829 = vunpack.c.l.b16 %v809
          %v830 = vunpack.c.l.b16 %v810
          %v831 = vunpack.c.l.b16 %v811
          %v832 = vunpack.c.l.b16 %v812
          %v833 = vunpack.c.l.b16 %v813
          %v834 = vpack.c.b16 %v827, %v826
          %v835 = vpack.c.b16 %v829, %v828
          %v836 = vpack.c.b16 %v831, %v830
          %v837 = vpack.c.b16 %v833, %v832
          %842 = vmatpush.bf16.msra.mxu0 0
          %843 = vmatpush.bf16.msra.mxu0 0
          %844 = vmatpush.bf16.msra.mxu0 0
          %845 = vmatpush.bf16.msra.mxu0 0
          %846 = vmatpush.bf16.msra.mxu0 %v837
          %847 = vmatpush.bf16.msra.mxu0 %v836
          %848 = vmatpush.bf16.msra.mxu0 %v835
          %849 = vmatpush.bf16.msra.mxu0 %v834
          %850 = vmatmul.bf16.gmra.mxu0 %v790
          %v851 = vpop.f32.mrf.mxu0
          %v852 = vadd.f32 %v816, %v851
          %v853 = vpop.f32.mrf.mxu0
          %v854 = vadd.f32 %v816, %v853
          %855 = vdwg.mxu0
          %v856 = vpack.c.bf16 %v802, %v802
          %v857 = vpack.c.bf16 %v804, %v804
          %vm858 = vcmask 519168
          %859 = vst.msk [vmem:[#allocation2] sm:$0xf] %vm858, %v856
          %860 = vst.msk [vmem:[#allocation2 + $0x4] sm:$0xf] %vm858, %v857
          %v861 = vpack.c.bf16 %v852, %v852
          %v862 = vpack.c.bf16 %v854, %v854
          %863 = vst.msk [vmem:[#allocation3] sm:$0xf] %vm858, %v861
          %864 = vst.msk [vmem:[#allocation3 + $0x4] sm:$0xf] %vm858, %v862
        $region145: #{tpu_custom_call.1} parent=124 // pred_fallthru
          _
        // Predicated region
        $region146: #{tpu_custom_call.1} parent=124 // pred_check
          %p865 = pneg %p743
        $region147: #{tpu_custom_call.1} parent=124 // pred_check_branch
          %867 = sbr.rel (%p865) target = $region149
        $region148: #{tpu_custom_call.1} parent=124 // pred_region
          %s868 = scalar_lea.vmem %s731, %s742
          %v869 = vld [vmem:[%s868] sm:$0xff]
          %v870 = vpack.c.bf16 %v869, %v869
          %v871 = vld [vmem:[%s1] sm:$0xf]
          %v872 = vld [vmem:[%s1 + $0x4] sm:$0xf]
          %v873 = vld [vmem:[%s1 + $0x8] sm:$0xf]
          %v874 = vld [vmem:[%s1 + $0xc] sm:$0xf]
          %v875 = vld [vmem:[%s1 + $0x10] sm:$0xf]
          %v876 = vld [vmem:[%s1 + $0x14] sm:$0xf]
          %v877 = vld [vmem:[%s1 + $0x18] sm:$0xf]
          %v878 = vld [vmem:[%s1 + $0x1c] sm:$0xf]
          %v879 = vld [vmem:[#allocation8] sm:$0x1]
          %v881 = vperm.slane %v879, 0
          %v891 = vunpack.c.l.b16 %v871
          %v892 = vunpack.c.l.b16 %v872
          %v893 = vunpack.c.l.b16 %v873
          %v894 = vunpack.c.l.b16 %v874
          %v895 = vunpack.c.l.b16 %v875
          %v896 = vunpack.c.l.b16 %v876
          %v897 = vunpack.c.l.b16 %v877
          %v898 = vunpack.c.l.b16 %v878
          %v899 = vpack.c.b16 %v892, %v891
          %v900 = vpack.c.b16 %v894, %v893
          %v901 = vpack.c.b16 %v896, %v895
          %v902 = vpack.c.b16 %v898, %v897
          %vm907 = vcmask 523264
          %v909 = vsel %vm907, %v870, 0
          %911 = vmatpush.bf16.msra.mxu0 0
          %912 = vmatpush.bf16.msra.mxu0 0
          %913 = vmatpush.bf16.msra.mxu0 0
          %914 = vmatpush.bf16.msra.mxu0 0
          %915 = vmatpush.bf16.msra.mxu0 %v902
          %916 = vmatpush.bf16.msra.mxu0 %v901
          %917 = vmatpush.bf16.msra.mxu0 %v900
          %918 = vmatpush.bf16.msra.mxu0 %v899
          %919 = vmatmul.bf16.gmra.mxu0 %v909
          %v920 = vpop.f32.mrf.mxu0
          %v921 = vadd.f32 %v881, %v920
          %v922 = vpop.f32.mrf.mxu0
          %923 = vdwg.mxu0
          %v924 = vmul.f32 %v921, 0.25
          %v925 = vpack.c.bf16 %v924, %v924
          %v926 = vld [vmem:[#allocation2] sm:$0xf]
          %v927 = vld [vmem:[#allocation2 + $0x4] sm:$0xf]
          %v930 = vunpack.c.l.b16 %v926
          %v931 = vunpack.c.l.b16 %v927
          %v932 = vpack.c.b16 %v931, %v930
          %vm933 = vcmask 130048
          %v935 = vsel %vm933, %v925, 0
          %v938 = vsel %vm933, %v932, 0
          %940 = vmatpush.bf16.xpose.msra.mxu0 0
          %941 = vmatpush.bf16.xpose.msra.mxu0 0
          %942 = vmatpush.bf16.xpose.msra.mxu0 0
          %943 = vmatpush.bf16.xpose.msra.mxu0 0
          %944 = vmatpush.bf16.xpose.msra.mxu0 0
          %945 = vmatpush.bf16.xpose.msra.mxu0 0
          %946 = vmatpush.bf16.xpose.msra.mxu0 0
          %947 = vmatpush.bf16.xpose.msra.mxu0 %v938
          %948 = vmatmul.bf16.gmra.mxu0 %v935
          %v949 = vpop.f32.mrf.mxu0
          %v950 = vadd.f32 0.0, %v949
          %v951 = vpop.f32.mrf.mxu0
          %952 = vdwg.mxu0
          %v953 = vsel %vm933, %v950, -inf
          %954 = vmax.xlane.f32.xlu0 %v953
          %v955 = vpop.xlane.xlu0 %954
          %v956 = vsub.f32 %v950, %v955
          %v957 = vmul.f32 %v956, 1.442695
          %v958 = vpow.pop %v957
          %v959 = vsel %vm933, %v958, 0.0
          %960 = vadd.xlane.f32.xlu0 %v959
          %v961 = vpop.xlane.xlu0 %960
          %v962 = vrcp.pop %v961
          %v963 = vmul.f32 %v958, %v962
          %v964 = vpack.c.bf16 %v963, %v963
          %v965 = vld [vmem:[#allocation3] sm:$0xf]
          %v966 = vld [vmem:[#allocation3 + $0x4] sm:$0xf]
          %v969 = vunpack.c.l.b16 %v965
          %v970 = vunpack.c.l.b16 %v966
          %v971 = vpack.c.b16 %v970, %v969
          %v974 = vsel %vm933, %v964, 0
          %976 = vmatpush.bf16.msra.mxu0 0
          %977 = vmatpush.bf16.msra.mxu0 0
          %978 = vmatpush.bf16.msra.mxu0 0
          %979 = vmatpush.bf16.msra.mxu0 0
          %980 = vmatpush.bf16.msra.mxu0 0
          %981 = vmatpush.bf16.msra.mxu0 0
          %982 = vmatpush.bf16.msra.mxu0 0
          %983 = vmatpush.bf16.msra.mxu0 %v971
          %984 = vmatmul.bf16.gmra.mxu0 %v974
          %v985 = vpop.f32.mrf.mxu0
          %v986 = vadd.f32 0.0, %v985
          %v987 = vpop.f32.mrf.mxu0
          %988 = vdwg.mxu0
          %v989 = vpack.c.bf16 %v986, %v986
          %vm990 = vcmask 125952
          %991 = vst.msk [vmem:[#allocation7] sm:$0xf] %vm990, %v989
          %v992 = vld [vmem:[#allocation2] sm:$0xf]
          %v993 = vld [vmem:[#allocation2 + $0x4] sm:$0xf]
          %995 = vrot.lane.b32.xlu0 %v925, 112
          %v996 = vpop.permute.xlu0 %995
          %v999 = vunpack.c.l.b16 %v992
          %v1000 = vunpack.c.l.b16 %v993
          %v1001 = vpack.c.b16 %v1000, %v999
          %1002 = vrot.lane.b32.xlu0 %v1001, 112
          %v1003 = vpop.permute.xlu0 %1002
          %v1005 = vsel %vm933, %v996, 0
          %v1008 = vsel %vm933, %v1003, 0
          %1010 = vmatpush.bf16.xpose.msra.mxu0 0
          %1011 = vmatpush.bf16.xpose.msra.mxu0 0
          %1012 = vmatpush.bf16.xpose.msra.mxu0 0
          %1013 = vmatpush.bf16.xpose.msra.mxu0 0
          %1014 = vmatpush.bf16.xpose.msra.mxu0 0
          %1015 = vmatpush.bf16.xpose.msra.mxu0 0
          %1016 = vmatpush.bf16.xpose.msra.mxu0 0
          %1017 = vmatpush.bf16.xpose.msra.mxu0 %v1008
          %1018 = vmatmul.bf16.gmra.mxu0 %v1005
          %v1019 = vpop.f32.mrf.mxu0
          %v1020 = vadd.f32 0.0, %v1019
          %v1021 = vpop.f32.mrf.mxu0
          %1022 = vdwg.mxu0
          %v1023 = vsel %vm933, %v1020, -inf
          %1024 = vmax.xlane.f32.xlu0 %v1023
          %v1025 = vpop.xlane.xlu0 %1024
          %v1026 = vsub.f32 %v1020, %v1025
          %v1027 = vmul.f32 %v1026, 1.442695
          %v1028 = vpow.pop %v1027
          %v1029 = vsel %vm933, %v1028, 0.0
          %1030 = vadd.xlane.f32.xlu0 %v1029
          %v1031 = vpop.xlane.xlu0 %1030
          %v1032 = vrcp.pop %v1031
          %v1033 = vmul.f32 %v1028, %v1032
          %v1034 = vpack.c.bf16 %v1033, %v1033
          %v1035 = vld [vmem:[#allocation3] sm:$0xf]
          %v1036 = vld [vmem:[#allocation3 + $0x4] sm:$0xf]
          %v1039 = vunpack.c.l.b16 %v1035
          %v1040 = vunpack.c.l.b16 %v1036
          %v1041 = vpack.c.b16 %v1040, %v1039
          %1042 = vrot.lane.b32.xlu0 %v1041, 112
          %v1043 = vpop.permute.xlu0 %1042
          %v1046 = vsel %vm933, %v1034, 0
          %1048 = vmatpush.bf16.msra.mxu0 0
          %1049 = vmatpush.bf16.msra.mxu0 0
          %1050 = vmatpush.bf16.msra.mxu0 0
          %1051 = vmatpush.bf16.msra.mxu0 0
          %1052 = vmatpush.bf16.msra.mxu0 0
          %1053 = vmatpush.bf16.msra.mxu0 0
          %1054 = vmatpush.bf16.msra.mxu0 0
          %1055 = vmatpush.bf16.msra.mxu0 %v1043
          %1056 = vmatmul.bf16.gmra.mxu0 %v1046
          %v1057 = vpop.f32.mrf.mxu0
          %v1058 = vadd.f32 0.0, %v1057
          %v1059 = vpop.f32.mrf.mxu0
          %1060 = vdwg.mxu0
          %v1061 = vpack.c.bf16 %v1058, %v1058
          %1063 = vrot.lane.b32.xlu0 %v1061, 16
          %v1064 = vpop.permute.xlu0 %1063
          %vm1066 = vcmask 257152
          %1067 = vst.msk [vmem:[#allocation7] sm:$0xf] %vm1066, %v1064
          %v1068 = vld [vmem:[#allocation2] sm:$0xf]
          %v1069 = vld [vmem:[#allocation2 + $0x4] sm:$0xf]
          %1070 = vrot.lane.b32.xlu0 %v925, 96
          %v1071 = vpop.permute.xlu0 %1070
          %v1074 = vunpack.c.l.b16 %v1068
          %v1075 = vunpack.c.l.b16 %v1069
          %v1076 = vpack.c.b16 %v1075, %v1074
          %1077 = vrot.lane.b32.xlu0 %v1076, 96
          %v1078 = vpop.permute.xlu0 %1077
          %v1080 = vsel %vm933, %v1071, 0
          %v1083 = vsel %vm933, %v1078, 0
          %1085 = vmatpush.bf16.xpose.msra.mxu0 0
          %1086 = vmatpush.bf16.xpose.msra.mxu0 0
          %1087 = vmatpush.bf16.xpose.msra.mxu0 0
          %1088 = vmatpush.bf16.xpose.msra.mxu0 0
          %1089 = vmatpush.bf16.xpose.msra.mxu0 0
          %1090 = vmatpush.bf16.xpose.msra.mxu0 0
          %1091 = vmatpush.bf16.xpose.msra.mxu0 0
          %1092 = vmatpush.bf16.xpose.msra.mxu0 %v1083
          %1093 = vmatmul.bf16.gmra.mxu0 %v1080
          %v1094 = vpop.f32.mrf.mxu0
          %v1095 = vadd.f32 0.0, %v1094
          %v1096 = vpop.f32.mrf.mxu0
          %1097 = vdwg.mxu0
          %v1098 = vsel %vm933, %v1095, -inf
          %1099 = vmax.xlane.f32.xlu0 %v1098
          %v1100 = vpop.xlane.xlu0 %1099
          %v1101 = vsub.f32 %v1095, %v1100
          %v1102 = vmul.f32 %v1101, 1.442695
          %v1103 = vpow.pop %v1102
          %v1104 = vsel %vm933, %v1103, 0.0
          %1105 = vadd.xlane.f32.xlu0 %v1104
          %v1106 = vpop.xlane.xlu0 %1105
          %v1107 = vrcp.pop %v1106
          %v1108 = vmul.f32 %v1103, %v1107
          %v1109 = vpack.c.bf16 %v1108, %v1108
          %v1110 = vld [vmem:[#allocation3] sm:$0xf]
          %v1111 = vld [vmem:[#allocation3 + $0x4] sm:$0xf]
          %v1114 = vunpack.c.l.b16 %v1110
          %v1115 = vunpack.c.l.b16 %v1111
          %v1116 = vpack.c.b16 %v1115, %v1114
          %1117 = vrot.lane.b32.xlu0 %v1116, 96
          %v1118 = vpop.permute.xlu0 %1117
          %v1121 = vsel %vm933, %v1109, 0
          %1123 = vmatpush.bf16.msra.mxu0 0
          %1124 = vmatpush.bf16.msra.mxu0 0
          %1125 = vmatpush.bf16.msra.mxu0 0
          %1126 = vmatpush.bf16.msra.mxu0 0
          %1127 = vmatpush.bf16.msra.mxu0 0
          %1128 = vmatpush.bf16.msra.mxu0 0
          %1129 = vmatpush.bf16.msra.mxu0 0
          %1130 = vmatpush.bf16.msra.mxu0 %v1118
          %1131 = vmatmul.bf16.gmra.mxu0 %v1121
          %v1132 = vpop.f32.mrf.mxu0
          %v1133 = vadd.f32 0.0, %v1132
          %v1134 = vpop.f32.mrf.mxu0
          %1135 = vdwg.mxu0
          %v1136 = vpack.c.bf16 %v1133, %v1133
          %1138 = vrot.lane.b32.xlu0 %v1136, 32
          %v1139 = vpop.permute.xlu0 %1138
          %vm1141 = vcmask 388352
          %1142 = vst.msk [vmem:[#allocation7] sm:$0xf] %vm1141, %v1139
          %v1143 = vld [vmem:[#allocation2] sm:$0xf]
          %v1144 = vld [vmem:[#allocation2 + $0x4] sm:$0xf]
          %1145 = vrot.lane.b32.xlu0 %v925, 80
          %v1146 = vpop.permute.xlu0 %1145
          %v1149 = vunpack.c.l.b16 %v1143
          %v1150 = vunpack.c.l.b16 %v1144
          %v1151 = vpack.c.b16 %v1150, %v1149
          %1152 = vrot.lane.b32.xlu0 %v1151, 80
          %v1153 = vpop.permute.xlu0 %1152
          %v1155 = vsel %vm933, %v1146, 0
          %v1158 = vsel %vm933, %v1153, 0
          %1160 = vmatpush.bf16.xpose.msra.mxu0 0
          %1161 = vmatpush.bf16.xpose.msra.mxu0 0
          %1162 = vmatpush.bf16.xpose.msra.mxu0 0
          %1163 = vmatpush.bf16.xpose.msra.mxu0 0
          %1164 = vmatpush.bf16.xpose.msra.mxu0 0
          %1165 = vmatpush.bf16.xpose.msra.mxu0 0
          %1166 = vmatpush.bf16.xpose.msra.mxu0 0
          %1167 = vmatpush.bf16.xpose.msra.mxu0 %v1158
          %1168 = vmatmul.bf16.gmra.mxu0 %v1155
          %v1169 = vpop.f32.mrf.mxu0
          %v1170 = vadd.f32 0.0, %v1169
          %v1171 = vpop.f32.mrf.mxu0
          %1172 = vdwg.mxu0
          %v1173 = vsel %vm933, %v1170, -inf
          %1174 = vmax.xlane.f32.xlu0 %v1173
          %v1175 = vpop.xlane.xlu0 %1174
          %v1176 = vsub.f32 %v1170, %v1175
          %v1177 = vmul.f32 %v1176, 1.442695
          %v1178 = vpow.pop %v1177
          %v1179 = vsel %vm933, %v1178, 0.0
          %1180 = vadd.xlane.f32.xlu0 %v1179
          %v1181 = vpop.xlane.xlu0 %1180
          %v1182 = vrcp.pop %v1181
          %v1183 = vmul.f32 %v1178, %v1182
          %v1184 = vpack.c.bf16 %v1183, %v1183
          %v1185 = vld [vmem:[#allocation3] sm:$0xf]
          %v1186 = vld [vmem:[#allocation3 + $0x4] sm:$0xf]
          %v1189 = vunpack.c.l.b16 %v1185
          %v1190 = vunpack.c.l.b16 %v1186
          %v1191 = vpack.c.b16 %v1190, %v1189
          %1192 = vrot.lane.b32.xlu0 %v1191, 80
          %v1193 = vpop.permute.xlu0 %1192
          %v1196 = vsel %vm933, %v1184, 0
          %1198 = vmatpush.bf16.msra.mxu0 0
          %1199 = vmatpush.bf16.msra.mxu0 0
          %1200 = vmatpush.bf16.msra.mxu0 0
          %1201 = vmatpush.bf16.msra.mxu0 0
          %1202 = vmatpush.bf16.msra.mxu0 0
          %1203 = vmatpush.bf16.msra.mxu0 0
          %1204 = vmatpush.bf16.msra.mxu0 0
          %1205 = vmatpush.bf16.msra.mxu0 %v1193
          %1206 = vmatmul.bf16.gmra.mxu0 %v1196
          %v1207 = vpop.f32.mrf.mxu0
          %v1208 = vadd.f32 0.0, %v1207
          %v1209 = vpop.f32.mrf.mxu0
          %1210 = vdwg.mxu0
          %v1211 = vpack.c.bf16 %v1208, %v1208
          %1213 = vrot.lane.b32.xlu0 %v1211, 48
          %v1214 = vpop.permute.xlu0 %1213
          %vm1216 = vcmask 519552
          %1217 = vst.msk [vmem:[#allocation7] sm:$0xf] %vm1216, %v1214
          %v1218 = vld [vmem:[#allocation7] sm:$0xf]
          %v1219 = vld [vmem:[#allocation13] sm:$0xf]
          %v1220 = vld [vmem:[#allocation13 + $0x4] sm:$0xf]
          %v1221 = vld [vmem:[#allocation13 + $0x8] sm:$0xf]
          %v1222 = vld [vmem:[#allocation13 + $0xc] sm:$0xf]
          %v1223 = vld [vmem:[#allocation13 + $0x10] sm:$0xf]
          %v1224 = vld [vmem:[#allocation13 + $0x14] sm:$0xf]
          %v1225 = vld [vmem:[#allocation13 + $0x18] sm:$0xf]
          %v1226 = vld [vmem:[#allocation13 + $0x1c] sm:$0xf]
          %v1227 = vld [vmem:[%s8] sm:$0x1]
          %v1229 = vperm.slane %v1227, 0
          %v1239 = vunpack.c.l.b16 %v1219
          %v1240 = vunpack.c.l.b16 %v1220
          %v1241 = vunpack.c.l.b16 %v1221
          %v1242 = vunpack.c.l.b16 %v1222
          %v1243 = vunpack.c.l.b16 %v1223
          %v1244 = vunpack.c.l.b16 %v1224
          %v1245 = vunpack.c.l.b16 %v1225
          %v1246 = vunpack.c.l.b16 %v1226
          %v1247 = vpack.c.b16 %v1240, %v1239
          %v1248 = vpack.c.b16 %v1242, %v1241
          %v1249 = vpack.c.b16 %v1244, %v1243
          %v1250 = vpack.c.b16 %v1246, %v1245
          %v1256 = vsel %vm907, %v1218, 0
          %1258 = vmatpush.bf16.msra.mxu0 0
          %1259 = vmatpush.bf16.msra.mxu0 0
          %1260 = vmatpush.bf16.msra.mxu0 0
          %1261 = vmatpush.bf16.msra.mxu0 0
          %1262 = vmatpush.bf16.msra.mxu0 %v1250
          %1263 = vmatpush.bf16.msra.mxu0 %v1249
          %1264 = vmatpush.bf16.msra.mxu0 %v1248
          %1265 = vmatpush.bf16.msra.mxu0 %v1247
          %1266 = vmatmul.bf16.gmra.mxu0 %v1256
          %v1267 = vpop.f32.mrf.mxu0
          %v1268 = vadd.f32 %v1229, %v1267
          %v1269 = vpop.f32.mrf.mxu0
          %1270 = vdwg.mxu0
          %v1271 = vadd.f32 %v869, %v1268
          %v1272 = vld [vmem:[%s9] sm:$0x1]
          %v1273 = vld [vmem:[%s10] sm:$0x1]
          %v1274 = vsel %vm907, %v1271, 0.0
          %1275 = vadd.xlane.f32.xlu0 %v1274
          %v1276 = vpop.xlane.xlu0 %1275
          %v1277 = vrcp.pop 64.0
          %v1278 = vmul.f32 64.0, %v1277
          %v1279 = vsub.f32 1.0, %v1278
          %v1280 = vmul.f32 %v1277, %v1279
          %v1281 = vadd.f32 %v1277, %v1280
          %vm1282 = vweird.f32 %v1277
          %v1283 = vsel %vm1282, %v1277, %v1281
          %v1284 = vmul.f32 %v1276, %v1283
          %v1285 = vsub.f32 %v1271, %v1284
          %v1286 = vmul.f32 %v1285, %v1285
          %v1287 = vsel %vm907, %v1286, 0.0
          %1288 = vadd.xlane.f32.xlu0 %v1287
          %v1289 = vpop.xlane.xlu0 %1288
          %v1290 = vmul.f32 %v1289, %v1283
          %v1291 = vadd.f32 %v1290, 1e-05
          %v1292 = vrsqrt.pop %v1291
          %v1293 = vmul.f32 %v1292, %v1291
          %v1294 = vmul.f32 %v1293, %v1292
          %v1295 = vmul.f32 0.5, %v1294
          %v1296 = vsub.f32 1.5, %v1295
          %v1297 = vmul.f32 %v1292, %v1296
          %vm1298 = vweird.f32 %v1291
          %vm1299 = vweird.f32 %v1292
          %vm1300 = vmor %vm1298, %vm1299
          %v1301 = vsel %vm1300, %v1292, %v1297
          %v1302 = vmul.f32 %v1285, %v1301
          %v1304 = vperm.slane %v1272, 0
          %v1306 = vmul.f32 %v1302, %v1304
          %v1308 = vperm.slane %v1273, 0
          %v1310 = vadd.f32 %v1306, %v1308
          %s1311 = scalar_lea.vmem [#allocation4], %s742
          %1312 = vst.msk [vmem:[%s1311] sm:$0xff] %vm907, %v1310
          %v1313 = vpack.c.bf16 %v1310, %v1310
          %s1314 = smul.addr %s40, 4
          %s1315 = scalar_lea.vmem [#allocation5], %s1314
          %vm1316 = vcmask 519168
          %1317 = vst.msk [vmem:[%s1315] sm:$0xf] %vm1316, %v1313
          %s1318 = scalar_lea.vmem [#allocation6], %s742
          %1319 = vst.msk [vmem:[%s1318] sm:$0xff] %vm907, 0.0
        $region149: #{tpu_custom_call.1} parent=124 // pred_fallthru
          _
        %s1320 = smul.addr %s40, 4
        %s1321 = scalar_lea.vmem [#allocation5], %s1320
        %v1322 = vld [vmem:[%s1321] sm:$0xf]
        %v1323 = vld [vmem:[%s665] sm:$0xf]
        %v1324 = vld [vmem:[%s665 + $0x4] sm:$0xf]
        %v1325 = vld [vmem:[%s665 + $0x8] sm:$0xf]
        %v1326 = vld [vmem:[%s665 + $0xc] sm:$0xf]
        %v1327 = vld [vmem:[%s665 + $0x10] sm:$0xf]
        %v1328 = vld [vmem:[%s665 + $0x14] sm:$0xf]
        %v1329 = vld [vmem:[%s665 + $0x18] sm:$0xf]
        %v1330 = vld [vmem:[%s665 + $0x1c] sm:$0xf]
        %v1331 = vld [vmem:[%s734] sm:$0x1]
        %v1333 = vperm.slane %v1331, 0
        %v1343 = vunpack.c.l.b16 %v1323
        %v1344 = vunpack.c.l.b16 %v1324
        %v1345 = vunpack.c.l.b16 %v1325
        %v1346 = vunpack.c.l.b16 %v1326
        %v1347 = vunpack.c.l.b16 %v1327
        %v1348 = vunpack.c.l.b16 %v1328
        %v1349 = vunpack.c.l.b16 %v1329
        %v1350 = vunpack.c.l.b16 %v1330
        %v1351 = vpack.c.b16 %v1344, %v1343
        %v1352 = vpack.c.b16 %v1346, %v1345
        %v1353 = vpack.c.b16 %v1348, %v1347
        %v1354 = vpack.c.b16 %v1350, %v1349
        %vm1359 = vcmask 523264
        %v1361 = vsel %vm1359, %v1322, 0
        %1363 = vmatpush.bf16.msra.mxu0 0
        %1364 = vmatpush.bf16.msra.mxu0 0
        %1365 = vmatpush.bf16.msra.mxu0 0
        %1366 = vmatpush.bf16.msra.mxu0 0
        %1367 = vmatpush.bf16.msra.mxu0 %v1354
        %1368 = vmatpush.bf16.msra.mxu0 %v1353
        %1369 = vmatpush.bf16.msra.mxu0 %v1352
        %1370 = vmatpush.bf16.msra.mxu0 %v1351
        %1371 = vmatmul.bf16.gmra.mxu0 %v1361
        %v1372 = vpop.f32.mrf.mxu0
        %v1373 = vadd.f32 %v1333, %v1372
        %v1374 = vpop.f32.mrf.mxu0
        %1375 = vdwg.mxu0
        %v1376 = vmax.f32 %v1373, 0.0
        %v1377 = vpack.c.bf16 %v1376, %v1376
        %s1378 = scalar_lea.vmem [#allocation6], %s742
        %v1379 = vld [vmem:[%s1378] sm:$0xff]
        %v1380 = vld [vmem:[%s739] sm:$0xf]
        %v1381 = vld [vmem:[%s739 + $0x4] sm:$0xf]
        %v1382 = vld [vmem:[%s739 + $0x8] sm:$0xf]
        %v1383 = vld [vmem:[%s739 + $0xc] sm:$0xf]
        %v1384 = vld [vmem:[%s739 + $0x10] sm:$0xf]
        %v1385 = vld [vmem:[%s739 + $0x14] sm:$0xf]
        %v1386 = vld [vmem:[%s739 + $0x18] sm:$0xf]
        %v1387 = vld [vmem:[%s739 + $0x1c] sm:$0xf]
        %v1388 = vld [vmem:[%s739 + $0x20] sm:$0xf]
        %v1389 = vld [vmem:[%s739 + $0x24] sm:$0xf]
        %v1390 = vld [vmem:[%s739 + $0x28] sm:$0xf]
        %v1391 = vld [vmem:[%s739 + $0x2c] sm:$0xf]
        %v1392 = vld [vmem:[%s739 + $0x30] sm:$0xf]
        %v1393 = vld [vmem:[%s739 + $0x34] sm:$0xf]
        %v1394 = vld [vmem:[%s739 + $0x38] sm:$0xf]
        %v1395 = vld [vmem:[%s739 + $0x3c] sm:$0xf]
        %v1412 = vunpack.c.l.b16 %v1380
        %v1413 = vunpack.c.l.b16 %v1381
        %v1414 = vunpack.c.l.b16 %v1382
        %v1415 = vunpack.c.l.b16 %v1383
        %v1416 = vunpack.c.l.b16 %v1384
        %v1417 = vunpack.c.l.b16 %v1385
        %v1418 = vunpack.c.l.b16 %v1386
        %v1419 = vunpack.c.l.b16 %v1387
        %v1420 = vunpack.c.l.b16 %v1388
        %v1421 = vunpack.c.l.b16 %v1389
        %v1422 = vunpack.c.l.b16 %v1390
        %v1423 = vunpack.c.l.b16 %v1391
        %v1424 = vunpack.c.l.b16 %v1392
        %v1425 = vunpack.c.l.b16 %v1393
        %v1426 = vunpack.c.l.b16 %v1394
        %v1427 = vunpack.c.l.b16 %v1395
        %v1428 = vpack.c.b16 %v1413, %v1412
        %v1429 = vpack.c.b16 %v1415, %v1414
        %v1430 = vpack.c.b16 %v1417, %v1416
        %v1431 = vpack.c.b16 %v1419, %v1418
        %v1432 = vpack.c.b16 %v1421, %v1420
        %v1433 = vpack.c.b16 %v1423, %v1422
        %v1434 = vpack.c.b16 %v1425, %v1424
        %v1435 = vpack.c.b16 %v1427, %v1426
        %1444 = vmatpush.bf16.msra.mxu0 %v1435
        %1445 = vmatpush.bf16.msra.mxu0 %v1434
        %1446 = vmatpush.bf16.msra.mxu0 %v1433
        %1447 = vmatpush.bf16.msra.mxu0 %v1432
        %1448 = vmatpush.bf16.msra.mxu0 %v1431
        %1449 = vmatpush.bf16.msra.mxu0 %v1430
        %1450 = vmatpush.bf16.msra.mxu0 %v1429
        %1451 = vmatpush.bf16.msra.mxu0 %v1428
        %1452 = vmatmul.bf16.gmra.mxu0 %v1377
        %v1453 = vpop.f32.mrf.mxu0
        %v1454 = vadd.f32 0.0, %v1453
        %v1455 = vpop.f32.mrf.mxu0
        %1456 = vdwg.mxu0
        %v1457 = vadd.f32 %v1379, %v1454
        %1458 = vst.msk [vmem:[%s1378] sm:$0xff] %vm1359, %v1457
        %p1459 = scmp.eq.s32.totalorder %s39, 1
        // Predicated region
        $region150: #{tpu_custom_call.1} parent=124 // pred_check
          %p1460 = pneg %p1459
        $region151: #{tpu_custom_call.1} parent=124 // pred_check_branch
          %1462 = sbr.rel (%p1460) target = $region153
        $region152: #{tpu_custom_call.1} parent=124 // pred_region
          %s1463 = scalar_lea.vmem [#allocation4], %s742
          %v1464 = vld [vmem:[%s1463] sm:$0xff]
          %v1465 = vld [vmem:[%s1378] sm:$0xff]
          %v1466 = vadd.f32 %v1464, %v1465
          %v1467 = vld [vmem:[%s14] sm:$0x1]
          %v1469 = vperm.slane %v1467, 0
          %v1471 = vadd.f32 %v1466, %v1469
          %v1472 = vld [vmem:[%s15] sm:$0x1]
          %v1473 = vld [vmem:[%s16] sm:$0x1]
          %v1474 = vsel %vm1359, %v1471, 0.0
          %1475 = vadd.xlane.f32.xlu0 %v1474
          %v1476 = vpop.xlane.xlu0 %1475
          %v1477 = vrcp.pop 64.0
          %v1478 = vmul.f32 64.0, %v1477
          %v1479 = vsub.f32 1.0, %v1478
          %v1480 = vmul.f32 %v1477, %v1479
          %v1481 = vadd.f32 %v1477, %v1480
          %vm1482 = vweird.f32 %v1477
          %v1483 = vsel %vm1482, %v1477, %v1481
          %v1484 = vmul.f32 %v1476, %v1483
          %v1485 = vsub.f32 %v1471, %v1484
          %v1486 = vmul.f32 %v1485, %v1485
          %v1487 = vsel %vm1359, %v1486, 0.0
          %1488 = vadd.xlane.f32.xlu0 %v1487
          %v1489 = vpop.xlane.xlu0 %1488
          %v1490 = vmul.f32 %v1489, %v1483
          %v1491 = vadd.f32 %v1490, 1e-05
          %v1492 = vrsqrt.pop %v1491
          %v1493 = vmul.f32 %v1492, %v1491
          %v1494 = vmul.f32 %v1493, %v1492
          %v1495 = vmul.f32 0.5, %v1494
          %v1496 = vsub.f32 1.5, %v1495
          %v1497 = vmul.f32 %v1492, %v1496
          %vm1498 = vweird.f32 %v1491
          %vm1499 = vweird.f32 %v1492
          %vm1500 = vmor %vm1498, %vm1499
          %v1501 = vsel %vm1500, %v1492, %v1497
          %v1502 = vmul.f32 %v1485, %v1501
          %v1504 = vperm.slane %v1472, 0
          %v1506 = vmul.f32 %v1502, %v1504
          %v1508 = vperm.slane %v1473, 0
          %v1510 = vadd.f32 %v1506, %v1508
          %1511 = vst.msk [vmem:[%s726] sm:$0xff] %vm1359, %v1510
        $region153: #{tpu_custom_call.1} parent=124 // pred_fallthru
          _
        %s1512 = sand.u32 %s439, 1
        %s1513 = scalar_lea.sflag [#allocation10], %s1512
        %s1514 = sand.u32 %s439, 1
        %s1515 = smul.addr %s1514, 8
        %s1516 = scalar_lea.vmem [#allocation15], %s1515
        // Predicated region
        $region154: #{tpu_custom_call.1} parent=124 // pred_check
          %p1517 = pneg %p449
        $region155: #{tpu_custom_call.1} parent=124 // pred_check_branch
          %1519 = sbr.rel (%p1517) target = $region157
        $region156: #{tpu_custom_call.1} parent=124 // pred_region
          %1521 = vsyncadd %s1513, 0
          %s1522 = smul.addr %s38, 2
          %s1523 = sadd.s32 %s40, %s1522
          %s1524 = smul.addr %s1523, 8
          %s1525 = scalar_lea.hbm %s17, %s1524
          %s1527 = sshll.u32 %s1516, 4
          %s1528 = int_to_ptr.vmem [resolvable:$true] %s1527
          %s1529 = sshll.u32 %s1525, 4
          %s1530 = int_to_ptr.hbm [resolvable:$true] %s1529
          %1532 = dma.vmem_to_hbm [thread:$0]  %s1528, 128, %s1530, %s1513
        $region157: #{tpu_custom_call.1} parent=124 // pred_fallthru
          _
      $region125: #{tpu_custom_call.1} parent=5 // pred_fallthru
        _
      %p1533 = scmp.le.s32.totalorder 2, %s28
      // Predicated region
      $region158: #{tpu_custom_call.1} parent=5 // pred_check
        %p1534 = pneg %p1533
      $region159: #{tpu_custom_call.1} parent=5 // pred_check_branch
        %1536 = sbr.rel (%p1534) target = $region161
      $region160: #{tpu_custom_call.1} parent=5 // pred_region
        %s1537 = ssub.s32 %s28, 2
        // Predicated region
        $region162: #{tpu_custom_call.1} parent=160 // pred_check
          %p1538 = pneg %p455
        $region163: #{tpu_custom_call.1} parent=160 // pred_check_branch
          %1540 = sbr.rel (%p1538) target = $region165
        $region164: #{tpu_custom_call.1} parent=160 // pred_region
          %s1541 = sand.u32 %s440, 1
          %s1542 = scalar_lea.sflag [#allocation10], %s1541
          %s1543 = sand.u32 %s440, 1
          %s1544 = smul.addr %s1543, 8
          %s1545 = scalar_lea.vmem [#allocation15], %s1544
          %1547 = dma.done %s1542, 128
        $region165: #{tpu_custom_call.1} parent=160 // pred_fallthru
          _
      $region161: #{tpu_custom_call.1} parent=5 // pred_fallthru
        _
    $region6: #{tpu_custom_call.1} parent=1 // loop_footer
      %s32 = sadd.s32 1, %s28
    $region7: #{tpu_custom_call.1} parent=1 // loop_footer_branch
      %27 = sbr.rel target = $region3
    $region8: #{tpu_custom_call.1} parent=1 // loop_exit
      _
    %1548 = vsyncpa [#allocation9], 1
    %s1549 = scalar_lea.sflag [#allocation9], 1
    %1550 = vsyncpa %s1549, 1
    %1551 = vsyncpa [#allocation12], 1
    %1552 = vsyncpa [#allocation10], 1
    %s1553 = scalar_lea.sflag [#allocation10], 1
    %1554 = vsyncpa %s1553, 1

</llo_original>
